<compile_context>
chip_gen: v6e
topology: v6e:2x2x1
jax: 0.10.0
libtpu: 0.0.40
codegen_flags: <defaults>
</compile_context>

<pallas_src>
import math

import jax
import jax.numpy as jnp
from jax import lax
from jax.experimental import pallas as pl
from jax.experimental.pallas import tpu as pltpu


NEG_INF = -1e30   # finite sentinel (bf16/f32 representable); avoids inf-inf NaNs.


# ---------------------------------------------------------------------------
# Shared in-kernel helpers
# ---------------------------------------------------------------------------
def _attend(q, k, v, mask, wo_bf, bo):
    """softmax(q k^T + mask) v @ Wo + bo.  q already carries the 1/sqrt(C) scale."""
    # NOTE(v5e): dot_general with contracting dims (1,1) may insert a tiny k transpose
    # (~5 vregs) on some generations — accepted; softmax math stays in f32.
    s = lax.dot_general(q.astype(jnp.bfloat16), k.astype(jnp.bfloat16),
                        dimension_numbers=(((1,), (1,)), ((), ())),
                        preferred_element_type=jnp.float32) + mask
    m = jnp.max(s, axis=-1, keepdims=True)
    p = jnp.exp(s - m)
    inv = pl.reciprocal(jnp.sum(p, axis=-1, keepdims=True), approx=True)
    ctx = jnp.dot(p.astype(jnp.bfloat16), v.astype(jnp.bfloat16),
                  preferred_element_type=jnp.float32) * inv        # normalise (L,C), not (L,L)
    return jnp.dot(ctx.astype(jnp.bfloat16), wo_bf,
                   preferred_element_type=jnp.float32) + bo


def _block_mask(n_rows, n_cols, row_block, col_block, n_batch, n_valid_cols):
    """Additive mask (in-kernel, no HBM DMA): 0 where the row and column fall inside the
    same batch block AND the column's within-block index < n_valid_cols; else -1e30.
    Division-free: batch membership is a Python-unrolled range compare."""
    row = lax.broadcasted_iota(jnp.int32, (n_rows, n_cols), 0)
    col = lax.broadcasted_iota(jnp.int32, (n_rows, n_cols), 1)
    ok = None
    for b in range(n_batch):
        blk = ((row >= b * row_block) & (row < (b + 1) * row_block)
               & (col >= b * col_block) & (col < b * col_block + n_valid_cols))
        ok = blk if ok is None else (ok | blk)
    return jnp.where(ok, 0.0, NEG_INF).astype(jnp.float32)


# ---------------------------------------------------------------------------
# Kernel 1: BOTH levels' self-attention stacks, grid = (level, layer)
# ---------------------------------------------------------------------------
def _make_sa_kernel(B, Lpad, valid_tokens):
    BL = B * Lpad

    def kernel(x_ref, qb_ref, kb_ref, wq_ref, wk_ref, wv_ref, wo_ref, bv_ref, bo_ref,
               out_ref, xs_ref, mask_ref):
        level = pl.program_id(0)
        layer = pl.program_id(1)

        @pl.when(layer == 0)
        def _():
            xs_ref[...] = x_ref[0].astype(jnp.float32)        # activation resident in VMEM
            valid = jnp.where(level == 0, valid_tokens[0], valid_tokens[1])
            mask_ref[...] = _block_mask(BL, BL, Lpad, Lpad, B, valid)

        x = xs_ref[...]                                        # (BL, C) f32
        xb = x.astype(jnp.bfloat16)
        # Three separate (BL,C)@(C,C) dots -> q/k/v each land at lane offset 0.
        # Positional encodings & biases enter as precomputed additive tensors.
        q = jnp.dot(xb, wq_ref[0, 0], preferred_element_type=jnp.float32) + qb_ref[0, 0]
        k = jnp.dot(xb, wk_ref[0, 0], preferred_element_type=jnp.float32) + kb_ref[0, 0]
        v = jnp.dot(xb, wv_ref[0, 0], preferred_element_type=jnp.float32) + bv_ref[0, 0]

        x_new = x + _attend(q, k, v, mask_ref[...], wo_ref[0, 0], bo_ref[0, 0])
        xs_ref[...] = x_new
        out_ref[0] = x_new.astype(out_ref.dtype)

    return kernel


def merged_self_attention(merged0, merged1,
                          pos0_q, pos0_k, pos1_q, pos1_k,
                          params0, params1):
    """Run both levels' self-attention stacks in ONE pallas_call."""
    B, L0, C = merged0.shape
    L1 = merged1.shape[1]
    n_layers = max(len(params0), len(params1))
    if n_layers == 0:
        return merged0, merged1

    Lpad = max(L0, L1)
    BL = B * Lpad
    scale = 1.0 / math.sqrt(C)

    def pad_pos(p, L):
        return jnp.pad(p, ((0, Lpad - L), (0, 0)))

    def level_stack(params, q_pos_list, k_pos_list, L):
        wq, wk, wv, wo, bv, bo, qb, kb = ([] for _ in range(8))
        zcc = jnp.zeros((C, C), jnp.float32)
        zc = jnp.zeros((1, C), jnp.float32)
        for i in range(n_layers):
            if i < len(params):
                p = params[i]
                wq_i = p["wq"] * scale                               # fold softmax scale
                wq.append(wq_i); wk.append(p["wk"]); wv.append(p["wv"]); wo.append(p["wo"])
                bv.append(p["bv"]); bo.append(p["bo"])
                qb.append(jnp.tile(pad_pos(q_pos_list[i], L) @ wq_i + p["bq"] * scale, (B, 1)))
                kb.append(jnp.tile(pad_pos(k_pos_list[i], L) @ p["wk"] + p["bk"], (B, 1)))
            else:
                # Layer-count padding: Wo=0, bo=0 -> attention output 0 -> identity layer.
                wq.append(zcc); wk.append(zcc); wv.append(zcc); wo.append(zcc)
                bv.append(zc); bo.append(zc)
                qb.append(jnp.zeros((BL, C), jnp.float32))
                kb.append(jnp.zeros((BL, C), jnp.float32))
        return (jnp.stack(wq), jnp.stack(wk), jnp.stack(wv), jnp.stack(wo),
                jnp.stack(bv), jnp.stack(bo), jnp.stack(qb), jnp.stack(kb))

    lv0 = level_stack(params0, pos0_q, pos0_k, L0)
    lv1 = level_stack(params1, pos1_q, pos1_k, L1)
    wq, wk, wv, wo = (jnp.stack([a, b]).astype(jnp.bfloat16)
                      for a, b in zip(lv0[:4], lv1[:4]))             # (2, n, C, C) bf16
    bv, bo, qb, kb = (jnp.stack([a, b]) for a, b in zip(lv0[4:], lv1[4:]))  # f32

    x0 = jnp.pad(merged0, ((0, 0), (0, Lpad - L0), (0, 0))).reshape(BL, C)
    x1 = jnp.pad(merged1, ((0, 0), (0, Lpad - L1), (0, 0))).reshape(BL, C)
    x_stacked = jnp.stack([x0, x1])                                   # (2, BL, C)

    flops = 2 * n_layers * (8 * BL * C * C + 4 * BL * BL * C)
    transc = 2 * n_layers * BL * BL
    operands = (x_stacked, qb, kb, wq, wk, wv, wo, bv, bo)
    bytes_acc = sum(int(a.size) * a.dtype.itemsize for a in operands)
    bytes_acc += int(x_stacked.size) * x_stacked.dtype.itemsize      # output

    wmap = lambda lv, ly: (lv, ly, 0, 0)
    kernel = _make_sa_kernel(B, Lpad, (L0, L1))
    out = pl.pallas_call(
        kernel,
        out_shape=jax.ShapeDtypeStruct((2, BL, C), merged0.dtype),
        grid_spec=pltpu.PrefetchScalarGridSpec(
            num_scalar_prefetch=0,
            grid=(2, n_layers),
            in_specs=[
                pl.BlockSpec((1, BL, C), lambda lv, ly: (lv, 0, 0)),   # activations (per level)
                pl.BlockSpec((1, 1, BL, C), wmap),                     # q pos-bias
                pl.BlockSpec((1, 1, BL, C), wmap),                     # k pos-bias
                pl.BlockSpec((1, 1, C, C), wmap),                      # Wq (scaled)
                pl.BlockSpec((1, 1, C, C), wmap),                      # Wk
                pl.BlockSpec((1, 1, C, C), wmap),                      # Wv
                pl.BlockSpec((1, 1, C, C), wmap),                      # Wo
                pl.BlockSpec((1, 1, 1, C), wmap),                      # bv
                pl.BlockSpec((1, 1, 1, C), wmap),                      # bo
            ],
            out_specs=pl.BlockSpec((1, BL, C), lambda lv, ly: (lv, 0, 0)),
            scratch_shapes=[pltpu.VMEM((BL, C), jnp.float32),          # resident activations
                            pltpu.VMEM((BL, BL), jnp.float32)],        # per-level mask
        ),
        compiler_params=pltpu.CompilerParams(
            dimension_semantics=("parallel", "arbitrary")),            # level axis -> v7x cores
        input_output_aliases={0: 0},
        cost_estimate=pl.CostEstimate(flops=flops, transcendentals=transc,
                                      bytes_accessed=bytes_acc),
    )(*operands)

    out0 = out[0].reshape(B, Lpad, C)[:, :L0]
    out1 = out[1].reshape(B, Lpad, C)[:, :L1]
    return out0, out1


# ---------------------------------------------------------------------------
# Kernel 2: both cross-level feature fusions (z and x), grid = (fusion,)
# ---------------------------------------------------------------------------
def _make_fusion_kernel(B, LA_pad, LB_pad, valid_a, valid_b):
    MA, MB = B * LA_pad, B * LB_pad

    def kernel(fa_ref, fb_ref, qa_b_ref, ka_b_ref, qb_b_ref, kb_b_ref,
               wA_ref, wB_ref, bA_ref, bB_ref, oa_ref, ob_ref):
        fid = pl.program_id(0)
        va = jnp.where(fid == 0, valid_a[0], valid_a[1])
        vb = jnp.where(fid == 0, valid_b[0], valid_b[1])

        a = fa_ref[0].astype(jnp.float32)
        b = fb_ref[0].astype(jnp.float32)
        a_bf = a.astype(jnp.bfloat16)
        b_bf = b.astype(jnp.bfloat16)

        mask_ab = _block_mask(MA, MB, LA_pad, LB_pad, B, vb)     # queries A, keys B
        mask_ba = _block_mask(MB, MA, LB_pad, LA_pad, B, va)     # queries B, keys A

        # Update A: q from A, k/v from B, parameter set A.
        q_a = jnp.dot(a_bf, wA_ref[0, 0], preferred_element_type=jnp.float32) + qa_b_ref[0]
        k_b = jnp.dot(b_bf, wA_ref[0, 1], preferred_element_type=jnp.float32) + ka_b_ref[0]
        v_b = jnp.dot(b_bf, wA_ref[0, 2], preferred_element_type=jnp.float32) + bA_ref[0, 0]
        new_a = a + _attend(q_a, k_b, v_b, mask_ab, wA_ref[0, 3], bA_ref[0, 1])

        # Update B: q from B, k/v from A, parameter set B.
        q_b = jnp.dot(b_bf, wB_ref[0, 0], preferred_element_type=jnp.float32) + qb_b_ref[0]
        k_a = jnp.dot(a_bf, wB_ref[0, 1], preferred_element_type=jnp.float32) + kb_b_ref[0]
        v_a = jnp.dot(a_bf, wB_ref[0, 2], preferred_element_type=jnp.float32) + bB_ref[0, 0]
        new_b = b + _attend(q_b, k_a, v_a, mask_ba, wB_ref[0, 3], bB_ref[0, 1])

        oa_ref[0] = new_a.astype(oa_ref.dtype)
        ob_ref[0] = new_b.astype(ob_ref.dtype)

    return kernel


def dual_feature_fusion(z_a, z_b, z_pos, x_a, x_b, x_pos, params_z, params_x):
    """z_pos / x_pos = (a_q_pos, b_k_pos, b_q_pos, a_k_pos) for the respective fusion."""
    B, LzA, C = z_a.shape
    LzB, LxA, LxB = z_b.shape[1], x_a.shape[1], x_b.shape[1]
    LA_pad, LB_pad = max(LzA, LxA), max(LzB, LxB)
    MA, MB = B * LA_pad, B * LB_pad
    scale = 1.0 / math.sqrt(C)

    def prep(feat_a, feat_b, pos, params):
        a_q_pos, b_k_pos, b_q_pos, a_k_pos = pos
        pA, pB = params
        La, Lb = feat_a.shape[1], feat_b.shape[1]
        pad_a = lambda t: jnp.pad(t, ((0, 0), (0, LA_pad - La), (0, 0)))
        pad_b = lambda t: jnp.pad(t, ((0, 0), (0, LB_pad - Lb), (0, 0)))
        pad_ap = lambda p: jnp.pad(p, ((0, LA_pad - La), (0, 0)))
        pad_bp = lambda p: jnp.pad(p, ((0, LB_pad - Lb), (0, 0)))

        fa = pad_a(feat_a).reshape(MA, C)
        fb = pad_b(feat_b).reshape(MB, C)
        wq_a = pA["wq"] * scale
        wq_b = pB["wq"] * scale
        qa_bias = jnp.tile(pad_ap(a_q_pos) @ wq_a + pA["bq"] * scale, (B, 1))   # (MA, C)
        ka_bias = jnp.tile(pad_bp(b_k_pos) @ pA["wk"] + pA["bk"], (B, 1))       # (MB, C)
        qb_bias = jnp.tile(pad_bp(b_q_pos) @ wq_b + pB["bq"] * scale, (B, 1))   # (MB, C)
        kb_bias = jnp.tile(pad_ap(a_k_pos) @ pB["wk"] + pB["bk"], (B, 1))       # (MA, C)
        wA = jnp.stack([wq_a, pA["wk"], pA["wv"], pA["wo"]])                    # (4, C, C)
        wB = jnp.stack([wq_b, pB["wk"], pB["wv"], pB["wo"]])
        bA = jnp.stack([pA["bv"], pA["bo"]])                                    # (2, 1, C)
        bB = jnp.stack([pB["bv"], pB["bo"]])
        return fa, fb, qa_bias, ka_bias, qb_bias, kb_bias, wA, wB, bA, bB

    z_pack = prep(z_a, z_b, z_pos, params_z)
    x_pack = prep(x_a, x_b, x_pos, params_x)
    featA, featB, qAb, kAb, qBb, kBb, wA, wB, bA, bB = (
        jnp.stack([zi, xi]) for zi, xi in zip(z_pack, x_pack))
    wA = wA.astype(jnp.bfloat16)
    wB = wB.astype(jnp.bfloat16)

    flops = 2 * (8 * C * C * (MA + MB) + 8 * MA * MB * C)
    transc = 2 * 2 * MA * MB
    operands = (featA, featB, qAb, kAb, qBb, kBb, wA, wB, bA, bB)
    bytes_acc = sum(int(a.size) * a.dtype.itemsize for a in operands)
    bytes_acc += int(featA.size) * featA.dtype.itemsize + int(featB.size) * featB.dtype.itemsize

    amap = lambda f: (f, 0, 0)
    wmap = lambda f: (f, 0, 0, 0)
    kernel = _make_fusion_kernel(B, LA_pad, LB_pad, (LzA, LxA), (LzB, LxB))
    outA, outB = pl.pallas_call(
        kernel,
        out_shape=(jax.ShapeDtypeStruct((2, MA, C), z_a.dtype),
                   jax.ShapeDtypeStruct((2, MB, C), z_b.dtype)),
        grid_spec=pltpu.PrefetchScalarGridSpec(
            num_scalar_prefetch=0,
            grid=(2,),
            in_specs=[
                pl.BlockSpec((1, MA, C), amap),       # feature A (level-0 side)
                pl.BlockSpec((1, MB, C), amap),       # feature B (level-1 side)
                pl.BlockSpec((1, MA, C), amap),       # q bias, direction A
                pl.BlockSpec((1, MB, C), amap),       # k bias, direction A
                pl.BlockSpec((1, MB, C), amap),       # q bias, direction B
                pl.BlockSpec((1, MA, C), amap),       # k bias, direction B
                pl.BlockSpec((1, 4, C, C), wmap),     # [Wq*s, Wk, Wv, Wo] params A
                pl.BlockSpec((1, 4, C, C), wmap),     # [Wq*s, Wk, Wv, Wo] params B
                pl.BlockSpec((1, 2, 1, C), wmap),     # [bv, bo] params A
                pl.BlockSpec((1, 2, 1, C), wmap),     # [bv, bo] params B
            ],
            out_specs=[pl.BlockSpec((1, MA, C), amap),
                       pl.BlockSpec((1, MB, C), amap)],
        ),
        compiler_params=pltpu.CompilerParams(dimension_semantics=("parallel",)),
        input_output_aliases={0: 0, 1: 1},
        cost_estimate=pl.CostEstimate(flops=flops, transcendentals=transc,
                                      bytes_accessed=bytes_acc),
    )(*operands)

    new_z_a = outA[0].reshape(B, LA_pad, C)[:, :LzA]
    new_x_a = outA[1].reshape(B, LA_pad, C)[:, :LxA]
    new_z_b = outB[0].reshape(B, LB_pad, C)[:, :LzB]
    new_x_b = outB[1].reshape(B, LB_pad, C)[:, :LxB]
    return new_z_a, new_z_b, new_x_a, new_x_b


# ---------------------------------------------------------------------------
# PyramidModule
# ---------------------------------------------------------------------------
class PyramidModule:
    def __init__(self, level_0_sa_params, level_1_sa_params,
                 z_fusion_params, x_fusion_params):
        self.level_0_sa_params = level_0_sa_params            # list of attention params
        self.level_1_sa_params = level_1_sa_params
        self.z_fusion_params = z_fusion_params                # (params_level0, params_level1)
        self.x_fusion_params = x_fusion_params

    def forward(self,
                level_0_z, level_0_x, level_0_z_H, level_0_z_W, level_0_x_H, level_0_x_W,
                level_1_z, level_1_x, level_1_z_H, level_1_z_W, level_1_x_H, level_1_x_W,
                level_0_sa_q_pos_list, level_0_sa_k_pos_list,
                level_1_sa_q_pos_list, level_1_sa_k_pos_list,
                l0_z_fusion_q_pos, l0_z_fusion_k_pos,
                l1_z_fusion_q_pos, l1_z_fusion_k_pos,
                l0_x_fusion_q_pos, l0_x_fusion_k_pos,
                l1_x_fusion_q_pos, l1_x_fusion_k_pos):
        level_0_z_size = level_0_z_H * level_0_z_W
        level_0_x_size = level_0_x_H * level_0_x_W
        assert level_0_z_size == level_0_z.shape[1]
        assert level_0_x_size == level_0_x.shape[1]
        level_1_z_size = level_1_z_H * level_1_z_W
        level_1_x_size = level_1_x_H * level_1_x_W
        assert level_1_z_size == level_1_z.shape[1]
        assert level_1_x_size == level_1_x.shape[1]

        merged_0 = jnp.concatenate((level_0_z, level_0_x), axis=1)
        merged_1 = jnp.concatenate((level_1_z, level_1_x), axis=1)

        # Both levels' self-attention stacks in ONE pallas_call (grid=(level, layer)).
        merged_0, merged_1 = merged_self_attention(
            merged_0, merged_1,
            level_0_sa_q_pos_list, level_0_sa_k_pos_list,
            level_1_sa_q_pos_list, level_1_sa_k_pos_list,
            self.level_0_sa_params, self.level_1_sa_params)

        level_0_z = merged_0[:, :level_0_z_size, :]
        level_0_x = merged_0[:, level_0_z_size:, :]
        level_1_z = merged_1[:, :level_1_z_size, :]
        level_1_x = merged_1[:, level_1_z_size:, :]

        # Both cross-level fusions (z and x, both directions) in one pallas_call.
        level_0_z, level_1_z, level_0_x, level_1_x = dual_feature_fusion(
            level_0_z, level_1_z,
            (l0_z_fusion_q_pos, l1_z_fusion_k_pos, l1_z_fusion_q_pos, l0_z_fusion_k_pos),
            level_0_x, level_1_x,
            (l0_x_fusion_q_pos, l1_x_fusion_k_pos, l1_x_fusion_q_pos, l0_x_fusion_k_pos),
            self.z_fusion_params, self.x_fusion_params)

        return level_0_z, level_0_x, level_1_z, level_1_x


# ---------------------------------------------------------------------------
# Deterministic parameter / input construction
# ---------------------------------------------------------------------------
def make_attn_params(key, dim):
    ks = jax.random.split(key, 8)
    scale = 1.0 / math.sqrt(dim)
    return {
        "wq": jax.random.normal(ks[0], (dim, dim), jnp.float32) * scale,
        "wk": jax.random.normal(ks[1], (dim, dim), jnp.float32) * scale,
        "wv": jax.random.normal(ks[2], (dim, dim), jnp.float32) * scale,
        "wo": jax.random.normal(ks[3], (dim, dim), jnp.float32) * scale,
        "bq": jax.random.normal(ks[4], (1, dim), jnp.float32) * 0.1,
        "bk": jax.random.normal(ks[5], (1, dim), jnp.float32) * 0.1,
        "bv": jax.random.normal(ks[6], (1, dim), jnp.float32) * 0.1,
        "bo": jax.random.normal(ks[7], (1, dim), jnp.float32) * 0.1,
    }


if __name__ == "__main__":
    key = jax.random.PRNGKey(0)

    B, C = 2, 32
    L0_ZH = L0_ZW = 4      # level-0 template: 4x4 -> 16 tokens
    L0_XH = L0_XW = 8      # level-0 search:   8x8 -> 64 tokens
    L1_ZH = L1_ZW = 2      # level-1 template: 2x2 -> 4 tokens
    L1_XH = L1_XW = 4      # level-1 search:   4x4 -> 16 tokens
    L0Z, L0X = L0_ZH * L0_ZW, L0_XH * L0_XW
    L1Z, L1X = L1_ZH * L1_ZW, L1_XH * L1_XW
    N_SA_LAYERS = 2

    keys = jax.random.split(key, 32)
    ki = iter(range(32))

    # parameters
    level_0_sa_params = [make_attn_params(keys[next(ki)], C) for _ in range(N_SA_LAYERS)]
    level_1_sa_params = [make_attn_params(keys[next(ki)], C) for _ in range(N_SA_LAYERS)]
    z_fusion_params = (make_attn_params(keys[next(ki)], C),
                       make_attn_params(keys[next(ki)], C))
    x_fusion_params = (make_attn_params(keys[next(ki)], C),
                       make_attn_params(keys[next(ki)], C))

    module = PyramidModule(level_0_sa_params, level_1_sa_params,
                           z_fusion_params, x_fusion_params)

    # inputs
    rnd = lambda shape: jax.random.normal(keys[next(ki)], shape, jnp.float32)
    level_0_z = rnd((B, L0Z, C))
    level_0_x = rnd((B, L0X, C))
    level_1_z = rnd((B, L1Z, C))
    level_1_x = rnd((B, L1X, C))

    l0_sa_q_pos = [rnd((L0Z + L0X, C)) for _ in range(N_SA_LAYERS)]
    l0_sa_k_pos = [rnd((L0Z + L0X, C)) for _ in range(N_SA_LAYERS)]
    l1_sa_q_pos = [rnd((L1Z + L1X, C)) for _ in range(N_SA_LAYERS)]
    l1_sa_k_pos = [rnd((L1Z + L1X, C)) for _ in range(N_SA_LAYERS)]

    l0_z_fus_q = rnd((L0Z, C)); l0_z_fus_k = rnd((L0Z, C))
    l1_z_fus_q = rnd((L1Z, C)); l1_z_fus_k = rnd((L1Z, C))
    l0_x_fus_q = rnd((L0X, C)); l0_x_fus_k = rnd((L0X, C))
    l1_x_fus_q = rnd((L1X, C)); l1_x_fus_k = rnd((L1X, C))

    fwd = jax.jit(module.forward, static_argnums=(2, 3, 4, 5, 8, 9, 10, 11))

    out = fwd(
        level_0_z, level_0_x, L0_ZH, L0_ZW, L0_XH, L0_XW,
        level_1_z, level_1_x, L1_ZH, L1_ZW, L1_XH, L1_XW,
        l0_sa_q_pos, l0_sa_k_pos, l1_sa_q_pos, l1_sa_k_pos,
        l0_z_fus_q, l0_z_fus_k, l1_z_fus_q, l1_z_fus_k,
        l0_x_fus_q, l0_x_fus_k, l1_x_fus_q, l1_x_fus_k)

    out = jax.block_until_ready(out)
    assert out[0].shape == (B, L0Z, C)
    assert out[1].shape == (B, L0X, C)
    assert out[2].shape == (B, L1Z, C)
    assert out[3].shape == (B, L1X, C)
    assert all(bool(jnp.all(jnp.isfinite(o))) for o in out)
    print("KERNEL_OK")
</pallas_src>

<mosaic_0001>
module attributes {stable_mosaic.version = 11 : i64} {
  func.func @kernel(%arg0: i32, %arg1: i32, %arg2: memref<1x160x32xf32, #tpu.memory_space<vmem>>, %arg3: memref<1x1x160x32xf32, #tpu.memory_space<vmem>>, %arg4: memref<1x1x160x32xf32, #tpu.memory_space<vmem>>, %arg5: memref<1x1x32x32xbf16, #tpu.memory_space<vmem>>, %arg6: memref<1x1x32x32xbf16, #tpu.memory_space<vmem>>, %arg7: memref<1x1x32x32xbf16, #tpu.memory_space<vmem>>, %arg8: memref<1x1x32x32xbf16, #tpu.memory_space<vmem>>, %arg9: memref<1x1x1x32xf32, #tpu.memory_space<vmem>>, %arg10: memref<1x1x1x32xf32, #tpu.memory_space<vmem>>, %arg11: memref<1x160x32xf32, #tpu.memory_space<vmem>>, %arg12: memref<160x32xf32, #tpu.memory_space<vmem>>, %arg13: memref<160x160xf32, #tpu.memory_space<vmem>>) attributes {dimension_semantics = [#tpu.dimension_semantics<parallel>, #tpu.dimension_semantics<arbitrary>], iteration_bounds = array<i64: 2, 2>, scalar_prefetch = 0 : i64, scratch_operands = 2 : i64, tpu.core_type = #tpu.core_type<tc>, window_params = [{transform_indices = @transform_0, window_bounds = array<i64: 1, 160, 32>}, {transform_indices = @transform_1, window_bounds = array<i64: 1, 1, 160, 32>}, {transform_indices = @transform_2, window_bounds = array<i64: 1, 1, 160, 32>}, {transform_indices = @transform_3, window_bounds = array<i64: 1, 1, 32, 32>}, {transform_indices = @transform_4, window_bounds = array<i64: 1, 1, 32, 32>}, {transform_indices = @transform_5, window_bounds = array<i64: 1, 1, 32, 32>}, {transform_indices = @transform_6, window_bounds = array<i64: 1, 1, 32, 32>}, {transform_indices = @transform_7, window_bounds = array<i64: 1, 1, 1, 32>}, {transform_indices = @transform_8, window_bounds = array<i64: 1, 1, 1, 32>}, {transform_indices = @transform_9, window_bounds = array<i64: 1, 160, 32>}]} {
    %c0_i32 = arith.constant 0 : i32
    %0 = arith.cmpi eq, %arg1, %c0_i32 : i32
    %1 = arith.extui %0 : i1 to i32
    %c0_i32_0 = arith.constant 0 : i32
    %2 = arith.cmpi ne, %1, %c0_i32_0 : i32
    scf.if %2 {
      %c0_48 = arith.constant 0 : index
      %c0_49 = arith.constant 0 : index
      %c0_50 = arith.constant 0 : index
      %55 = vector.load %arg2[%c0_48, %c0_49, %c0_50] : memref<1x160x32xf32, #tpu.memory_space<vmem>>, vector<1x160x32xf32>
      %56 = vector.shape_cast %55 : vector<1x160x32xf32> to vector<160x32xf32>
      %c0_51 = arith.constant 0 : index
      %c0_52 = arith.constant 0 : index
      %57 = vector.load %arg12[%c0_51, %c0_52] : memref<160x32xf32, #tpu.memory_space<vmem>>, vector<160x32xf32>
      tpu.vector_store %arg12[%c0_51, %c0_52], %56 {strides = array<i32>} : memref<160x32xf32, #tpu.memory_space<vmem>>, vector<160x32xf32>,
      %c0_i32_53 = arith.constant 0 : i32
      %58 = arith.cmpi eq, %arg0, %c0_i32_53 : i32
      %c80_i32 = arith.constant 80 : i32
      %c20_i32 = arith.constant 20 : i32
      %59 = arith.select %58, %c80_i32, %c20_i32 : i32
      %60 = tpu.iota {dimensions = array<i32: 0>} : vector<160x160xi32>
      %61 = tpu.iota {dimensions = array<i32: 1>} : vector<160x160xi32>
      %c0_i32_54 = arith.constant 0 : i32
      %62 = vector.broadcast %c0_i32_54 : i32 to vector<160x160xi32>
      %63 = arith.cmpi sge, %60, %62 : vector<160x160xi32>
      %c80_i32_55 = arith.constant 80 : i32
      %64 = vector.broadcast %c80_i32_55 : i32 to vector<160x160xi32>
      %65 = arith.cmpi slt, %60, %64 : vector<160x160xi32>
      %66 = arith.andi %63, %65 : vector<160x160xi1>
      %c0_i32_56 = arith.constant 0 : i32
      %67 = vector.broadcast %c0_i32_56 : i32 to vector<160x160xi32>
      %68 = arith.cmpi sge, %61, %67 : vector<160x160xi32>
      %69 = arith.andi %66, %68 : vector<160x160xi1>
      %c0_i32_57 = arith.constant 0 : i32
      %70 = arith.addi %c0_i32_57, %59 : i32
      %71 = vector.broadcast %70 : i32 to vector<160x160xi32>
      %72 = arith.cmpi slt, %61, %71 : vector<160x160xi32>
      %73 = arith.andi %69, %72 : vector<160x160xi1>
      %c80_i32_58 = arith.constant 80 : i32
      %74 = vector.broadcast %c80_i32_58 : i32 to vector<160x160xi32>
      %75 = arith.cmpi sge, %60, %74 : vector<160x160xi32>
      %c160_i32 = arith.constant 160 : i32
      %76 = vector.broadcast %c160_i32 : i32 to vector<160x160xi32>
      %77 = arith.cmpi slt, %60, %76 : vector<160x160xi32>
      %78 = arith.andi %75, %77 : vector<160x160xi1>
      %c80_i32_59 = arith.constant 80 : i32
      %79 = vector.broadcast %c80_i32_59 : i32 to vector<160x160xi32>
      %80 = arith.cmpi sge, %61, %79 : vector<160x160xi32>
      %81 = arith.andi %78, %80 : vector<160x160xi1>
      %c80_i32_60 = arith.constant 80 : i32
      %82 = arith.addi %c80_i32_60, %59 : i32
      %83 = vector.broadcast %82 : i32 to vector<160x160xi32>
      %84 = arith.cmpi slt, %61, %83 : vector<160x160xi32>
      %85 = arith.andi %81, %84 : vector<160x160xi1>
      %86 = arith.ori %73, %85 : vector<160x160xi1>
      %cst_61 = arith.constant 0.000000e+00 : f32
      %cst_62 = arith.constant -1.000000e+30 : f32
      %87 = vector.broadcast %cst_61 : f32 to vector<160x160xf32>
      %88 = vector.broadcast %cst_62 : f32 to vector<160x160xf32>
      %89 = arith.select %86, %87, %88 : vector<160x160xi1>, vector<160x160xf32>
      %c0_63 = arith.constant 0 : index
      %c0_64 = arith.constant 0 : index
      %90 = vector.load %arg13[%c0_63, %c0_64] : memref<160x160xf32, #tpu.memory_space<vmem>>, vector<160x160xf32>
      tpu.vector_store %arg13[%c0_63, %c0_64], %89 {strides = array<i32>} : memref<160x160xf32, #tpu.memory_space<vmem>>, vector<160x160xf32>,
    } else {
    }
    %c0 = arith.constant 0 : index
    %c0_1 = arith.constant 0 : index
    %3 = vector.load %arg12[%c0, %c0_1] : memref<160x32xf32, #tpu.memory_space<vmem>>, vector<160x32xf32>
    %4 = arith.truncf %3 : vector<160x32xf32> to vector<160x32xbf16>
    %c0_2 = arith.constant 0 : index
    %c0_3 = arith.constant 0 : index
    %c0_4 = arith.constant 0 : index
    %c0_5 = arith.constant 0 : index
    %5 = vector.load %arg5[%c0_2, %c0_3, %c0_4, %c0_5] : memref<1x1x32x32xbf16, #tpu.memory_space<vmem>>, vector<1x1x32x32xbf16>
    %6 = vector.shape_cast %5 : vector<1x1x32x32xbf16> to vector<32x32xbf16>
    %cst = arith.constant dense<0.000000e+00> : vector<160x32xf32>
    %7 = tpu.matmul %4, %6, %cst {dimension_numbers = #tpu.dot_dimension_numbers<[1], [0], [0], [1], [0, 0, 1, 1], [], []>} : vector<160x32xbf16>, vector<32x32xbf16>, vector<160x32xf32> -> vector<160x32xf32>
    %c0_6 = arith.constant 0 : index
    %c0_7 = arith.constant 0 : index
    %c0_8 = arith.constant 0 : index
    %c0_9 = arith.constant 0 : index
    %8 = vector.load %arg3[%c0_6, %c0_7, %c0_8, %c0_9] : memref<1x1x160x32xf32, #tpu.memory_space<vmem>>, vector<1x1x160x32xf32>
    %9 = vector.shape_cast %8 : vector<1x1x160x32xf32> to vector<160x32xf32>
    %10 = arith.addf %7, %9 : vector<160x32xf32>
    %c0_10 = arith.constant 0 : index
    %c0_11 = arith.constant 0 : index
    %c0_12 = arith.constant 0 : index
    %c0_13 = arith.constant 0 : index
    %11 = vector.load %arg6[%c0_10, %c0_11, %c0_12, %c0_13] : memref<1x1x32x32xbf16, #tpu.memory_space<vmem>>, vector<1x1x32x32xbf16>
    %12 = vector.shape_cast %11 : vector<1x1x32x32xbf16> to vector<32x32xbf16>
    %cst_14 = arith.constant dense<0.000000e+00> : vector<160x32xf32>
    %13 = tpu.matmul %4, %12, %cst_14 {dimension_numbers = #tpu.dot_dimension_numbers<[1], [0], [0], [1], [0, 0, 1, 1], [], []>} : vector<160x32xbf16>, vector<32x32xbf16>, vector<160x32xf32> -> vector<160x32xf32>
    %c0_15 = arith.constant 0 : index
    %c0_16 = arith.constant 0 : index
    %c0_17 = arith.constant 0 : index
    %c0_18 = arith.constant 0 : index
    %14 = vector.load %arg4[%c0_15, %c0_16, %c0_17, %c0_18] : memref<1x1x160x32xf32, #tpu.memory_space<vmem>>, vector<1x1x160x32xf32>
    %15 = vector.shape_cast %14 : vector<1x1x160x32xf32> to vector<160x32xf32>
    %16 = arith.addf %13, %15 : vector<160x32xf32>
    %c0_19 = arith.constant 0 : index
    %c0_20 = arith.constant 0 : index
    %c0_21 = arith.constant 0 : index
    %c0_22 = arith.constant 0 : index
    %17 = vector.load %arg7[%c0_19, %c0_20, %c0_21, %c0_22] : memref<1x1x32x32xbf16, #tpu.memory_space<vmem>>, vector<1x1x32x32xbf16>
    %18 = vector.shape_cast %17 : vector<1x1x32x32xbf16> to vector<32x32xbf16>
    %cst_23 = arith.constant dense<0.000000e+00> : vector<160x32xf32>
    %19 = tpu.matmul %4, %18, %cst_23 {dimension_numbers = #tpu.dot_dimension_numbers<[1], [0], [0], [1], [0, 0, 1, 1], [], []>} : vector<160x32xbf16>, vector<32x32xbf16>, vector<160x32xf32> -> vector<160x32xf32>
    %c0_24 = arith.constant 0 : index
    %c0_25 = arith.constant 0 : index
    %c0_26 = arith.constant 0 : index
    %c0_27 = arith.constant 0 : index
    %20 = vector.load %arg9[%c0_24, %c0_25, %c0_26, %c0_27] : memref<1x1x1x32xf32, #tpu.memory_space<vmem>>, vector<1x1x1x32xf32>
    %21 = vector.shape_cast %20 : vector<1x1x1x32xf32> to vector<1x32xf32>
    %22 = vector.broadcast %21 : vector<1x32xf32> to vector<160x32xf32>
    %23 = arith.addf %19, %22 : vector<160x32xf32>
    %c0_28 = arith.constant 0 : index
    %c0_29 = arith.constant 0 : index
    %24 = vector.load %arg13[%c0_28, %c0_29] : memref<160x160xf32, #tpu.memory_space<vmem>>, vector<160x160xf32>
    %c0_30 = arith.constant 0 : index
    %c0_31 = arith.constant 0 : index
    %c0_32 = arith.constant 0 : index
    %c0_33 = arith.constant 0 : index
    %25 = vector.load %arg8[%c0_30, %c0_31, %c0_32, %c0_33] : memref<1x1x32x32xbf16, #tpu.memory_space<vmem>>, vector<1x1x32x32xbf16>
    %26 = vector.shape_cast %25 : vector<1x1x32x32xbf16> to vector<32x32xbf16>
    %c0_34 = arith.constant 0 : index
    %c0_35 = arith.constant 0 : index
    %c0_36 = arith.constant 0 : index
    %c0_37 = arith.constant 0 : index
    %27 = vector.load %arg10[%c0_34, %c0_35, %c0_36, %c0_37] : memref<1x1x1x32xf32, #tpu.memory_space<vmem>>, vector<1x1x1x32xf32>
    %28 = vector.shape_cast %27 : vector<1x1x1x32xf32> to vector<1x32xf32>
    %29 = arith.truncf %10 : vector<160x32xf32> to vector<160x32xbf16>
    %30 = arith.truncf %16 : vector<160x32xf32> to vector<160x32xbf16>
    %cst_38 = arith.constant dense<0.000000e+00> : vector<160x160xf32>
    %31 = tpu.matmul %29, %30, %cst_38 {dimension_numbers = #tpu.dot_dimension_numbers<[1], [1], [0], [0], [0, 0, 1, 0], [], []>} : vector<160x32xbf16>, vector<160x32xbf16>, vector<160x160xf32> -> vector<160x160xf32>
    %32 = arith.addf %31, %24 : vector<160x160xf32>
    %cst_39 = arith.constant dense<0xFF800000> : vector<160xf32>
    %33 = vector.multi_reduction <maximumf>, %32, %cst_39 [1] : vector<160x160xf32> to vector<160xf32>
    %34 = vector.shape_cast %33 : vector<160xf32> to vector<160x1xf32>
    %35 = vector.broadcast %34 : vector<160x1xf32> to vector<160x160xf32>
    %36 = arith.subf %32, %35 : vector<160x160xf32>
    %37 = math.exp %36 : vector<160x160xf32>
    %cst_40 = arith.constant dense<0.000000e+00> : vector<160xf32>
    %38 = vector.multi_reduction <add>, %37, %cst_40 [1] : vector<160x160xf32> to vector<160xf32>
    %39 = vector.shape_cast %38 : vector<160xf32> to vector<160x1xf32>
    %40 = tpu.reciprocal %39 {approx = true} : vector<160x1xf32> -> vector<160x1xf32>
    %41 = arith.truncf %37 : vector<160x160xf32> to vector<160x160xbf16>
    %42 = arith.truncf %23 : vector<160x32xf32> to vector<160x32xbf16>
    %cst_41 = arith.constant dense<0.000000e+00> : vector<160x32xf32>
    %43 = tpu.matmul %41, %42, %cst_41 {dimension_numbers = #tpu.dot_dimension_numbers<[1], [0], [0], [1], [0, 0, 1, 1], [], []>} : vector<160x160xbf16>, vector<160x32xbf16>, vector<160x32xf32> -> vector<160x32xf32>
    %44 = vector.broadcast %40 : vector<160x1xf32> to vector<160x32xf32>
    %45 = arith.mulf %43, %44 : vector<160x32xf32>
    %46 = arith.truncf %45 : vector<160x32xf32> to vector<160x32xbf16>
    %cst_42 = arith.constant dense<0.000000e+00> : vector<160x32xf32>
    %47 = tpu.matmul %46, %26, %cst_42 {dimension_numbers = #tpu.dot_dimension_numbers<[1], [0], [0], [1], [0, 0, 1, 1], [], []>} : vector<160x32xbf16>, vector<32x32xbf16>, vector<160x32xf32> -> vector<160x32xf32>
    %48 = vector.broadcast %28 : vector<1x32xf32> to vector<160x32xf32>
    %49 = arith.addf %47, %48 : vector<160x32xf32>
    %50 = arith.addf %3, %49 : vector<160x32xf32>
    %c0_43 = arith.constant 0 : index
    %c0_44 = arith.constant 0 : index
    %51 = vector.load %arg12[%c0_43, %c0_44] : memref<160x32xf32, #tpu.memory_space<vmem>>, vector<160x32xf32>
    tpu.vector_store %arg12[%c0_43, %c0_44], %50 {strides = array<i32>} : memref<160x32xf32, #tpu.memory_space<vmem>>, vector<160x32xf32>,
    %c0_45 = arith.constant 0 : index
    %c0_46 = arith.constant 0 : index
    %c0_47 = arith.constant 0 : index
    %52 = vector.load %arg11[%c0_45, %c0_46, %c0_47] : memref<1x160x32xf32, #tpu.memory_space<vmem>>, vector<1x160x32xf32>
    %53 = vector.shape_cast %52 : vector<1x160x32xf32> to vector<160x32xf32>
    %54 = vector.shape_cast %50 : vector<160x32xf32> to vector<1x160x32xf32>
    tpu.vector_store %arg11[%c0_45, %c0_46, %c0_47], %54 {strides = array<i32>} : memref<1x160x32xf32, #tpu.memory_space<vmem>>, vector<1x160x32xf32>,
    return
  }
  func.func @transform_0(%arg0: i32, %arg1: i32) -> (i32, i32, i32) {
    %c0_i32 = arith.constant 0 : i32
    %c0_i32_0 = arith.constant 0 : i32
    %c0_i32_1 = arith.constant 0 : i32
    return %arg0, %c0_i32, %c0_i32_0 : i32, i32, i32
  }
  func.func @transform_1(%arg0: i32, %arg1: i32) -> (i32, i32, i32, i32) {
    %c0_i32 = arith.constant 0 : i32
    %c0_i32_0 = arith.constant 0 : i32
    %c0_i32_1 = arith.constant 0 : i32
    return %arg0, %arg1, %c0_i32, %c0_i32_0 : i32, i32, i32, i32
  }
  func.func @transform_2(%arg0: i32, %arg1: i32) -> (i32, i32, i32, i32) {
    %c0_i32 = arith.constant 0 : i32
    %c0_i32_0 = arith.constant 0 : i32
    %c0_i32_1 = arith.constant 0 : i32
    return %arg0, %arg1, %c0_i32, %c0_i32_0 : i32, i32, i32, i32
  }
  func.func @transform_3(%arg0: i32, %arg1: i32) -> (i32, i32, i32, i32) {
    %c0_i32 = arith.constant 0 : i32
    %c0_i32_0 = arith.constant 0 : i32
    %c0_i32_1 = arith.constant 0 : i32
    return %arg0, %arg1, %c0_i32, %c0_i32_0 : i32, i32, i32, i32
  }
  func.func @transform_4(%arg0: i32, %arg1: i32) -> (i32, i32, i32, i32) {
    %c0_i32 = arith.constant 0 : i32
    %c0_i32_0 = arith.constant 0 : i32
    %c0_i32_1 = arith.constant 0 : i32
    return %arg0, %arg1, %c0_i32, %c0_i32_0 : i32, i32, i32, i32
  }
  func.func @transform_5(%arg0: i32, %arg1: i32) -> (i32, i32, i32, i32) {
    %c0_i32 = arith.constant 0 : i32
    %c0_i32_0 = arith.constant 0 : i32
    %c0_i32_1 = arith.constant 0 : i32
    return %arg0, %arg1, %c0_i32, %c0_i32_0 : i32, i32, i32, i32
  }
  func.func @transform_6(%arg0: i32, %arg1: i32) -> (i32, i32, i32, i32) {
    %c0_i32 = arith.constant 0 : i32
    %c0_i32_0 = arith.constant 0 : i32
    %c0_i32_1 = arith.constant 0 : i32
    return %arg0, %arg1, %c0_i32, %c0_i32_0 : i32, i32, i32, i32
  }
  func.func @transform_7(%arg0: i32, %arg1: i32) -> (i32, i32, i32, i32) {
    %c0_i32 = arith.constant 0 : i32
    %c0_i32_0 = arith.constant 0 : i32
    %c0_i32_1 = arith.constant 0 : i32
    return %arg0, %arg1, %c0_i32, %c0_i32_0 : i32, i32, i32, i32
  }
  func.func @transform_8(%arg0: i32, %arg1: i32) -> (i32, i32, i32, i32) {
    %c0_i32 = arith.constant 0 : i32
    %c0_i32_0 = arith.constant 0 : i32
    %c0_i32_1 = arith.constant 0 : i32
    return %arg0, %arg1, %c0_i32, %c0_i32_0 : i32, i32, i32, i32
  }
  func.func @transform_9(%arg0: i32, %arg1: i32) -> (i32, i32, i32) {
    %c0_i32 = arith.constant 0 : i32
    %c0_i32_0 = arith.constant 0 : i32
    %c0_i32_1 = arith.constant 0 : i32
    return %arg0, %c0_i32, %c0_i32_0 : i32, i32, i32
  }
}

module attributes {stable_mosaic.version = 11 : i64} {
  func.func @kernel(%arg0: i32, %arg1: memref<1x128x32xf32, #tpu.memory_space<vmem>>, %arg2: memref<1x32x32xf32, #tpu.memory_space<vmem>>, %arg3: memref<1x128x32xf32, #tpu.memory_space<vmem>>, %arg4: memref<1x32x32xf32, #tpu.memory_space<vmem>>, %arg5: memref<1x32x32xf32, #tpu.memory_space<vmem>>, %arg6: memref<1x128x32xf32, #tpu.memory_space<vmem>>, %arg7: memref<1x4x32x32xbf16, #tpu.memory_space<vmem>>, %arg8: memref<1x4x32x32xbf16, #tpu.memory_space<vmem>>, %arg9: memref<1x2x1x32xf32, #tpu.memory_space<vmem>>, %arg10: memref<1x2x1x32xf32, #tpu.memory_space<vmem>>, %arg11: memref<1x128x32xf32, #tpu.memory_space<vmem>>, %arg12: memref<1x32x32xf32, #tpu.memory_space<vmem>>) attributes {dimension_semantics = [#tpu.dimension_semantics<parallel>], iteration_bounds = array<i64: 2>, scalar_prefetch = 0 : i64, scratch_operands = 0 : i64, tpu.core_type = #tpu.core_type<tc>, window_params = [{transform_indices = @transform_0, window_bounds = array<i64: 1, 128, 32>}, {transform_indices = @transform_1, window_bounds = array<i64: 1, 32, 32>}, {transform_indices = @transform_2, window_bounds = array<i64: 1, 128, 32>}, {transform_indices = @transform_3, window_bounds = array<i64: 1, 32, 32>}, {transform_indices = @transform_4, window_bounds = array<i64: 1, 32, 32>}, {transform_indices = @transform_5, window_bounds = array<i64: 1, 128, 32>}, {transform_indices = @transform_6, window_bounds = array<i64: 1, 4, 32, 32>}, {transform_indices = @transform_7, window_bounds = array<i64: 1, 4, 32, 32>}, {transform_indices = @transform_8, window_bounds = array<i64: 1, 2, 1, 32>}, {transform_indices = @transform_9, window_bounds = array<i64: 1, 2, 1, 32>}, {transform_indices = @transform_10, window_bounds = array<i64: 1, 128, 32>}, {transform_indices = @transform_11, window_bounds = array<i64: 1, 32, 32>}]} {
    %c0_i32 = arith.constant 0 : i32
    %0 = arith.cmpi eq, %arg0, %c0_i32 : i32
    %c16_i32 = arith.constant 16 : i32
    %c64_i32 = arith.constant 64 : i32
    %1 = arith.select %0, %c16_i32, %c64_i32 : i32
    %c0_i32_0 = arith.constant 0 : i32
    %2 = arith.cmpi eq, %arg0, %c0_i32_0 : i32
    %c4_i32 = arith.constant 4 : i32
    %c16_i32_1 = arith.constant 16 : i32
    %3 = arith.select %2, %c4_i32, %c16_i32_1 : i32
    %c0 = arith.constant 0 : index
    %c0_2 = arith.constant 0 : index
    %c0_3 = arith.constant 0 : index
    %4 = vector.load %arg1[%c0, %c0_2, %c0_3] : memref<1x128x32xf32, #tpu.memory_space<vmem>>, vector<1x128x32xf32>
    %5 = vector.shape_cast %4 : vector<1x128x32xf32> to vector<128x32xf32>
    %c0_4 = arith.constant 0 : index
    %c0_5 = arith.constant 0 : index
    %c0_6 = arith.constant 0 : index
    %6 = vector.load %arg2[%c0_4, %c0_5, %c0_6] : memref<1x32x32xf32, #tpu.memory_space<vmem>>, vector<1x32x32xf32>
    %7 = vector.shape_cast %6 : vector<1x32x32xf32> to vector<32x32xf32>
    %8 = arith.truncf %5 : vector<128x32xf32> to vector<128x32xbf16>
    %9 = arith.truncf %7 : vector<32x32xf32> to vector<32x32xbf16>
    %10 = tpu.iota {dimensions = array<i32: 0>} : vector<128x32xi32>
    %11 = tpu.iota {dimensions = array<i32: 1>} : vector<128x32xi32>
    %c0_i32_7 = arith.constant 0 : i32
    %12 = vector.broadcast %c0_i32_7 : i32 to vector<128x32xi32>
    %13 = arith.cmpi sge, %10, %12 : vector<128x32xi32>
    %c64_i32_8 = arith.constant 64 : i32
    %14 = vector.broadcast %c64_i32_8 : i32 to vector<128x32xi32>
    %15 = arith.cmpi slt, %10, %14 : vector<128x32xi32>
    %16 = arith.andi %13, %15 : vector<128x32xi1>
    %c0_i32_9 = arith.constant 0 : i32
    %17 = vector.broadcast %c0_i32_9 : i32 to vector<128x32xi32>
    %18 = arith.cmpi sge, %11, %17 : vector<128x32xi32>
    %19 = arith.andi %16, %18 : vector<128x32xi1>
    %c0_i32_10 = arith.constant 0 : i32
    %20 = arith.addi %c0_i32_10, %3 : i32
    %21 = vector.broadcast %20 : i32 to vector<128x32xi32>
    %22 = arith.cmpi slt, %11, %21 : vector<128x32xi32>
    %23 = arith.andi %19, %22 : vector<128x32xi1>
    %c64_i32_11 = arith.constant 64 : i32
    %24 = vector.broadcast %c64_i32_11 : i32 to vector<128x32xi32>
    %25 = arith.cmpi sge, %10, %24 : vector<128x32xi32>
    %c128_i32 = arith.constant 128 : i32
    %26 = vector.broadcast %c128_i32 : i32 to vector<128x32xi32>
    %27 = arith.cmpi slt, %10, %26 : vector<128x32xi32>
    %28 = arith.andi %25, %27 : vector<128x32xi1>
    %c16_i32_12 = arith.constant 16 : i32
    %29 = vector.broadcast %c16_i32_12 : i32 to vector<128x32xi32>
    %30 = arith.cmpi sge, %11, %29 : vector<128x32xi32>
    %31 = arith.andi %28, %30 : vector<128x32xi1>
    %c16_i32_13 = arith.constant 16 : i32
    %32 = arith.addi %c16_i32_13, %3 : i32
    %33 = vector.broadcast %32 : i32 to vector<128x32xi32>
    %34 = arith.cmpi slt, %11, %33 : vector<128x32xi32>
    %35 = arith.andi %31, %34 : vector<128x32xi1>
    %36 = arith.ori %23, %35 : vector<128x32xi1>
    %cst = arith.constant 0.000000e+00 : f32
    %cst_14 = arith.constant -1.000000e+30 : f32
    %37 = vector.broadcast %cst : f32 to vector<128x32xf32>
    %38 = vector.broadcast %cst_14 : f32 to vector<128x32xf32>
    %39 = arith.select %36, %37, %38 : vector<128x32xi1>, vector<128x32xf32>
    %40 = tpu.iota {dimensions = array<i32: 0>} : vector<32x128xi32>
    %41 = tpu.iota {dimensions = array<i32: 1>} : vector<32x128xi32>
    %c0_i32_15 = arith.constant 0 : i32
    %42 = vector.broadcast %c0_i32_15 : i32 to vector<32x128xi32>
    %43 = arith.cmpi sge, %40, %42 : vector<32x128xi32>
    %c16_i32_16 = arith.constant 16 : i32
    %44 = vector.broadcast %c16_i32_16 : i32 to vector<32x128xi32>
    %45 = arith.cmpi slt, %40, %44 : vector<32x128xi32>
    %46 = arith.andi %43, %45 : vector<32x128xi1>
    %c0_i32_17 = arith.constant 0 : i32
    %47 = vector.broadcast %c0_i32_17 : i32 to vector<32x128xi32>
    %48 = arith.cmpi sge, %41, %47 : vector<32x128xi32>
    %49 = arith.andi %46, %48 : vector<32x128xi1>
    %c0_i32_18 = arith.constant 0 : i32
    %50 = arith.addi %c0_i32_18, %1 : i32
    %51 = vector.broadcast %50 : i32 to vector<32x128xi32>
    %52 = arith.cmpi slt, %41, %51 : vector<32x128xi32>
    %53 = arith.andi %49, %52 : vector<32x128xi1>
    %c16_i32_19 = arith.constant 16 : i32
    %54 = vector.broadcast %c16_i32_19 : i32 to vector<32x128xi32>
    %55 = arith.cmpi sge, %40, %54 : vector<32x128xi32>
    %c32_i32 = arith.constant 32 : i32
    %56 = vector.broadcast %c32_i32 : i32 to vector<32x128xi32>
    %57 = arith.cmpi slt, %40, %56 : vector<32x128xi32>
    %58 = arith.andi %55, %57 : vector<32x128xi1>
    %c64_i32_20 = arith.constant 64 : i32
    %59 = vector.broadcast %c64_i32_20 : i32 to vector<32x128xi32>
    %60 = arith.cmpi sge, %41, %59 : vector<32x128xi32>
    %61 = arith.andi %58, %60 : vector<32x128xi1>
    %c64_i32_21 = arith.constant 64 : i32
    %62 = arith.addi %c64_i32_21, %1 : i32
    %63 = vector.broadcast %62 : i32 to vector<32x128xi32>
    %64 = arith.cmpi slt, %41, %63 : vector<32x128xi32>
    %65 = arith.andi %61, %64 : vector<32x128xi1>
    %66 = arith.ori %53, %65 : vector<32x128xi1>
    %cst_22 = arith.constant 0.000000e+00 : f32
    %cst_23 = arith.constant -1.000000e+30 : f32
    %67 = vector.broadcast %cst_22 : f32 to vector<32x128xf32>
    %68 = vector.broadcast %cst_23 : f32 to vector<32x128xf32>
    %69 = arith.select %66, %67, %68 : vector<32x128xi1>, vector<32x128xf32>
    %c0_24 = arith.constant 0 : index
    %c0_25 = arith.constant 0 : index
    %c0_26 = arith.constant 0 : index
    %c0_27 = arith.constant 0 : index
    %70 = vector.load %arg7[%c0_24, %c0_25, %c0_26, %c0_27] : memref<1x4x32x32xbf16, #tpu.memory_space<vmem>>, vector<1x1x32x32xbf16>
    %71 = vector.shape_cast %70 : vector<1x1x32x32xbf16> to vector<32x32xbf16>
    %cst_28 = arith.constant dense<0.000000e+00> : vector<128x32xf32>
    %72 = tpu.matmul %8, %71, %cst_28 {dimension_numbers = #tpu.dot_dimension_numbers<[1], [0], [0], [1], [0, 0, 1, 1], [], []>} : vector<128x32xbf16>, vector<32x32xbf16>, vector<128x32xf32> -> vector<128x32xf32>
    %c0_29 = arith.constant 0 : index
    %c0_30 = arith.constant 0 : index
    %c0_31 = arith.constant 0 : index
    %73 = vector.load %arg3[%c0_29, %c0_30, %c0_31] : memref<1x128x32xf32, #tpu.memory_space<vmem>>, vector<1x128x32xf32>
    %74 = vector.shape_cast %73 : vector<1x128x32xf32> to vector<128x32xf32>
    %75 = arith.addf %72, %74 : vector<128x32xf32>
    %c0_32 = arith.constant 0 : index
    %c1 = arith.constant 1 : index
    %c0_33 = arith.constant 0 : index
    %c0_34 = arith.constant 0 : index
    %76 = vector.load %arg7[%c0_32, %c1, %c0_33, %c0_34] : memref<1x4x32x32xbf16, #tpu.memory_space<vmem>>, vector<1x1x32x32xbf16>
    %77 = vector.shape_cast %76 : vector<1x1x32x32xbf16> to vector<32x32xbf16>
    %cst_35 = arith.constant dense<0.000000e+00> : vector<32x32xf32>
    %78 = tpu.matmul %9, %77, %cst_35 {dimension_numbers = #tpu.dot_dimension_numbers<[1], [0], [0], [1], [0, 0, 1, 1], [], []>} : vector<32x32xbf16>, vector<32x32xbf16>, vector<32x32xf32> -> vector<32x32xf32>
    %c0_36 = arith.constant 0 : index
    %c0_37 = arith.constant 0 : index
    %c0_38 = arith.constant 0 : index
    %79 = vector.load %arg4[%c0_36, %c0_37, %c0_38] : memref<1x32x32xf32, #tpu.memory_space<vmem>>, vector<1x32x32xf32>
    %80 = vector.shape_cast %79 : vector<1x32x32xf32> to vector<32x32xf32>
    %81 = arith.addf %78, %80 : vector<32x32xf32>
    %c0_39 = arith.constant 0 : index
    %c2 = arith.constant 2 : index
    %c0_40 = arith.constant 0 : index
    %c0_41 = arith.constant 0 : index
    %82 = vector.load %arg7[%c0_39, %c2, %c0_40, %c0_41] : memref<1x4x32x32xbf16, #tpu.memory_space<vmem>>, vector<1x1x32x32xbf16>
    %83 = vector.shape_cast %82 : vector<1x1x32x32xbf16> to vector<32x32xbf16>
    %cst_42 = arith.constant dense<0.000000e+00> : vector<32x32xf32>
    %84 = tpu.matmul %9, %83, %cst_42 {dimension_numbers = #tpu.dot_dimension_numbers<[1], [0], [0], [1], [0, 0, 1, 1], [], []>} : vector<32x32xbf16>, vector<32x32xbf16>, vector<32x32xf32> -> vector<32x32xf32>
    %c0_43 = arith.constant 0 : index
    %c0_44 = arith.constant 0 : index
    %c0_45 = arith.constant 0 : index
    %c0_46 = arith.constant 0 : index
    %85 = vector.load %arg9[%c0_43, %c0_44, %c0_45, %c0_46] : memref<1x2x1x32xf32, #tpu.memory_space<vmem>>, vector<1x1x1x32xf32>
    %86 = vector.shape_cast %85 : vector<1x1x1x32xf32> to vector<1x32xf32>
    %87 = vector.broadcast %86 : vector<1x32xf32> to vector<32x32xf32>
    %88 = arith.addf %84, %87 : vector<32x32xf32>
    %c0_47 = arith.constant 0 : index
    %c3 = arith.constant 3 : index
    %c0_48 = arith.constant 0 : index
    %c0_49 = arith.constant 0 : index
    %89 = vector.load %arg7[%c0_47, %c3, %c0_48, %c0_49] : memref<1x4x32x32xbf16, #tpu.memory_space<vmem>>, vector<1x1x32x32xbf16>
    %90 = vector.shape_cast %89 : vector<1x1x32x32xbf16> to vector<32x32xbf16>
    %c0_50 = arith.constant 0 : index
    %c1_51 = arith.constant 1 : index
    %c0_52 = arith.constant 0 : index
    %c0_53 = arith.constant 0 : index
    %91 = vector.load %arg9[%c0_50, %c1_51, %c0_52, %c0_53] : memref<1x2x1x32xf32, #tpu.memory_space<vmem>>, vector<1x1x1x32xf32>
    %92 = vector.shape_cast %91 : vector<1x1x1x32xf32> to vector<1x32xf32>
    %93 = arith.truncf %75 : vector<128x32xf32> to vector<128x32xbf16>
    %94 = arith.truncf %81 : vector<32x32xf32> to vector<32x32xbf16>
    %cst_54 = arith.constant dense<0.000000e+00> : vector<128x32xf32>
    %95 = tpu.matmul %93, %94, %cst_54 {dimension_numbers = #tpu.dot_dimension_numbers<[1], [1], [0], [0], [0, 0, 1, 0], [], []>} : vector<128x32xbf16>, vector<32x32xbf16>, vector<128x32xf32> -> vector<128x32xf32>
    %96 = arith.addf %95, %39 : vector<128x32xf32>
    %cst_55 = arith.constant dense<0xFF800000> : vector<128xf32>
    %97 = vector.multi_reduction <maximumf>, %96, %cst_55 [1] : vector<128x32xf32> to vector<128xf32>
    %98 = vector.shape_cast %97 : vector<128xf32> to vector<128x1xf32>
    %99 = vector.broadcast %98 : vector<128x1xf32> to vector<128x32xf32>
    %100 = arith.subf %96, %99 : vector<128x32xf32>
    %101 = math.exp %100 : vector<128x32xf32>
    %cst_56 = arith.constant dense<0.000000e+00> : vector<128xf32>
    %102 = vector.multi_reduction <add>, %101, %cst_56 [1] : vector<128x32xf32> to vector<128xf32>
    %103 = vector.shape_cast %102 : vector<128xf32> to vector<128x1xf32>
    %104 = tpu.reciprocal %103 {approx = true} : vector<128x1xf32> -> vector<128x1xf32>
    %105 = arith.truncf %101 : vector<128x32xf32> to vector<128x32xbf16>
    %106 = arith.truncf %88 : vector<32x32xf32> to vector<32x32xbf16>
    %cst_57 = arith.constant dense<0.000000e+00> : vector<128x32xf32>
    %107 = tpu.matmul %105, %106, %cst_57 {dimension_numbers = #tpu.dot_dimension_numbers<[1], [0], [0], [1], [0, 0, 1, 1], [], []>} : vector<128x32xbf16>, vector<32x32xbf16>, vector<128x32xf32> -> vector<128x32xf32>
    %108 = vector.broadcast %104 : vector<128x1xf32> to vector<128x32xf32>
    %109 = arith.mulf %107, %108 : vector<128x32xf32>
    %110 = arith.truncf %109 : vector<128x32xf32> to vector<128x32xbf16>
    %cst_58 = arith.constant dense<0.000000e+00> : vector<128x32xf32>
    %111 = tpu.matmul %110, %90, %cst_58 {dimension_numbers = #tpu.dot_dimension_numbers<[1], [0], [0], [1], [0, 0, 1, 1], [], []>} : vector<128x32xbf16>, vector<32x32xbf16>, vector<128x32xf32> -> vector<128x32xf32>
    %112 = vector.broadcast %92 : vector<1x32xf32> to vector<128x32xf32>
    %113 = arith.addf %111, %112 : vector<128x32xf32>
    %114 = arith.addf %5, %113 : vector<128x32xf32>
    %c0_59 = arith.constant 0 : index
    %c0_60 = arith.constant 0 : index
    %c0_61 = arith.constant 0 : index
    %c0_62 = arith.constant 0 : index
    %115 = vector.load %arg8[%c0_59, %c0_60, %c0_61, %c0_62] : memref<1x4x32x32xbf16, #tpu.memory_space<vmem>>, vector<1x1x32x32xbf16>
    %116 = vector.shape_cast %115 : vector<1x1x32x32xbf16> to vector<32x32xbf16>
    %cst_63 = arith.constant dense<0.000000e+00> : vector<32x32xf32>
    %117 = tpu.matmul %9, %116, %cst_63 {dimension_numbers = #tpu.dot_dimension_numbers<[1], [0], [0], [1], [0, 0, 1, 1], [], []>} : vector<32x32xbf16>, vector<32x32xbf16>, vector<32x32xf32> -> vector<32x32xf32>
    %c0_64 = arith.constant 0 : index
    %c0_65 = arith.constant 0 : index
    %c0_66 = arith.constant 0 : index
    %118 = vector.load %arg5[%c0_64, %c0_65, %c0_66] : memref<1x32x32xf32, #tpu.memory_space<vmem>>, vector<1x32x32xf32>
    %119 = vector.shape_cast %118 : vector<1x32x32xf32> to vector<32x32xf32>
    %120 = arith.addf %117, %119 : vector<32x32xf32>
    %c0_67 = arith.constant 0 : index
    %c1_68 = arith.constant 1 : index
    %c0_69 = arith.constant 0 : index
    %c0_70 = arith.constant 0 : index
    %121 = vector.load %arg8[%c0_67, %c1_68, %c0_69, %c0_70] : memref<1x4x32x32xbf16, #tpu.memory_space<vmem>>, vector<1x1x32x32xbf16>
    %122 = vector.shape_cast %121 : vector<1x1x32x32xbf16> to vector<32x32xbf16>
    %cst_71 = arith.constant dense<0.000000e+00> : vector<128x32xf32>
    %123 = tpu.matmul %8, %122, %cst_71 {dimension_numbers = #tpu.dot_dimension_numbers<[1], [0], [0], [1], [0, 0, 1, 1], [], []>} : vector<128x32xbf16>, vector<32x32xbf16>, vector<128x32xf32> -> vector<128x32xf32>
    %c0_72 = arith.constant 0 : index
    %c0_73 = arith.constant 0 : index
    %c0_74 = arith.constant 0 : index
    %124 = vector.load %arg6[%c0_72, %c0_73, %c0_74] : memref<1x128x32xf32, #tpu.memory_space<vmem>>, vector<1x128x32xf32>
    %125 = vector.shape_cast %124 : vector<1x128x32xf32> to vector<128x32xf32>
    %126 = arith.addf %123, %125 : vector<128x32xf32>
    %c0_75 = arith.constant 0 : index
    %c2_76 = arith.constant 2 : index
    %c0_77 = arith.constant 0 : index
    %c0_78 = arith.constant 0 : index
    %127 = vector.load %arg8[%c0_75, %c2_76, %c0_77, %c0_78] : memref<1x4x32x32xbf16, #tpu.memory_space<vmem>>, vector<1x1x32x32xbf16>
    %128 = vector.shape_cast %127 : vector<1x1x32x32xbf16> to vector<32x32xbf16>
    %cst_79 = arith.constant dense<0.000000e+00> : vector<128x32xf32>
    %129 = tpu.matmul %8, %128, %cst_79 {dimension_numbers = #tpu.dot_dimension_numbers<[1], [0], [0], [1], [0, 0, 1, 1], [], []>} : vector<128x32xbf16>, vector<32x32xbf16>, vector<128x32xf32> -> vector<128x32xf32>
    %c0_80 = arith.constant 0 : index
    %c0_81 = arith.constant 0 : index
    %c0_82 = arith.constant 0 : index
    %c0_83 = arith.constant 0 : index
    %130 = vector.load %arg10[%c0_80, %c0_81, %c0_82, %c0_83] : memref<1x2x1x32xf32, #tpu.memory_space<vmem>>, vector<1x1x1x32xf32>
    %131 = vector.shape_cast %130 : vector<1x1x1x32xf32> to vector<1x32xf32>
    %132 = vector.broadcast %131 : vector<1x32xf32> to vector<128x32xf32>
    %133 = arith.addf %129, %132 : vector<128x32xf32>
    %c0_84 = arith.constant 0 : index
    %c3_85 = arith.constant 3 : index
    %c0_86 = arith.constant 0 : index
    %c0_87 = arith.constant 0 : index
    %134 = vector.load %arg8[%c0_84, %c3_85, %c0_86, %c0_87] : memref<1x4x32x32xbf16, #tpu.memory_space<vmem>>, vector<1x1x32x32xbf16>
    %135 = vector.shape_cast %134 : vector<1x1x32x32xbf16> to vector<32x32xbf16>
    %c0_88 = arith.constant 0 : index
    %c1_89 = arith.constant 1 : index
    %c0_90 = arith.constant 0 : index
    %c0_91 = arith.constant 0 : index
    %136 = vector.load %arg10[%c0_88, %c1_89, %c0_90, %c0_91] : memref<1x2x1x32xf32, #tpu.memory_space<vmem>>, vector<1x1x1x32xf32>
    %137 = vector.shape_cast %136 : vector<1x1x1x32xf32> to vector<1x32xf32>
    %138 = arith.truncf %120 : vector<32x32xf32> to vector<32x32xbf16>
    %139 = arith.truncf %126 : vector<128x32xf32> to vector<128x32xbf16>
    %cst_92 = arith.constant dense<0.000000e+00> : vector<32x128xf32>
    %140 = tpu.matmul %138, %139, %cst_92 {dimension_numbers = #tpu.dot_dimension_numbers<[1], [1], [0], [0], [0, 0, 1, 0], [], []>} : vector<32x32xbf16>, vector<128x32xbf16>, vector<32x128xf32> -> vector<32x128xf32>
    %141 = arith.addf %140, %69 : vector<32x128xf32>
    %cst_93 = arith.constant dense<0xFF800000> : vector<32xf32>
    %142 = vector.multi_reduction <maximumf>, %141, %cst_93 [1] : vector<32x128xf32> to vector<32xf32>
    %143 = vector.shape_cast %142 : vector<32xf32> to vector<32x1xf32>
    %144 = vector.broadcast %143 : vector<32x1xf32> to vector<32x128xf32>
    %145 = arith.subf %141, %144 : vector<32x128xf32>
    %146 = math.exp %145 : vector<32x128xf32>
    %cst_94 = arith.constant dense<0.000000e+00> : vector<32xf32>
    %147 = vector.multi_reduction <add>, %146, %cst_94 [1] : vector<32x128xf32> to vector<32xf32>
    %148 = vector.shape_cast %147 : vector<32xf32> to vector<32x1xf32>
    %149 = tpu.reciprocal %148 {approx = true} : vector<32x1xf32> -> vector<32x1xf32>
    %150 = arith.truncf %146 : vector<32x128xf32> to vector<32x128xbf16>
    %151 = arith.truncf %133 : vector<128x32xf32> to vector<128x32xbf16>
    %cst_95 = arith.constant dense<0.000000e+00> : vector<32x32xf32>
    %152 = tpu.matmul %150, %151, %cst_95 {dimension_numbers = #tpu.dot_dimension_numbers<[1], [0], [0], [1], [0, 0, 1, 1], [], []>} : vector<32x128xbf16>, vector<128x32xbf16>, vector<32x32xf32> -> vector<32x32xf32>
    %153 = vector.broadcast %149 : vector<32x1xf32> to vector<32x32xf32>
    %154 = arith.mulf %152, %153 : vector<32x32xf32>
    %155 = arith.truncf %154 : vector<32x32xf32> to vector<32x32xbf16>
    %cst_96 = arith.constant dense<0.000000e+00> : vector<32x32xf32>
    %156 = tpu.matmul %155, %135, %cst_96 {dimension_numbers = #tpu.dot_dimension_numbers<[1], [0], [0], [1], [0, 0, 1, 1], [], []>} : vector<32x32xbf16>, vector<32x32xbf16>, vector<32x32xf32> -> vector<32x32xf32>
    %157 = vector.broadcast %137 : vector<1x32xf32> to vector<32x32xf32>
    %158 = arith.addf %156, %157 : vector<32x32xf32>
    %159 = arith.addf %7, %158 : vector<32x32xf32>
    %c0_97 = arith.constant 0 : index
    %c0_98 = arith.constant 0 : index
    %c0_99 = arith.constant 0 : index
    %160 = vector.load %arg11[%c0_97, %c0_98, %c0_99] : memref<1x128x32xf32, #tpu.memory_space<vmem>>, vector<1x128x32xf32>
    %161 = vector.shape_cast %160 : vector<1x128x32xf32> to vector<128x32xf32>
    %162 = vector.shape_cast %114 : vector<128x32xf32> to vector<1x128x32xf32>
    tpu.vector_store %arg11[%c0_97, %c0_98, %c0_99], %162 {strides = array<i32>} : memref<1x128x32xf32, #tpu.memory_space<vmem>>, vector<1x128x32xf32>,
    %c0_100 = arith.constant 0 : index
    %c0_101 = arith.constant 0 : index
    %c0_102 = arith.constant 0 : index
    %163 = vector.load %arg12[%c0_100, %c0_101, %c0_102] : memref<1x32x32xf32, #tpu.memory_space<vmem>>, vector<1x32x32xf32>
    %164 = vector.shape_cast %163 : vector<1x32x32xf32> to vector<32x32xf32>
    %165 = vector.shape_cast %159 : vector<32x32xf32> to vector<1x32x32xf32>
    tpu.vector_store %arg12[%c0_100, %c0_101, %c0_102], %165 {strides = array<i32>} : memref<1x32x32xf32, #tpu.memory_space<vmem>>, vector<1x32x32xf32>,
    return
  }
  func.func @transform_0(%arg0: i32) -> (i32, i32, i32) {
    %c0_i32 = arith.constant 0 : i32
    %c0_i32_0 = arith.constant 0 : i32
    %c0_i32_1 = arith.constant 0 : i32
    return %arg0, %c0_i32, %c0_i32_0 : i32, i32, i32
  }
  func.func @transform_1(%arg0: i32) -> (i32, i32, i32) {
    %c0_i32 = arith.constant 0 : i32
    %c0_i32_0 = arith.constant 0 : i32
    %c0_i32_1 = arith.constant 0 : i32
    return %arg0, %c0_i32, %c0_i32_0 : i32, i32, i32
  }
  func.func @transform_2(%arg0: i32) -> (i32, i32, i32) {
    %c0_i32 = arith.constant 0 : i32
    %c0_i32_0 = arith.constant 0 : i32
    %c0_i32_1 = arith.constant 0 : i32
    return %arg0, %c0_i32, %c0_i32_0 : i32, i32, i32
  }
  func.func @transform_3(%arg0: i32) -> (i32, i32, i32) {
    %c0_i32 = arith.constant 0 : i32
    %c0_i32_0 = arith.constant 0 : i32
    %c0_i32_1 = arith.constant 0 : i32
    return %arg0, %c0_i32, %c0_i32_0 : i32, i32, i32
  }
  func.func @transform_4(%arg0: i32) -> (i32, i32, i32) {
    %c0_i32 = arith.constant 0 : i32
    %c0_i32_0 = arith.constant 0 : i32
    %c0_i32_1 = arith.constant 0 : i32
    return %arg0, %c0_i32, %c0_i32_0 : i32, i32, i32
  }
  func.func @transform_5(%arg0: i32) -> (i32, i32, i32) {
    %c0_i32 = arith.constant 0 : i32
    %c0_i32_0 = arith.constant 0 : i32
    %c0_i32_1 = arith.constant 0 : i32
    return %arg0, %c0_i32, %c0_i32_0 : i32, i32, i32
  }
  func.func @transform_6(%arg0: i32) -> (i32, i32, i32, i32) {
    %c0_i32 = arith.constant 0 : i32
    %c0_i32_0 = arith.constant 0 : i32
    %c0_i32_1 = arith.constant 0 : i32
    %c0_i32_2 = arith.constant 0 : i32
    return %arg0, %c0_i32, %c0_i32_0, %c0_i32_1 : i32, i32, i32, i32
  }
  func.func @transform_7(%arg0: i32) -> (i32, i32, i32, i32) {
    %c0_i32 = arith.constant 0 : i32
    %c0_i32_0 = arith.constant 0 : i32
    %c0_i32_1 = arith.constant 0 : i32
    %c0_i32_2 = arith.constant 0 : i32
    return %arg0, %c0_i32, %c0_i32_0, %c0_i32_1 : i32, i32, i32, i32
  }
  func.func @transform_8(%arg0: i32) -> (i32, i32, i32, i32) {
    %c0_i32 = arith.constant 0 : i32
    %c0_i32_0 = arith.constant 0 : i32
    %c0_i32_1 = arith.constant 0 : i32
    %c0_i32_2 = arith.constant 0 : i32
    return %arg0, %c0_i32, %c0_i32_0, %c0_i32_1 : i32, i32, i32, i32
  }
  func.func @transform_9(%arg0: i32) -> (i32, i32, i32, i32) {
    %c0_i32 = arith.constant 0 : i32
    %c0_i32_0 = arith.constant 0 : i32
    %c0_i32_1 = arith.constant 0 : i32
    %c0_i32_2 = arith.constant 0 : i32
    return %arg0, %c0_i32, %c0_i32_0, %c0_i32_1 : i32, i32, i32, i32
  }
  func.func @transform_10(%arg0: i32) -> (i32, i32, i32) {
    %c0_i32 = arith.constant 0 : i32
    %c0_i32_0 = arith.constant 0 : i32
    %c0_i32_1 = arith.constant 0 : i32
    return %arg0, %c0_i32, %c0_i32_0 : i32, i32, i32
  }
  func.func @transform_11(%arg0: i32) -> (i32, i32, i32) {
    %c0_i32 = arith.constant 0 : i32
    %c0_i32_0 = arith.constant 0 : i32
    %c0_i32_1 = arith.constant 0 : i32
    return %arg0, %c0_i32, %c0_i32_0 : i32, i32, i32
  }
}

</mosaic_0001>

<llo_original>
// kernel: forward.3
$region0: #{forward.3}
  #allocation0 [shape = 'u32[]', space=smem, size = 0x4, offset = 0x4, fixed_abs, tag = 'smem constant byte address 0x4 - core index']
  #allocation1 [shape = 'u32[144,128]{1,0:T(1,128)}', space=vmem, size = 0x12000, scoped, tag = 'internal scratch']
  %s0 = inlined_call_operand.vmem [shape: f32[2,128,32], index: 0, kind: input, shape index: {}, may-alias: {0,10}]
  %s1 = inlined_call_operand.vmem [shape: f32[2,32,32], index: 1, kind: input, shape index: {}, may-alias: {1,11}]
  %s2 = inlined_call_operand.vmem [shape: f32[2,128,32], index: 2, kind: input, shape index: {}]
  %s3 = inlined_call_operand.vmem [shape: f32[2,32,32], index: 3, kind: input, shape index: {}]
  %s4 = inlined_call_operand.vmem [shape: f32[2,32,32], index: 4, kind: input, shape index: {}]
  %s5 = inlined_call_operand.vmem [shape: f32[2,128,32], index: 5, kind: input, shape index: {}]
  %s6 = inlined_call_operand.vmem [shape: bf16[2,4,32,32], index: 6, kind: input, shape index: {}]
  %s7 = inlined_call_operand.vmem [shape: bf16[2,4,32,32], index: 7, kind: input, shape index: {}]
  %s8 = inlined_call_operand.vmem [shape: f32[2,2,1,32], index: 8, kind: input, shape index: {}]
  %s9 = inlined_call_operand.vmem [shape: f32[2,2,1,32], index: 9, kind: input, shape index: {}]
  %s10 = inlined_call_operand.vmem [shape: f32[2,128,32], index: 10, kind: output, shape index: {0}, may-alias: {0,10}]
  %s11 = inlined_call_operand.vmem [shape: f32[2,32,32], index: 11, kind: output, shape index: {1}, may-alias: {1,11}]
  %12 = xla_tuple %s10, %s11
  %s13 = sld [smem:[#allocation0]]
  $region81: #{forward.3} parent=0
    _
  %s15 = ssub.s32 1, %s13
  %s16 = scalar_select 0, %s15, %s13
  loop: start=0, step=1, limit=4
  $region2: #{forward.3} parent=0 // loop_pre_header
    _
  $region3: #{forward.3} parent=0 // loop_header
    %s18 = sphi 0, %s22
    %p19 = scmp.ge.s32.totalorder %s18, 4
    %s28 = sphi 0, %s30
    %s31 = sphi 0, %s28
    %s32 = sphi 0, %s31
    %s48 = sphi 0, %s32
    %s54 = sphi 0, %s56
    %s57 = sphi 0, %s54
    %s58 = sphi 0, %s57
    %s74 = sphi 0, %s58
    %s80 = sphi 0, %s82
    %s83 = sphi 0, %s80
    %s84 = sphi 0, %s83
    %s100 = sphi 0, %s84
    %s106 = sphi 0, %s108
    %s109 = sphi 0, %s106
    %s110 = sphi 0, %s109
    %s126 = sphi 0, %s110
    %s132 = sphi 0, %s134
    %s135 = sphi 0, %s132
    %s136 = sphi 0, %s135
    %s152 = sphi 0, %s136
    %s158 = sphi 0, %s160
    %s161 = sphi 0, %s158
    %s162 = sphi 0, %s161
    %s178 = sphi 0, %s162
    %s184 = sphi 0, %s186
    %s187 = sphi 0, %s184
    %s188 = sphi 0, %s187
    %s204 = sphi 0, %s188
    %s210 = sphi 0, %s212
    %s213 = sphi 0, %s210
    %s214 = sphi 0, %s213
    %s230 = sphi 0, %s214
    %s236 = sphi 0, %s238
    %s239 = sphi 0, %s236
    %s240 = sphi 0, %s239
    %s256 = sphi 0, %s240
    %s262 = sphi 0, %s264
    %s265 = sphi 0, %s262
    %s266 = sphi 0, %s265
    %s282 = sphi 0, %s266
    %s288 = sphi 0, %s290
    %s291 = sphi 0, %s288
    %s292 = sphi 0, %s291
    %s308 = sphi 0, %s292
    %s314 = sphi 0, %s316
    %s317 = sphi 0, %s314
    %s318 = sphi 0, %s317
    %s334 = sphi 0, %s318
  $region4: #{forward.3} parent=0 // loop_header_branch
    %21 = sbr.rel (%p19) target = $region8
  $region5: #{forward.3} parent=0 // loop_body
    %s23 = ssub.s32 %s18, 1
    %s24 = ssub.s32 %s18, 2
    %s25 = sadd.s32 %s18, 1
    %s26 = ssub.s32 %s18, %s25
    %p27 = scmp.eq.s32.totalorder %s26, 0
    %s29 = sadd.s32 %s28, 1
    %s30 = scalar_select %p27, %s28, %s29
    %p33 = pneg %p27
    %p34 = scmp.eq.s32.totalorder %s18, 1
    %p35 = por %p33, %p34
    %p36 = scmp.ne.s32.totalorder %s28, %s31
    %p37 = scmp.eq.s32.totalorder %s18, 0
    %p38 = por %p36, %p37
    %p39 = scmp.ne.s32.totalorder %s28, %s31
    %p40 = scmp.eq.s32.totalorder %s23, 1
    %p41 = por %p39, %p40
    %p42 = scmp.ne.s32.totalorder %s31, %s32
    %p43 = scmp.eq.s32.totalorder %s23, 0
    %p44 = por %p42, %p43
    %p45 = scmp.ne.s32.totalorder %s31, %s32
    %p46 = scmp.eq.s32.totalorder %s24, 1
    %p47 = por %p45, %p46
    %p49 = scmp.ne.s32.totalorder %s32, %s48
    %p50 = scmp.eq.s32.totalorder %s24, 0
    %p51 = por %p49, %p50
    %s52 = ssub.s32 %s18, %s25
    %p53 = scmp.eq.s32.totalorder %s52, 0
    %s55 = sadd.s32 %s54, 1
    %s56 = scalar_select %p53, %s54, %s55
    %p59 = pneg %p53
    %p60 = scmp.eq.s32.totalorder %s18, 1
    %p61 = por %p59, %p60
    %p62 = scmp.ne.s32.totalorder %s54, %s57
    %p63 = scmp.eq.s32.totalorder %s18, 0
    %p64 = por %p62, %p63
    %p65 = scmp.ne.s32.totalorder %s54, %s57
    %p66 = scmp.eq.s32.totalorder %s23, 1
    %p67 = por %p65, %p66
    %p68 = scmp.ne.s32.totalorder %s57, %s58
    %p69 = scmp.eq.s32.totalorder %s23, 0
    %p70 = por %p68, %p69
    %p71 = scmp.ne.s32.totalorder %s57, %s58
    %p72 = scmp.eq.s32.totalorder %s24, 1
    %p73 = por %p71, %p72
    %p75 = scmp.ne.s32.totalorder %s58, %s74
    %p76 = scmp.eq.s32.totalorder %s24, 0
    %p77 = por %p75, %p76
    %s78 = ssub.s32 %s18, %s25
    %p79 = scmp.eq.s32.totalorder %s78, 0
    %s81 = sadd.s32 %s80, 1
    %s82 = scalar_select %p79, %s80, %s81
    %p85 = pneg %p79
    %p86 = scmp.eq.s32.totalorder %s18, 1
    %p87 = por %p85, %p86
    %p88 = scmp.ne.s32.totalorder %s80, %s83
    %p89 = scmp.eq.s32.totalorder %s18, 0
    %p90 = por %p88, %p89
    %p91 = scmp.ne.s32.totalorder %s80, %s83
    %p92 = scmp.eq.s32.totalorder %s23, 1
    %p93 = por %p91, %p92
    %p94 = scmp.ne.s32.totalorder %s83, %s84
    %p95 = scmp.eq.s32.totalorder %s23, 0
    %p96 = por %p94, %p95
    %p97 = scmp.ne.s32.totalorder %s83, %s84
    %p98 = scmp.eq.s32.totalorder %s24, 1
    %p99 = por %p97, %p98
    %p101 = scmp.ne.s32.totalorder %s84, %s100
    %p102 = scmp.eq.s32.totalorder %s24, 0
    %p103 = por %p101, %p102
    %s104 = ssub.s32 %s18, %s25
    %p105 = scmp.eq.s32.totalorder %s104, 0
    %s107 = sadd.s32 %s106, 1
    %s108 = scalar_select %p105, %s106, %s107
    %p111 = pneg %p105
    %p112 = scmp.eq.s32.totalorder %s18, 1
    %p113 = por %p111, %p112
    %p114 = scmp.ne.s32.totalorder %s106, %s109
    %p115 = scmp.eq.s32.totalorder %s18, 0
    %p116 = por %p114, %p115
    %p117 = scmp.ne.s32.totalorder %s106, %s109
    %p118 = scmp.eq.s32.totalorder %s23, 1
    %p119 = por %p117, %p118
    %p120 = scmp.ne.s32.totalorder %s109, %s110
    %p121 = scmp.eq.s32.totalorder %s23, 0
    %p122 = por %p120, %p121
    %p123 = scmp.ne.s32.totalorder %s109, %s110
    %p124 = scmp.eq.s32.totalorder %s24, 1
    %p125 = por %p123, %p124
    %p127 = scmp.ne.s32.totalorder %s110, %s126
    %p128 = scmp.eq.s32.totalorder %s24, 0
    %p129 = por %p127, %p128
    %s130 = ssub.s32 %s18, %s25
    %p131 = scmp.eq.s32.totalorder %s130, 0
    %s133 = sadd.s32 %s132, 1
    %s134 = scalar_select %p131, %s132, %s133
    %p137 = pneg %p131
    %p138 = scmp.eq.s32.totalorder %s18, 1
    %p139 = por %p137, %p138
    %p140 = scmp.ne.s32.totalorder %s132, %s135
    %p141 = scmp.eq.s32.totalorder %s18, 0
    %p142 = por %p140, %p141
    %p143 = scmp.ne.s32.totalorder %s132, %s135
    %p144 = scmp.eq.s32.totalorder %s23, 1
    %p145 = por %p143, %p144
    %p146 = scmp.ne.s32.totalorder %s135, %s136
    %p147 = scmp.eq.s32.totalorder %s23, 0
    %p148 = por %p146, %p147
    %p149 = scmp.ne.s32.totalorder %s135, %s136
    %p150 = scmp.eq.s32.totalorder %s24, 1
    %p151 = por %p149, %p150
    %p153 = scmp.ne.s32.totalorder %s136, %s152
    %p154 = scmp.eq.s32.totalorder %s24, 0
    %p155 = por %p153, %p154
    %s156 = ssub.s32 %s18, %s25
    %p157 = scmp.eq.s32.totalorder %s156, 0
    %s159 = sadd.s32 %s158, 1
    %s160 = scalar_select %p157, %s158, %s159
    %p163 = pneg %p157
    %p164 = scmp.eq.s32.totalorder %s18, 1
    %p165 = por %p163, %p164
    %p166 = scmp.ne.s32.totalorder %s158, %s161
    %p167 = scmp.eq.s32.totalorder %s18, 0
    %p168 = por %p166, %p167
    %p169 = scmp.ne.s32.totalorder %s158, %s161
    %p170 = scmp.eq.s32.totalorder %s23, 1
    %p171 = por %p169, %p170
    %p172 = scmp.ne.s32.totalorder %s161, %s162
    %p173 = scmp.eq.s32.totalorder %s23, 0
    %p174 = por %p172, %p173
    %p175 = scmp.ne.s32.totalorder %s161, %s162
    %p176 = scmp.eq.s32.totalorder %s24, 1
    %p177 = por %p175, %p176
    %p179 = scmp.ne.s32.totalorder %s162, %s178
    %p180 = scmp.eq.s32.totalorder %s24, 0
    %p181 = por %p179, %p180
    %s182 = ssub.s32 %s18, %s25
    %p183 = scmp.eq.s32.totalorder %s182, 0
    %s185 = sadd.s32 %s184, 1
    %s186 = scalar_select %p183, %s184, %s185
    %p189 = pneg %p183
    %p190 = scmp.eq.s32.totalorder %s18, 1
    %p191 = por %p189, %p190
    %p192 = scmp.ne.s32.totalorder %s184, %s187
    %p193 = scmp.eq.s32.totalorder %s18, 0
    %p194 = por %p192, %p193
    %p195 = scmp.ne.s32.totalorder %s184, %s187
    %p196 = scmp.eq.s32.totalorder %s23, 1
    %p197 = por %p195, %p196
    %p198 = scmp.ne.s32.totalorder %s187, %s188
    %p199 = scmp.eq.s32.totalorder %s23, 0
    %p200 = por %p198, %p199
    %p201 = scmp.ne.s32.totalorder %s187, %s188
    %p202 = scmp.eq.s32.totalorder %s24, 1
    %p203 = por %p201, %p202
    %p205 = scmp.ne.s32.totalorder %s188, %s204
    %p206 = scmp.eq.s32.totalorder %s24, 0
    %p207 = por %p205, %p206
    %s208 = ssub.s32 %s18, %s25
    %p209 = scmp.eq.s32.totalorder %s208, 0
    %s211 = sadd.s32 %s210, 1
    %s212 = scalar_select %p209, %s210, %s211
    %p215 = pneg %p209
    %p216 = scmp.eq.s32.totalorder %s18, 1
    %p217 = por %p215, %p216
    %p218 = scmp.ne.s32.totalorder %s210, %s213
    %p219 = scmp.eq.s32.totalorder %s18, 0
    %p220 = por %p218, %p219
    %p221 = scmp.ne.s32.totalorder %s210, %s213
    %p222 = scmp.eq.s32.totalorder %s23, 1
    %p223 = por %p221, %p222
    %p224 = scmp.ne.s32.totalorder %s213, %s214
    %p225 = scmp.eq.s32.totalorder %s23, 0
    %p226 = por %p224, %p225
    %p227 = scmp.ne.s32.totalorder %s213, %s214
    %p228 = scmp.eq.s32.totalorder %s24, 1
    %p229 = por %p227, %p228
    %p231 = scmp.ne.s32.totalorder %s214, %s230
    %p232 = scmp.eq.s32.totalorder %s24, 0
    %p233 = por %p231, %p232
    %s234 = ssub.s32 %s18, %s25
    %p235 = scmp.eq.s32.totalorder %s234, 0
    %s237 = sadd.s32 %s236, 1
    %s238 = scalar_select %p235, %s236, %s237
    %p241 = pneg %p235
    %p242 = scmp.eq.s32.totalorder %s18, 1
    %p243 = por %p241, %p242
    %p244 = scmp.ne.s32.totalorder %s236, %s239
    %p245 = scmp.eq.s32.totalorder %s18, 0
    %p246 = por %p244, %p245
    %p247 = scmp.ne.s32.totalorder %s236, %s239
    %p248 = scmp.eq.s32.totalorder %s23, 1
    %p249 = por %p247, %p248
    %p250 = scmp.ne.s32.totalorder %s239, %s240
    %p251 = scmp.eq.s32.totalorder %s23, 0
    %p252 = por %p250, %p251
    %p253 = scmp.ne.s32.totalorder %s239, %s240
    %p254 = scmp.eq.s32.totalorder %s24, 1
    %p255 = por %p253, %p254
    %p257 = scmp.ne.s32.totalorder %s240, %s256
    %p258 = scmp.eq.s32.totalorder %s24, 0
    %p259 = por %p257, %p258
    %s260 = ssub.s32 %s18, %s25
    %p261 = scmp.eq.s32.totalorder %s260, 0
    %s263 = sadd.s32 %s262, 1
    %s264 = scalar_select %p261, %s262, %s263
    %p267 = pneg %p261
    %p268 = scmp.eq.s32.totalorder %s18, 1
    %p269 = por %p267, %p268
    %p270 = scmp.ne.s32.totalorder %s262, %s265
    %p271 = scmp.eq.s32.totalorder %s18, 0
    %p272 = por %p270, %p271
    %p273 = scmp.ne.s32.totalorder %s262, %s265
    %p274 = scmp.eq.s32.totalorder %s23, 1
    %p275 = por %p273, %p274
    %p276 = scmp.ne.s32.totalorder %s265, %s266
    %p277 = scmp.eq.s32.totalorder %s23, 0
    %p278 = por %p276, %p277
    %p279 = scmp.ne.s32.totalorder %s265, %s266
    %p280 = scmp.eq.s32.totalorder %s24, 1
    %p281 = por %p279, %p280
    %p283 = scmp.ne.s32.totalorder %s266, %s282
    %p284 = scmp.eq.s32.totalorder %s24, 0
    %p285 = por %p283, %p284
    %s286 = ssub.s32 %s18, %s25
    %p287 = scmp.eq.s32.totalorder %s286, 0
    %s289 = sadd.s32 %s288, 1
    %s290 = scalar_select %p287, %s288, %s289
    %p293 = pneg %p287
    %p294 = scmp.eq.s32.totalorder %s18, 1
    %p295 = por %p293, %p294
    %p296 = scmp.ne.s32.totalorder %s288, %s291
    %p297 = scmp.eq.s32.totalorder %s18, 0
    %p298 = por %p296, %p297
    %p299 = scmp.ne.s32.totalorder %s288, %s291
    %p300 = scmp.eq.s32.totalorder %s23, 1
    %p301 = por %p299, %p300
    %p302 = scmp.ne.s32.totalorder %s291, %s292
    %p303 = scmp.eq.s32.totalorder %s23, 0
    %p304 = por %p302, %p303
    %p305 = scmp.ne.s32.totalorder %s291, %s292
    %p306 = scmp.eq.s32.totalorder %s24, 1
    %p307 = por %p305, %p306
    %p309 = scmp.ne.s32.totalorder %s292, %s308
    %p310 = scmp.eq.s32.totalorder %s24, 0
    %p311 = por %p309, %p310
    %s312 = ssub.s32 %s18, %s25
    %p313 = scmp.eq.s32.totalorder %s312, 0
    %s315 = sadd.s32 %s314, 1
    %s316 = scalar_select %p313, %s314, %s315
    %p319 = pneg %p313
    %p320 = scmp.eq.s32.totalorder %s18, 1
    %p321 = por %p319, %p320
    %p322 = scmp.ne.s32.totalorder %s314, %s317
    %p323 = scmp.eq.s32.totalorder %s18, 0
    %p324 = por %p322, %p323
    %p325 = scmp.ne.s32.totalorder %s314, %s317
    %p326 = scmp.eq.s32.totalorder %s23, 1
    %p327 = por %p325, %p326
    %p328 = scmp.ne.s32.totalorder %s317, %s318
    %p329 = scmp.eq.s32.totalorder %s23, 0
    %p330 = por %p328, %p329
    %p331 = scmp.ne.s32.totalorder %s317, %s318
    %p332 = scmp.eq.s32.totalorder %s24, 1
    %p333 = por %p331, %p332
    %p335 = scmp.ne.s32.totalorder %s318, %s334
    %p336 = scmp.eq.s32.totalorder %s24, 0
    %p337 = por %p335, %p336
    %p338 = scmp.le.s32.totalorder 1, %s18
    %p339 = scmp.lt.s32.totalorder %s18, 3
    %p340 = pnand %p338, %p339
    %p341 = pneg %p340
    // Predicated region
    $region9: #{forward.3} parent=5 // pred_check
      _
    $region10: #{forward.3} parent=5 // pred_check_branch
      %343 = sbr.rel (%p340) target = $region12
    $region11: #{forward.3} parent=5 // pred_region
      %s344 = ssub.s32 %s18, 1
    $region12: #{forward.3} parent=5 // pred_fallthru
      _
    %p345 = scmp.lt.s32.totalorder %s18, 2
    // Predicated region
    $region13: #{forward.3} parent=5 // pred_check
      %p346 = pneg %p345
    $region14: #{forward.3} parent=5 // pred_check_branch
      %348 = sbr.rel (%p346) target = $region16
    $region15: #{forward.3} parent=5 // pred_region
      // Predicated region
      $region17: #{forward.3} parent=15 // pred_check
        %p349 = pneg %p38
      $region18: #{forward.3} parent=15 // pred_check_branch
        %351 = sbr.rel (%p349) target = $region20
      $region19: #{forward.3} parent=15 // pred_region
        %p352 = scmp.lt.s32.totalorder %s18, 1
        %s353 = scalar_select %p352, %s18, 1
        %s354 = smul.addr %s353, 16
        %s355 = smul.addr %s354, 8
        %s356 = scalar_lea.vmem %s0, %s355
      $region20: #{forward.3} parent=15 // pred_fallthru
        _
      // Predicated region
      $region21: #{forward.3} parent=15 // pred_check
        %p357 = pneg %p64
      $region22: #{forward.3} parent=15 // pred_check_branch
        %359 = sbr.rel (%p357) target = $region24
      $region23: #{forward.3} parent=15 // pred_region
        %p360 = scmp.lt.s32.totalorder %s18, 1
        %s361 = scalar_select %p360, %s18, 1
        %s362 = smul.addr %s361, 4
        %s363 = smul.addr %s362, 8
        %s364 = scalar_lea.vmem %s1, %s363
      $region24: #{forward.3} parent=15 // pred_fallthru
        _
      // Predicated region
      $region25: #{forward.3} parent=15 // pred_check
        %p365 = pneg %p90
      $region26: #{forward.3} parent=15 // pred_check_branch
        %367 = sbr.rel (%p365) target = $region28
      $region27: #{forward.3} parent=15 // pred_region
        %p368 = scmp.lt.s32.totalorder %s18, 1
        %s369 = scalar_select %p368, %s18, 1
        %s370 = smul.addr %s369, 16
        %s371 = smul.addr %s370, 8
        %s372 = scalar_lea.vmem %s2, %s371
      $region28: #{forward.3} parent=15 // pred_fallthru
        _
      // Predicated region
      $region29: #{forward.3} parent=15 // pred_check
        %p373 = pneg %p116
      $region30: #{forward.3} parent=15 // pred_check_branch
        %375 = sbr.rel (%p373) target = $region32
      $region31: #{forward.3} parent=15 // pred_region
        %p376 = scmp.lt.s32.totalorder %s18, 1
        %s377 = scalar_select %p376, %s18, 1
        %s378 = smul.addr %s377, 4
        %s379 = smul.addr %s378, 8
        %s380 = scalar_lea.vmem %s3, %s379
      $region32: #{forward.3} parent=15 // pred_fallthru
        _
      // Predicated region
      $region33: #{forward.3} parent=15 // pred_check
        %p381 = pneg %p142
      $region34: #{forward.3} parent=15 // pred_check_branch
        %383 = sbr.rel (%p381) target = $region36
      $region35: #{forward.3} parent=15 // pred_region
        %p384 = scmp.lt.s32.totalorder %s18, 1
        %s385 = scalar_select %p384, %s18, 1
        %s386 = smul.addr %s385, 4
        %s387 = smul.addr %s386, 8
        %s388 = scalar_lea.vmem %s4, %s387
      $region36: #{forward.3} parent=15 // pred_fallthru
        _
      // Predicated region
      $region37: #{forward.3} parent=15 // pred_check
        %p389 = pneg %p168
      $region38: #{forward.3} parent=15 // pred_check_branch
        %391 = sbr.rel (%p389) target = $region40
      $region39: #{forward.3} parent=15 // pred_region
        %p392 = scmp.lt.s32.totalorder %s18, 1
        %s393 = scalar_select %p392, %s18, 1
        %s394 = smul.addr %s393, 16
        %s395 = smul.addr %s394, 8
        %s396 = scalar_lea.vmem %s5, %s395
      $region40: #{forward.3} parent=15 // pred_fallthru
        _
      // Predicated region
      $region41: #{forward.3} parent=15 // pred_check
        %p397 = pneg %p194
      $region42: #{forward.3} parent=15 // pred_check_branch
        %399 = sbr.rel (%p397) target = $region44
      $region43: #{forward.3} parent=15 // pred_region
        %p400 = scmp.lt.s32.totalorder %s18, 1
        %s401 = scalar_select %p400, %s18, 1
        %s402 = smul.addr %s401, 16
        %s403 = smul.addr %s402, 4
        %s404 = scalar_lea.vmem %s6, %s403
      $region44: #{forward.3} parent=15 // pred_fallthru
        _
      // Predicated region
      $region45: #{forward.3} parent=15 // pred_check
        %p405 = pneg %p220
      $region46: #{forward.3} parent=15 // pred_check_branch
        %407 = sbr.rel (%p405) target = $region48
      $region47: #{forward.3} parent=15 // pred_region
        %p408 = scmp.lt.s32.totalorder %s18, 1
        %s409 = scalar_select %p408, %s18, 1
        %s410 = smul.addr %s409, 16
        %s411 = smul.addr %s410, 4
        %s412 = scalar_lea.vmem %s7, %s411
      $region48: #{forward.3} parent=15 // pred_fallthru
        _
      // Predicated region
      $region49: #{forward.3} parent=15 // pred_check
        %p413 = pneg %p246
      $region50: #{forward.3} parent=15 // pred_check_branch
        %415 = sbr.rel (%p413) target = $region52
      $region51: #{forward.3} parent=15 // pred_region
        %p416 = scmp.lt.s32.totalorder %s18, 1
        %s417 = scalar_select %p416, %s18, 1
        %s418 = smul.addr %s417, 2
        %s419 = scalar_lea.vmem %s8, %s418
      $region52: #{forward.3} parent=15 // pred_fallthru
        _
      // Predicated region
      $region53: #{forward.3} parent=15 // pred_check
        %p420 = pneg %p272
      $region54: #{forward.3} parent=15 // pred_check_branch
        %422 = sbr.rel (%p420) target = $region56
      $region55: #{forward.3} parent=15 // pred_region
        %p423 = scmp.lt.s32.totalorder %s18, 1
        %s424 = scalar_select %p423, %s18, 1
        %s425 = smul.addr %s424, 2
        %s426 = scalar_lea.vmem %s9, %s425
      $region56: #{forward.3} parent=15 // pred_fallthru
        _
    $region16: #{forward.3} parent=5 // pred_fallthru
      _
    %p427 = scmp.le.s32.totalorder 1, %s18
    %p428 = scmp.lt.s32.totalorder %s18, 3
    %p429 = pnand %p427, %p428
    %p430 = pneg %p429
    // Predicated region
    $region57: #{forward.3} parent=5 // pred_check
      _
    $region58: #{forward.3} parent=5 // pred_check_branch
      %432 = sbr.rel (%p429) target = $region60
    $region59: #{forward.3} parent=5 // pred_region
      %s433 = ssub.s32 %s18, 1
      %p434 = scmp.lt.s32.totalorder %s23, 1
      %s435 = scalar_select %p434, %s23, 1
      %s436 = smul.addr %s435, 16
      %s437 = smul.addr %s436, 8
      %s438 = scalar_lea.vmem %s0, %s437
      %p439 = pneg %p44
      %p440 = pneg %p41
      %p441 = scmp.lt.s32.totalorder %s23, 1
      %s442 = scalar_select %p441, %s23, 1
      %s443 = smul.addr %s442, 4
      %s444 = smul.addr %s443, 8
      %s445 = scalar_lea.vmem %s1, %s444
      %p446 = pneg %p70
      %p447 = pneg %p67
      %p448 = scmp.lt.s32.totalorder %s23, 1
      %s449 = scalar_select %p448, %s23, 1
      %s450 = smul.addr %s449, 16
      %s451 = smul.addr %s450, 8
      %s452 = scalar_lea.vmem %s2, %s451
      %p453 = pneg %p96
      %p454 = pneg %p93
      %p455 = scmp.lt.s32.totalorder %s23, 1
      %s456 = scalar_select %p455, %s23, 1
      %s457 = smul.addr %s456, 4
      %s458 = smul.addr %s457, 8
      %s459 = scalar_lea.vmem %s3, %s458
      %p460 = pneg %p122
      %p461 = pneg %p119
      %p462 = scmp.lt.s32.totalorder %s23, 1
      %s463 = scalar_select %p462, %s23, 1
      %s464 = smul.addr %s463, 4
      %s465 = smul.addr %s464, 8
      %s466 = scalar_lea.vmem %s4, %s465
      %p467 = pneg %p148
      %p468 = pneg %p145
      %p469 = scmp.lt.s32.totalorder %s23, 1
      %s470 = scalar_select %p469, %s23, 1
      %s471 = smul.addr %s470, 16
      %s472 = smul.addr %s471, 8
      %s473 = scalar_lea.vmem %s5, %s472
      %p474 = pneg %p174
      %p475 = pneg %p171
      %p476 = scmp.lt.s32.totalorder %s23, 1
      %s477 = scalar_select %p476, %s23, 1
      %s478 = smul.addr %s477, 16
      %s479 = smul.addr %s478, 4
      %s480 = scalar_lea.vmem %s6, %s479
      %p481 = pneg %p200
      %p482 = pneg %p197
      %p483 = scmp.lt.s32.totalorder %s23, 1
      %s484 = scalar_select %p483, %s23, 1
      %s485 = smul.addr %s484, 16
      %s486 = smul.addr %s485, 4
      %s487 = scalar_lea.vmem %s7, %s486
      %p488 = pneg %p226
      %p489 = pneg %p223
      %p490 = scmp.lt.s32.totalorder %s23, 1
      %s491 = scalar_select %p490, %s23, 1
      %s492 = smul.addr %s491, 2
      %s493 = scalar_lea.vmem %s8, %s492
      %p494 = pneg %p252
      %p495 = pneg %p249
      %p496 = scmp.lt.s32.totalorder %s23, 1
      %s497 = scalar_select %p496, %s23, 1
      %s498 = smul.addr %s497, 2
      %s499 = scalar_lea.vmem %s9, %s498
      %p500 = pneg %p278
      %p501 = pneg %p275
      %p502 = pneg %p304
      %p503 = pneg %p301
      %p504 = scmp.lt.s32.totalorder %s23, 1
      %s505 = scalar_select %p504, %s23, 1
      %s506 = smul.addr %s505, 16
      %s507 = smul.addr %s506, 8
      %s508 = scalar_lea.vmem %s10, %s507
      %p509 = pneg %p330
      %p510 = pneg %p327
      %p511 = scmp.lt.s32.totalorder %s23, 1
      %s512 = scalar_select %p511, %s23, 1
      %s513 = smul.addr %s512, 4
      %s514 = smul.addr %s513, 8
      %s515 = scalar_lea.vmem %s11, %s514
      %p516 = scmp.lt.s32.totalorder %s23, 1
      %s517 = scalar_select %p516, %s23, 1
      %s518 = smul.addr %s517, 16
      %s519 = smul.addr %s518, 8
      %s520 = scalar_lea.vmem %s0, %s519
      %p521 = scmp.lt.s32.totalorder %s23, 1
      %s522 = scalar_select %p521, %s23, 1
      %s523 = smul.addr %s522, 4
      %s524 = smul.addr %s523, 8
      %s525 = scalar_lea.vmem %s1, %s524
      %p526 = scmp.lt.s32.totalorder %s23, 1
      %s527 = scalar_select %p526, %s23, 1
      %s528 = smul.addr %s527, 16
      %s529 = smul.addr %s528, 8
      %s530 = scalar_lea.vmem %s2, %s529
      %p531 = scmp.lt.s32.totalorder %s23, 1
      %s532 = scalar_select %p531, %s23, 1
      %s533 = smul.addr %s532, 4
      %s534 = smul.addr %s533, 8
      %s535 = scalar_lea.vmem %s3, %s534
      %p536 = scmp.lt.s32.totalorder %s23, 1
      %s537 = scalar_select %p536, %s23, 1
      %s538 = smul.addr %s537, 4
      %s539 = smul.addr %s538, 8
      %s540 = scalar_lea.vmem %s4, %s539
      %p541 = scmp.lt.s32.totalorder %s23, 1
      %s542 = scalar_select %p541, %s23, 1
      %s543 = smul.addr %s542, 16
      %s544 = smul.addr %s543, 8
      %s545 = scalar_lea.vmem %s5, %s544
      %p546 = scmp.lt.s32.totalorder %s23, 1
      %s547 = scalar_select %p546, %s23, 1
      %s548 = smul.addr %s547, 16
      %s549 = smul.addr %s548, 4
      %s550 = scalar_lea.vmem %s6, %s549
      %p551 = scmp.lt.s32.totalorder %s23, 1
      %s552 = scalar_select %p551, %s23, 1
      %s553 = smul.addr %s552, 16
      %s554 = smul.addr %s553, 4
      %s555 = scalar_lea.vmem %s7, %s554
      %p556 = scmp.lt.s32.totalorder %s23, 1
      %s557 = scalar_select %p556, %s23, 1
      %s558 = smul.addr %s557, 2
      %s559 = scalar_lea.vmem %s8, %s558
      %p560 = scmp.lt.s32.totalorder %s23, 1
      %s561 = scalar_select %p560, %s23, 1
      %s562 = smul.addr %s561, 2
      %s563 = scalar_lea.vmem %s9, %s562
      %p564 = scmp.lt.s32.totalorder %s23, 1
      %s565 = scalar_select %p564, %s23, 1
      %s566 = smul.addr %s565, 16
      %s567 = smul.addr %s566, 8
      %s568 = scalar_lea.vmem %s10, %s567
      %p569 = scmp.lt.s32.totalorder %s23, 1
      %s570 = scalar_select %p569, %s23, 1
      %s571 = smul.addr %s570, 4
      %s572 = smul.addr %s571, 8
      %s573 = scalar_lea.vmem %s11, %s572
      %p575 = scmp.eq.s32.totalorder %s23, 0
      %s576 = scalar_select %p575, 16, 64
      %s577 = scalar_select %p575, 4, 16
      %v578 = vld [vmem:[%s520] sm:$0xff]
      %v579 = vld [vmem:[%s520 + $0x8] sm:$0xff]
      %v580 = vld [vmem:[%s520 + $0x10] sm:$0xff]
      %v581 = vld [vmem:[%s520 + $0x18] sm:$0xff]
      %v582 = vld [vmem:[%s520 + $0x20] sm:$0xff]
      %v583 = vld [vmem:[%s520 + $0x28] sm:$0xff]
      %v584 = vld [vmem:[%s520 + $0x30] sm:$0xff]
      %v585 = vld [vmem:[%s520 + $0x38] sm:$0xff]
      %v586 = vld [vmem:[%s520 + $0x40] sm:$0xff]
      %v587 = vld [vmem:[%s520 + $0x48] sm:$0xff]
      %v588 = vld [vmem:[%s520 + $0x50] sm:$0xff]
      %v589 = vld [vmem:[%s520 + $0x58] sm:$0xff]
      %v590 = vld [vmem:[%s520 + $0x60] sm:$0xff]
      %v591 = vld [vmem:[%s520 + $0x68] sm:$0xff]
      %v592 = vld [vmem:[%s520 + $0x70] sm:$0xff]
      %v593 = vld [vmem:[%s520 + $0x78] sm:$0xff]
      %v594 = vld [vmem:[%s525] sm:$0xff]
      %v595 = vld [vmem:[%s525 + $0x8] sm:$0xff]
      %v596 = vld [vmem:[%s525 + $0x10] sm:$0xff]
      %v597 = vld [vmem:[%s525 + $0x18] sm:$0xff]
      %v598 = vpack.c.bf16 %v579, %v578
      %v599 = vpack.c.bf16 %v581, %v580
      %v600 = vpack.c.bf16 %v583, %v582
      %v601 = vpack.c.bf16 %v585, %v584
      %v602 = vpack.c.bf16 %v587, %v586
      %v603 = vpack.c.bf16 %v589, %v588
      %v604 = vpack.c.bf16 %v591, %v590
      %v605 = vpack.c.bf16 %v593, %v592
      %v606 = vpack.c.bf16 %v595, %v594
      %v607 = vpack.c.bf16 %v597, %v596
      %v608 = vlaneseq
      %v609 = vshrl.u32 %v608, 7
      %v610 = vadd.s32 %v609, 8
      %v611 = vadd.s32 %v609, 16
      %v612 = vadd.s32 %v609, 24
      %v613 = vadd.s32 %v609, 32
      %v614 = vadd.s32 %v609, 40
      %v615 = vadd.s32 %v609, 48
      %v616 = vadd.s32 %v609, 56
      %v617 = vadd.s32 %v609, 64
      %v618 = vadd.s32 %v609, 72
      %v619 = vadd.s32 %v609, 80
      %v620 = vadd.s32 %v609, 88
      %v621 = vadd.s32 %v609, 96
      %v622 = vadd.s32 %v609, 104
      %v623 = vadd.s32 %v609, 112
      %v624 = vadd.s32 %v609, 120
      %v625 = vlaneseq
      %v626 = vand.u32 %v625, 127
      %vm627 = vcmp.ge.s32.totalorder %v609, 0
      %vm628 = vcmp.ge.s32.totalorder %v610, 0
      %vm629 = vcmp.ge.s32.totalorder %v611, 0
      %vm630 = vcmp.ge.s32.totalorder %v612, 0
      %vm631 = vcmp.ge.s32.totalorder %v613, 0
      %vm632 = vcmp.ge.s32.totalorder %v614, 0
      %vm633 = vcmp.ge.s32.totalorder %v615, 0
      %vm634 = vcmp.ge.s32.totalorder %v616, 0
      %vm635 = vcmp.ge.s32.totalorder %v617, 0
      %vm636 = vcmp.ge.s32.totalorder %v618, 0
      %vm637 = vcmp.ge.s32.totalorder %v619, 0
      %vm638 = vcmp.ge.s32.totalorder %v620, 0
      %vm639 = vcmp.ge.s32.totalorder %v621, 0
      %vm640 = vcmp.ge.s32.totalorder %v622, 0
      %vm641 = vcmp.ge.s32.totalorder %v623, 0
      %vm642 = vcmp.ge.s32.totalorder %v624, 0
      %vm643 = vcmp.lt.s32.totalorder %v609, 64
      %vm644 = vcmp.lt.s32.totalorder %v610, 64
      %vm645 = vcmp.lt.s32.totalorder %v611, 64
      %vm646 = vcmp.lt.s32.totalorder %v612, 64
      %vm647 = vcmp.lt.s32.totalorder %v613, 64
      %vm648 = vcmp.lt.s32.totalorder %v614, 64
      %vm649 = vcmp.lt.s32.totalorder %v615, 64
      %vm650 = vcmp.lt.s32.totalorder %v616, 64
      %vm651 = vcmp.lt.s32.totalorder %v617, 64
      %vm652 = vcmp.lt.s32.totalorder %v618, 64
      %vm653 = vcmp.lt.s32.totalorder %v619, 64
      %vm654 = vcmp.lt.s32.totalorder %v620, 64
      %vm655 = vcmp.lt.s32.totalorder %v621, 64
      %vm656 = vcmp.lt.s32.totalorder %v622, 64
      %vm657 = vcmp.lt.s32.totalorder %v623, 64
      %vm658 = vcmp.lt.s32.totalorder %v624, 64
      %vm659 = vmand %vm627, %vm643
      %vm660 = vmand %vm628, %vm644
      %vm661 = vmand %vm629, %vm645
      %vm662 = vmand %vm630, %vm646
      %vm663 = vmand %vm631, %vm647
      %vm664 = vmand %vm632, %vm648
      %vm665 = vmand %vm633, %vm649
      %vm666 = vmand %vm634, %vm650
      %vm667 = vmand %vm635, %vm651
      %vm668 = vmand %vm636, %vm652
      %vm669 = vmand %vm637, %vm653
      %vm670 = vmand %vm638, %vm654
      %vm671 = vmand %vm639, %vm655
      %vm672 = vmand %vm640, %vm656
      %vm673 = vmand %vm641, %vm657
      %vm674 = vmand %vm642, %vm658
      %vm675 = vcmp.ge.s32.totalorder %v626, 0
      %vm676 = vmand %vm659, %vm675
      %vm677 = vmand %vm660, %vm675
      %vm678 = vmand %vm661, %vm675
      %vm679 = vmand %vm662, %vm675
      %vm680 = vmand %vm663, %vm675
      %vm681 = vmand %vm664, %vm675
      %vm682 = vmand %vm665, %vm675
      %vm683 = vmand %vm666, %vm675
      %vm684 = vmand %vm667, %vm675
      %vm685 = vmand %vm668, %vm675
      %vm686 = vmand %vm669, %vm675
      %vm687 = vmand %vm670, %vm675
      %vm688 = vmand %vm671, %vm675
      %vm689 = vmand %vm672, %vm675
      %vm690 = vmand %vm673, %vm675
      %vm691 = vmand %vm674, %vm675
      %v692 = vstv %s577
      %vm693 = vcmp.lt.s32.totalorder %v626, %v692
      %vm694 = vmand %vm676, %vm693
      %vm695 = vmand %vm677, %vm693
      %vm696 = vmand %vm678, %vm693
      %vm697 = vmand %vm679, %vm693
      %vm698 = vmand %vm680, %vm693
      %vm699 = vmand %vm681, %vm693
      %vm700 = vmand %vm682, %vm693
      %vm701 = vmand %vm683, %vm693
      %vm702 = vmand %vm684, %vm693
      %vm703 = vmand %vm685, %vm693
      %vm704 = vmand %vm686, %vm693
      %vm705 = vmand %vm687, %vm693
      %vm706 = vmand %vm688, %vm693
      %vm707 = vmand %vm689, %vm693
      %vm708 = vmand %vm690, %vm693
      %vm709 = vmand %vm691, %vm693
      %vm710 = vcmp.ge.s32.totalorder %v609, 64
      %vm711 = vcmp.ge.s32.totalorder %v610, 64
      %vm712 = vcmp.ge.s32.totalorder %v611, 64
      %vm713 = vcmp.ge.s32.totalorder %v612, 64
      %vm714 = vcmp.ge.s32.totalorder %v613, 64
      %vm715 = vcmp.ge.s32.totalorder %v614, 64
      %vm716 = vcmp.ge.s32.totalorder %v615, 64
      %vm717 = vcmp.ge.s32.totalorder %v616, 64
      %vm718 = vcmp.ge.s32.totalorder %v617, 64
      %vm719 = vcmp.ge.s32.totalorder %v618, 64
      %vm720 = vcmp.ge.s32.totalorder %v619, 64
      %vm721 = vcmp.ge.s32.totalorder %v620, 64
      %vm722 = vcmp.ge.s32.totalorder %v621, 64
      %vm723 = vcmp.ge.s32.totalorder %v622, 64
      %vm724 = vcmp.ge.s32.totalorder %v623, 64
      %vm725 = vcmp.ge.s32.totalorder %v624, 64
      %vm726 = vcmp.lt.s32.totalorder %v609, 128
      %vm727 = vcmp.lt.s32.totalorder %v610, 128
      %vm728 = vcmp.lt.s32.totalorder %v611, 128
      %vm729 = vcmp.lt.s32.totalorder %v612, 128
      %vm730 = vcmp.lt.s32.totalorder %v613, 128
      %vm731 = vcmp.lt.s32.totalorder %v614, 128
      %vm732 = vcmp.lt.s32.totalorder %v615, 128
      %vm733 = vcmp.lt.s32.totalorder %v616, 128
      %vm734 = vcmp.lt.s32.totalorder %v617, 128
      %vm735 = vcmp.lt.s32.totalorder %v618, 128
      %vm736 = vcmp.lt.s32.totalorder %v619, 128
      %vm737 = vcmp.lt.s32.totalorder %v620, 128
      %vm738 = vcmp.lt.s32.totalorder %v621, 128
      %vm739 = vcmp.lt.s32.totalorder %v622, 128
      %vm740 = vcmp.lt.s32.totalorder %v623, 128
      %vm741 = vcmp.lt.s32.totalorder %v624, 128
      %vm742 = vmand %vm710, %vm726
      %vm743 = vmand %vm711, %vm727
      %vm744 = vmand %vm712, %vm728
      %vm745 = vmand %vm713, %vm729
      %vm746 = vmand %vm714, %vm730
      %vm747 = vmand %vm715, %vm731
      %vm748 = vmand %vm716, %vm732
      %vm749 = vmand %vm717, %vm733
      %vm750 = vmand %vm718, %vm734
      %vm751 = vmand %vm719, %vm735
      %vm752 = vmand %vm720, %vm736
      %vm753 = vmand %vm721, %vm737
      %vm754 = vmand %vm722, %vm738
      %vm755 = vmand %vm723, %vm739
      %vm756 = vmand %vm724, %vm740
      %vm757 = vmand %vm725, %vm741
      %vm758 = vcmp.ge.s32.totalorder %v626, 16
      %vm759 = vmand %vm742, %vm758
      %vm760 = vmand %vm743, %vm758
      %vm761 = vmand %vm744, %vm758
      %vm762 = vmand %vm745, %vm758
      %vm763 = vmand %vm746, %vm758
      %vm764 = vmand %vm747, %vm758
      %vm765 = vmand %vm748, %vm758
      %vm766 = vmand %vm749, %vm758
      %vm767 = vmand %vm750, %vm758
      %vm768 = vmand %vm751, %vm758
      %vm769 = vmand %vm752, %vm758
      %vm770 = vmand %vm753, %vm758
      %vm771 = vmand %vm754, %vm758
      %vm772 = vmand %vm755, %vm758
      %vm773 = vmand %vm756, %vm758
      %vm774 = vmand %vm757, %vm758
      %s775 = sadd.s32 %s577, 16
      %v776 = vstv %s775
      %vm777 = vcmp.lt.s32.totalorder %v626, %v776
      %vm778 = vmand %vm759, %vm777
      %vm779 = vmand %vm760, %vm777
      %vm780 = vmand %vm761, %vm777
      %vm781 = vmand %vm762, %vm777
      %vm782 = vmand %vm763, %vm777
      %vm783 = vmand %vm764, %vm777
      %vm784 = vmand %vm765, %vm777
      %vm785 = vmand %vm766, %vm777
      %vm786 = vmand %vm767, %vm777
      %vm787 = vmand %vm768, %vm777
      %vm788 = vmand %vm769, %vm777
      %vm789 = vmand %vm770, %vm777
      %vm790 = vmand %vm771, %vm777
      %vm791 = vmand %vm772, %vm777
      %vm792 = vmand %vm773, %vm777
      %vm793 = vmand %vm774, %vm777
      %vm794 = vmor %vm694, %vm778
      %vm795 = vmor %vm695, %vm779
      %vm796 = vmor %vm696, %vm780
      %vm797 = vmor %vm697, %vm781
      %vm798 = vmor %vm698, %vm782
      %vm799 = vmor %vm699, %vm783
      %vm800 = vmor %vm700, %vm784
      %vm801 = vmor %vm701, %vm785
      %vm802 = vmor %vm702, %vm786
      %vm803 = vmor %vm703, %vm787
      %vm804 = vmor %vm704, %vm788
      %vm805 = vmor %vm705, %vm789
      %vm806 = vmor %vm706, %vm790
      %vm807 = vmor %vm707, %vm791
      %vm808 = vmor %vm708, %vm792
      %vm809 = vmor %vm709, %vm793
      %v810 = vsel %vm794, 0.0, -1e+30
      %v811 = vsel %vm795, 0.0, -1e+30
      %v812 = vsel %vm796, 0.0, -1e+30
      %v813 = vsel %vm797, 0.0, -1e+30
      %v814 = vsel %vm798, 0.0, -1e+30
      %v815 = vsel %vm799, 0.0, -1e+30
      %v816 = vsel %vm800, 0.0, -1e+30
      %v817 = vsel %vm801, 0.0, -1e+30
      %v818 = vsel %vm802, 0.0, -1e+30
      %v819 = vsel %vm803, 0.0, -1e+30
      %v820 = vsel %vm804, 0.0, -1e+30
      %v821 = vsel %vm805, 0.0, -1e+30
      %v822 = vsel %vm806, 0.0, -1e+30
      %v823 = vsel %vm807, 0.0, -1e+30
      %v824 = vsel %vm808, 0.0, -1e+30
      %v825 = vsel %vm809, 0.0, -1e+30
      %vm826 = vcmp.lt.s32.totalorder %v609, 16
      %vm827 = vcmp.lt.s32.totalorder %v610, 16
      %vm828 = vcmp.lt.s32.totalorder %v611, 16
      %vm829 = vcmp.lt.s32.totalorder %v612, 16
      %vm830 = vmand %vm627, %vm826
      %vm831 = vmand %vm628, %vm827
      %vm832 = vmand %vm629, %vm828
      %vm833 = vmand %vm630, %vm829
      %vm834 = vmand %vm830, %vm675
      %vm835 = vmand %vm831, %vm675
      %vm836 = vmand %vm832, %vm675
      %vm837 = vmand %vm833, %vm675
      %v838 = vstv %s576
      %vm839 = vcmp.lt.s32.totalorder %v626, %v838
      %vm840 = vmand %vm834, %vm839
      %vm841 = vmand %vm835, %vm839
      %vm842 = vmand %vm836, %vm839
      %vm843 = vmand %vm837, %vm839
      %vm844 = vcmp.ge.s32.totalorder %v609, 16
      %vm845 = vcmp.ge.s32.totalorder %v610, 16
      %vm846 = vcmp.ge.s32.totalorder %v611, 16
      %vm847 = vcmp.ge.s32.totalorder %v612, 16
      %vm848 = vcmp.lt.s32.totalorder %v609, 32
      %vm849 = vcmp.lt.s32.totalorder %v610, 32
      %vm850 = vcmp.lt.s32.totalorder %v611, 32
      %vm851 = vcmp.lt.s32.totalorder %v612, 32
      %vm852 = vmand %vm844, %vm848
      %vm853 = vmand %vm845, %vm849
      %vm854 = vmand %vm846, %vm850
      %vm855 = vmand %vm847, %vm851
      %vm856 = vcmp.ge.s32.totalorder %v626, 64
      %vm857 = vmand %vm852, %vm856
      %vm858 = vmand %vm853, %vm856
      %vm859 = vmand %vm854, %vm856
      %vm860 = vmand %vm855, %vm856
      %s861 = sadd.s32 %s576, 64
      %v862 = vstv %s861
      %vm863 = vcmp.lt.s32.totalorder %v626, %v862
      %vm864 = vmand %vm857, %vm863
      %vm865 = vmand %vm858, %vm863
      %vm866 = vmand %vm859, %vm863
      %vm867 = vmand %vm860, %vm863
      %vm868 = vmor %vm840, %vm864
      %vm869 = vmor %vm841, %vm865
      %vm870 = vmor %vm842, %vm866
      %vm871 = vmor %vm843, %vm867
      %v872 = vsel %vm868, 0.0, -1e+30
      %v873 = vsel %vm869, 0.0, -1e+30
      %v874 = vsel %vm870, 0.0, -1e+30
      %v875 = vsel %vm871, 0.0, -1e+30
      %v876 = vld [vmem:[%s550] sm:$0xf]
      %v877 = vld [vmem:[%s550 + $0x4] sm:$0xf]
      %v878 = vld [vmem:[%s550 + $0x8] sm:$0xf]
      %v879 = vld [vmem:[%s550 + $0xc] sm:$0xf]
      %v880 = vld [vmem:[%s530] sm:$0xff]
      %v881 = vld [vmem:[%s530 + $0x8] sm:$0xff]
      %v882 = vld [vmem:[%s530 + $0x10] sm:$0xff]
      %v883 = vld [vmem:[%s530 + $0x18] sm:$0xff]
      %v884 = vld [vmem:[%s530 + $0x20] sm:$0xff]
      %v885 = vld [vmem:[%s530 + $0x28] sm:$0xff]
      %v886 = vld [vmem:[%s530 + $0x30] sm:$0xff]
      %v887 = vld [vmem:[%s530 + $0x38] sm:$0xff]
      %v888 = vld [vmem:[%s530 + $0x40] sm:$0xff]
      %v889 = vld [vmem:[%s530 + $0x48] sm:$0xff]
      %v890 = vld [vmem:[%s530 + $0x50] sm:$0xff]
      %v891 = vld [vmem:[%s530 + $0x58] sm:$0xff]
      %v892 = vld [vmem:[%s530 + $0x60] sm:$0xff]
      %v893 = vld [vmem:[%s530 + $0x68] sm:$0xff]
      %v894 = vld [vmem:[%s530 + $0x70] sm:$0xff]
      %v895 = vld [vmem:[%s530 + $0x78] sm:$0xff]
      %v900 = vunpack.c.l.b16 %v876
      %v901 = vunpack.c.l.b16 %v877
      %v902 = vunpack.c.l.b16 %v878
      %v903 = vunpack.c.l.b16 %v879
      %v904 = vpack.c.b16 %v901, %v900
      %v905 = vpack.c.b16 %v903, %v902
      %vm908 = vcmask 261120
      %v910 = vsel %vm908, %v598, 0
      %v913 = vsel %vm908, %v599, 0
      %v916 = vsel %vm908, %v600, 0
      %v919 = vsel %vm908, %v601, 0
      %v922 = vsel %vm908, %v602, 0
      %v925 = vsel %vm908, %v603, 0
      %v928 = vsel %vm908, %v604, 0
      %v931 = vsel %vm908, %v605, 0
      %933 = vmatprep.subr.bf16.mxu0 0
      %934 = vmatpush1.bf16.msra.mxu0 0
      %935 = vmatprep.subr.bf16.mxu0 0
      %936 = vmatpush1.bf16.msra.mxu0 0
      %937 = vmatprep.subr.bf16.mxu0 0
      %938 = vmatpush1.bf16.msra.mxu0 0
      %939 = vmatprep.subr.bf16.mxu0 0
      %940 = vmatpush1.bf16.msra.mxu0 0
      %941 = vmatprep.subr.bf16.mxu0 0
      %942 = vmatpush1.bf16.msra.mxu0 0
      %943 = vmatprep.subr.bf16.mxu0 0
      %944 = vmatpush1.bf16.msra.mxu0 0
      %945 = vmatprep.subr.bf16.mxu0 0
      %946 = vmatpush1.bf16.msra.mxu0 %v905
      %947 = vmatprep.subr.bf16.mxu0 0
      %948 = vmatpush1.bf16.msra.mxu0 %v904
      %949 = vmatprep.subr.bf16.mxu0 0
      %950 = vmatpush2.bf16.msra.mxu0 0
      %951 = vmatprep.subr.bf16.mxu0 0
      %952 = vmatpush2.bf16.msra.mxu0 0
      %953 = vmatprep.subr.bf16.mxu0 0
      %954 = vmatpush2.bf16.msra.mxu0 0
      %955 = vmatprep.subr.bf16.mxu0 0
      %956 = vmatpush2.bf16.msra.mxu0 0
      %957 = vmatprep.subr.bf16.mxu0 0
      %958 = vmatpush2.bf16.msra.mxu0 0
      %959 = vmatprep.subr.bf16.mxu0 0
      %960 = vmatpush2.bf16.msra.mxu0 0
      %961 = vmatprep.subr.bf16.mxu0 0
      %962 = vmatpush2.bf16.msra.mxu0 0
      %963 = vmatprep.subr.bf16.mxu0 0
      %964 = vmatpush2.bf16.msra.mxu0 0
      %965 = vmatprep.mubr.bf16.mxu0 0
      %966 = vmatmul.mubr.bf16.gmra.mxu0 %v910
      %v967 = vpop.f32.mrf.mxu0
      %v968 = vadd.f32 %v880, %v967
      %v969 = vpop.f32.mrf.mxu0
      %v970 = vpop.f32.mrf.mxu0
      %v971 = vadd.f32 %v881, %v970
      %v972 = vpop.f32.mrf.mxu0
      %973 = vmatprep.mubr.bf16.mxu0 0
      %974 = vmatmul.mubr.bf16.gmra.mxu0 %v913
      %v975 = vpop.f32.mrf.mxu0
      %v976 = vadd.f32 %v882, %v975
      %v977 = vpop.f32.mrf.mxu0
      %v978 = vpop.f32.mrf.mxu0
      %v979 = vadd.f32 %v883, %v978
      %v980 = vpop.f32.mrf.mxu0
      %981 = vmatprep.mubr.bf16.mxu0 0
      %982 = vmatmul.mubr.bf16.gmra.mxu0 %v916
      %v983 = vpop.f32.mrf.mxu0
      %v984 = vadd.f32 %v884, %v983
      %v985 = vpop.f32.mrf.mxu0
      %v986 = vpop.f32.mrf.mxu0
      %v987 = vadd.f32 %v885, %v986
      %v988 = vpop.f32.mrf.mxu0
      %989 = vmatprep.mubr.bf16.mxu0 0
      %990 = vmatmul.mubr.bf16.gmra.mxu0 %v919
      %v991 = vpop.f32.mrf.mxu0
      %v992 = vadd.f32 %v886, %v991
      %v993 = vpop.f32.mrf.mxu0
      %v994 = vpop.f32.mrf.mxu0
      %v995 = vadd.f32 %v887, %v994
      %v996 = vpop.f32.mrf.mxu0
      %997 = vmatprep.mubr.bf16.mxu0 0
      %998 = vmatmul.mubr.bf16.gmra.mxu0 %v922
      %v999 = vpop.f32.mrf.mxu0
      %v1000 = vadd.f32 %v888, %v999
      %v1001 = vpop.f32.mrf.mxu0
      %v1002 = vpop.f32.mrf.mxu0
      %v1003 = vadd.f32 %v889, %v1002
      %v1004 = vpop.f32.mrf.mxu0
      %1005 = vmatprep.mubr.bf16.mxu0 0
      %1006 = vmatmul.mubr.bf16.gmra.mxu0 %v925
      %v1007 = vpop.f32.mrf.mxu0
      %v1008 = vadd.f32 %v890, %v1007
      %v1009 = vpop.f32.mrf.mxu0
      %v1010 = vpop.f32.mrf.mxu0
      %v1011 = vadd.f32 %v891, %v1010
      %v1012 = vpop.f32.mrf.mxu0
      %1013 = vmatprep.mubr.bf16.mxu0 0
      %1014 = vmatmul.mubr.bf16.gmra.mxu0 %v928
      %v1015 = vpop.f32.mrf.mxu0
      %v1016 = vadd.f32 %v892, %v1015
      %v1017 = vpop.f32.mrf.mxu0
      %v1018 = vpop.f32.mrf.mxu0
      %v1019 = vadd.f32 %v893, %v1018
      %v1020 = vpop.f32.mrf.mxu0
      %1021 = vmatprep.mubr.bf16.mxu0 0
      %1022 = vmatmul.mubr.bf16.gmra.mxu0 %v931
      %v1023 = vpop.f32.mrf.mxu0
      %v1024 = vadd.f32 %v894, %v1023
      %v1025 = vpop.f32.mrf.mxu0
      %v1026 = vpop.f32.mrf.mxu0
      %v1027 = vadd.f32 %v895, %v1026
      %v1028 = vpop.f32.mrf.mxu0
      %1029 = vdwg.mxu0
      %s1030 = scalar_lea.vmem %s550, 16
      %v1031 = vld [vmem:[%s1030] sm:$0xf]
      %v1032 = vld [vmem:[%s1030 + $0x4] sm:$0xf]
      %v1033 = vld [vmem:[%s1030 + $0x8] sm:$0xf]
      %v1034 = vld [vmem:[%s1030 + $0xc] sm:$0xf]
      %v1035 = vld [vmem:[%s535] sm:$0xff]
      %v1036 = vld [vmem:[%s535 + $0x8] sm:$0xff]
      %v1037 = vld [vmem:[%s535 + $0x10] sm:$0xff]
      %v1038 = vld [vmem:[%s535 + $0x18] sm:$0xff]
      %v1043 = vunpack.c.l.b16 %v1031
      %v1044 = vunpack.c.l.b16 %v1032
      %v1045 = vunpack.c.l.b16 %v1033
      %v1046 = vunpack.c.l.b16 %v1034
      %v1047 = vpack.c.b16 %v1044, %v1043
      %v1048 = vpack.c.b16 %v1046, %v1045
      %v1052 = vsel %vm908, %v606, 0
      %v1055 = vsel %vm908, %v607, 0
      %1057 = vmatprep.subr.bf16.mxu0 0
      %1058 = vmatpush1.bf16.msra.mxu0 0
      %1059 = vmatprep.subr.bf16.mxu0 0
      %1060 = vmatpush1.bf16.msra.mxu0 0
      %1061 = vmatprep.subr.bf16.mxu0 0
      %1062 = vmatpush1.bf16.msra.mxu0 0
      %1063 = vmatprep.subr.bf16.mxu0 0
      %1064 = vmatpush1.bf16.msra.mxu0 0
      %1065 = vmatprep.subr.bf16.mxu0 0
      %1066 = vmatpush1.bf16.msra.mxu0 0
      %1067 = vmatprep.subr.bf16.mxu0 0
      %1068 = vmatpush1.bf16.msra.mxu0 0
      %1069 = vmatprep.subr.bf16.mxu0 0
      %1070 = vmatpush1.bf16.msra.mxu0 %v1048
      %1071 = vmatprep.subr.bf16.mxu0 0
      %1072 = vmatpush1.bf16.msra.mxu0 %v1047
      %1073 = vmatprep.subr.bf16.mxu0 0
      %1074 = vmatpush2.bf16.msra.mxu0 0
      %1075 = vmatprep.subr.bf16.mxu0 0
      %1076 = vmatpush2.bf16.msra.mxu0 0
      %1077 = vmatprep.subr.bf16.mxu0 0
      %1078 = vmatpush2.bf16.msra.mxu0 0
      %1079 = vmatprep.subr.bf16.mxu0 0
      %1080 = vmatpush2.bf16.msra.mxu0 0
      %1081 = vmatprep.subr.bf16.mxu0 0
      %1082 = vmatpush2.bf16.msra.mxu0 0
      %1083 = vmatprep.subr.bf16.mxu0 0
      %1084 = vmatpush2.bf16.msra.mxu0 0
      %1085 = vmatprep.subr.bf16.mxu0 0
      %1086 = vmatpush2.bf16.msra.mxu0 0
      %1087 = vmatprep.subr.bf16.mxu0 0
      %1088 = vmatpush2.bf16.msra.mxu0 0
      %1089 = vmatprep.mubr.bf16.mxu0 0
      %1090 = vmatmul.mubr.bf16.gmra.mxu0 %v1052
      %v1091 = vpop.f32.mrf.mxu0
      %v1092 = vadd.f32 %v1035, %v1091
      %v1093 = vpop.f32.mrf.mxu0
      %v1094 = vpop.f32.mrf.mxu0
      %v1095 = vadd.f32 %v1036, %v1094
      %v1096 = vpop.f32.mrf.mxu0
      %1097 = vmatprep.mubr.bf16.mxu0 0
      %1098 = vmatmul.mubr.bf16.gmra.mxu0 %v1055
      %v1099 = vpop.f32.mrf.mxu0
      %v1100 = vadd.f32 %v1037, %v1099
      %v1101 = vpop.f32.mrf.mxu0
      %v1102 = vpop.f32.mrf.mxu0
      %v1103 = vadd.f32 %v1038, %v1102
      %v1104 = vpop.f32.mrf.mxu0
      %1105 = vdwg.mxu0
      %s1106 = scalar_lea.vmem %s550, 32
      %v1107 = vld [vmem:[%s1106] sm:$0xf]
      %v1108 = vld [vmem:[%s1106 + $0x4] sm:$0xf]
      %v1109 = vld [vmem:[%s1106 + $0x8] sm:$0xf]
      %v1110 = vld [vmem:[%s1106 + $0xc] sm:$0xf]
      %v1111 = vld [vmem:[%s559] sm:$0x1]
      %v1113 = vlaneseq
      %v1114 = vshrl.u32 %v1113, 7
      %v1115 = vsub.s32 0, %v1114
      %v1116 = vrot.slane %v1111, %v1115
      %v1122 = vunpack.c.l.b16 %v1107
      %v1123 = vunpack.c.l.b16 %v1108
      %v1124 = vunpack.c.l.b16 %v1109
      %v1125 = vunpack.c.l.b16 %v1110
      %v1126 = vpack.c.b16 %v1123, %v1122
      %v1127 = vpack.c.b16 %v1125, %v1124
      %1130 = vmatprep.subr.bf16.mxu0 0
      %1131 = vmatpush1.bf16.msra.mxu0 0
      %1132 = vmatprep.subr.bf16.mxu0 0
      %1133 = vmatpush1.bf16.msra.mxu0 0
      %1134 = vmatprep.subr.bf16.mxu0 0
      %1135 = vmatpush1.bf16.msra.mxu0 0
      %1136 = vmatprep.subr.bf16.mxu0 0
      %1137 = vmatpush1.bf16.msra.mxu0 0
      %1138 = vmatprep.subr.bf16.mxu0 0
      %1139 = vmatpush1.bf16.msra.mxu0 0
      %1140 = vmatprep.subr.bf16.mxu0 0
      %1141 = vmatpush1.bf16.msra.mxu0 0
      %1142 = vmatprep.subr.bf16.mxu0 0
      %1143 = vmatpush1.bf16.msra.mxu0 %v1127
      %1144 = vmatprep.subr.bf16.mxu0 0
      %1145 = vmatpush1.bf16.msra.mxu0 %v1126
      %1146 = vmatprep.subr.bf16.mxu0 0
      %1147 = vmatpush2.bf16.msra.mxu0 0
      %1148 = vmatprep.subr.bf16.mxu0 0
      %1149 = vmatpush2.bf16.msra.mxu0 0
      %1150 = vmatprep.subr.bf16.mxu0 0
      %1151 = vmatpush2.bf16.msra.mxu0 0
      %1152 = vmatprep.subr.bf16.mxu0 0
      %1153 = vmatpush2.bf16.msra.mxu0 0
      %1154 = vmatprep.subr.bf16.mxu0 0
      %1155 = vmatpush2.bf16.msra.mxu0 0
      %1156 = vmatprep.subr.bf16.mxu0 0
      %1157 = vmatpush2.bf16.msra.mxu0 0
      %1158 = vmatprep.subr.bf16.mxu0 0
      %1159 = vmatpush2.bf16.msra.mxu0 0
      %1160 = vmatprep.subr.bf16.mxu0 0
      %1161 = vmatpush2.bf16.msra.mxu0 0
      %1162 = vmatprep.mubr.bf16.mxu0 0
      %1163 = vmatmul.mubr.bf16.gmra.mxu0 %v1052
      %v1164 = vpop.f32.mrf.mxu0
      %v1165 = vadd.f32 %v1116, %v1164
      %v1166 = vpop.f32.mrf.mxu0
      %v1167 = vpop.f32.mrf.mxu0
      %v1168 = vadd.f32 %v1116, %v1167
      %v1169 = vpop.f32.mrf.mxu0
      %1170 = vmatprep.mubr.bf16.mxu0 0
      %1171 = vmatmul.mubr.bf16.gmra.mxu0 %v1055
      %v1172 = vpop.f32.mrf.mxu0
      %v1173 = vadd.f32 %v1116, %v1172
      %v1174 = vpop.f32.mrf.mxu0
      %v1175 = vpop.f32.mrf.mxu0
      %v1176 = vadd.f32 %v1116, %v1175
      %v1177 = vpop.f32.mrf.mxu0
      %1178 = vdwg.mxu0
      %s1179 = scalar_lea.vmem %s550, 48
      %v1180 = vld [vmem:[%s1179] sm:$0xf]
      %v1181 = vld [vmem:[%s1179 + $0x4] sm:$0xf]
      %v1182 = vld [vmem:[%s1179 + $0x8] sm:$0xf]
      %v1183 = vld [vmem:[%s1179 + $0xc] sm:$0xf]
      %s1184 = scalar_lea.vmem %s559, 1
      %v1185 = vld [vmem:[%s1184] sm:$0x1]
      %v1186 = vpack.c.bf16 %v971, %v968
      %v1187 = vpack.c.bf16 %v979, %v976
      %v1188 = vpack.c.bf16 %v987, %v984
      %v1189 = vpack.c.bf16 %v995, %v992
      %v1190 = vpack.c.bf16 %v1003, %v1000
      %v1191 = vpack.c.bf16 %v1011, %v1008
      %v1192 = vpack.c.bf16 %v1019, %v1016
      %v1193 = vpack.c.bf16 %v1027, %v1024
      %v1194 = vpack.c.bf16 %v1095, %v1092
      %v1195 = vpack.c.bf16 %v1103, %v1100
      %v1197 = vsel %vm908, %v1186, 0
      %v1200 = vsel %vm908, %v1187, 0
      %v1203 = vsel %vm908, %v1188, 0
      %v1206 = vsel %vm908, %v1189, 0
      %v1209 = vsel %vm908, %v1190, 0
      %v1212 = vsel %vm908, %v1191, 0
      %v1215 = vsel %vm908, %v1192, 0
      %v1218 = vsel %vm908, %v1193, 0
      %v1221 = vsel %vm908, %v1194, 0
      %v1224 = vsel %vm908, %v1195, 0
      %1226 = vmatprep.subr.bf16.mxu0 0
      %1227 = vmatpush1.bf16.xpose.msra.mxu0 0
      %1228 = vmatprep.subr.bf16.mxu0 0
      %1229 = vmatpush1.bf16.xpose.msra.mxu0 0
      %1230 = vmatprep.subr.bf16.mxu0 0
      %1231 = vmatpush1.bf16.xpose.msra.mxu0 0
      %1232 = vmatprep.subr.bf16.mxu0 0
      %1233 = vmatpush1.bf16.xpose.msra.mxu0 0
      %1234 = vmatprep.subr.bf16.mxu0 0
      %1235 = vmatpush1.bf16.xpose.msra.mxu0 0
      %1236 = vmatprep.subr.bf16.mxu0 0
      %1237 = vmatpush1.bf16.xpose.msra.mxu0 0
      %1238 = vmatprep.subr.bf16.mxu0 0
      %1239 = vmatpush1.bf16.xpose.msra.mxu0 %v1224
      %1240 = vmatprep.subr.bf16.mxu0 0
      %1241 = vmatpush1.bf16.xpose.msra.mxu0 %v1221
      %1242 = vmatprep.subr.bf16.mxu0 0
      %1243 = vmatpush2.bf16.xpose.msra.mxu0 0
      %1244 = vmatprep.subr.bf16.mxu0 0
      %1245 = vmatpush2.bf16.xpose.msra.mxu0 0
      %1246 = vmatprep.subr.bf16.mxu0 0
      %1247 = vmatpush2.bf16.xpose.msra.mxu0 0
      %1248 = vmatprep.subr.bf16.mxu0 0
      %1249 = vmatpush2.bf16.xpose.msra.mxu0 0
      %1250 = vmatprep.subr.bf16.mxu0 0
      %1251 = vmatpush2.bf16.xpose.msra.mxu0 0
      %1252 = vmatprep.subr.bf16.mxu0 0
      %1253 = vmatpush2.bf16.xpose.msra.mxu0 0
      %1254 = vmatprep.subr.bf16.mxu0 0
      %1255 = vmatpush2.bf16.xpose.msra.mxu0 0
      %1256 = vmatprep.subr.bf16.mxu0 0
      %1257 = vmatpush2.bf16.xpose.msra.mxu0 0
      %1258 = vmatprep.mubr.bf16.mxu0 0
      %1259 = vmatmul.mubr.bf16.gmra.mxu0 %v1197
      %v1260 = vpop.f32.mrf.mxu0
      %v1261 = vadd.f32 %v810, %v1260
      %v1262 = vpop.f32.mrf.mxu0
      %v1263 = vpop.f32.mrf.mxu0
      %v1264 = vadd.f32 %v811, %v1263
      %v1265 = vpop.f32.mrf.mxu0
      %1266 = vmatprep.mubr.bf16.mxu0 0
      %1267 = vmatmul.mubr.bf16.gmra.mxu0 %v1200
      %v1268 = vpop.f32.mrf.mxu0
      %v1269 = vadd.f32 %v812, %v1268
      %v1270 = vpop.f32.mrf.mxu0
      %v1271 = vpop.f32.mrf.mxu0
      %v1272 = vadd.f32 %v813, %v1271
      %v1273 = vpop.f32.mrf.mxu0
      %1274 = vmatprep.mubr.bf16.mxu0 0
      %1275 = vmatmul.mubr.bf16.gmra.mxu0 %v1203
      %v1276 = vpop.f32.mrf.mxu0
      %v1277 = vadd.f32 %v814, %v1276
      %v1278 = vpop.f32.mrf.mxu0
      %v1279 = vpop.f32.mrf.mxu0
      %v1280 = vadd.f32 %v815, %v1279
      %v1281 = vpop.f32.mrf.mxu0
      %1282 = vmatprep.mubr.bf16.mxu0 0
      %1283 = vmatmul.mubr.bf16.gmra.mxu0 %v1206
      %v1284 = vpop.f32.mrf.mxu0
      %v1285 = vadd.f32 %v816, %v1284
      %v1286 = vpop.f32.mrf.mxu0
      %v1287 = vpop.f32.mrf.mxu0
      %v1288 = vadd.f32 %v817, %v1287
      %v1289 = vpop.f32.mrf.mxu0
      %1290 = vmatprep.mubr.bf16.mxu0 0
      %1291 = vmatmul.mubr.bf16.gmra.mxu0 %v1209
      %v1292 = vpop.f32.mrf.mxu0
      %v1293 = vadd.f32 %v818, %v1292
      %v1294 = vpop.f32.mrf.mxu0
      %v1295 = vpop.f32.mrf.mxu0
      %v1296 = vadd.f32 %v819, %v1295
      %v1297 = vpop.f32.mrf.mxu0
      %1298 = vmatprep.mubr.bf16.mxu0 0
      %1299 = vmatmul.mubr.bf16.gmra.mxu0 %v1212
      %v1300 = vpop.f32.mrf.mxu0
      %v1301 = vadd.f32 %v820, %v1300
      %v1302 = vpop.f32.mrf.mxu0
      %v1303 = vpop.f32.mrf.mxu0
      %v1304 = vadd.f32 %v821, %v1303
      %v1305 = vpop.f32.mrf.mxu0
      %1306 = vmatprep.mubr.bf16.mxu0 0
      %1307 = vmatmul.mubr.bf16.gmra.mxu0 %v1215
      %v1308 = vpop.f32.mrf.mxu0
      %v1309 = vadd.f32 %v822, %v1308
      %v1310 = vpop.f32.mrf.mxu0
      %v1311 = vpop.f32.mrf.mxu0
      %v1312 = vadd.f32 %v823, %v1311
      %v1313 = vpop.f32.mrf.mxu0
      %1314 = vmatprep.mubr.bf16.mxu0 0
      %1315 = vmatmul.mubr.bf16.gmra.mxu0 %v1218
      %v1316 = vpop.f32.mrf.mxu0
      %v1317 = vadd.f32 %v824, %v1316
      %v1318 = vpop.f32.mrf.mxu0
      %v1319 = vpop.f32.mrf.mxu0
      %v1320 = vadd.f32 %v825, %v1319
      %v1321 = vpop.f32.mrf.mxu0
      %1322 = vdwg.mxu0
      %v1323 = vsel %vm908, %v1261, -inf
      %1324 = vmax.xlane.f32.xlu0 %v1323
      %v1325 = vpop.xlane.xlu0 %1324
      %v1326 = vsel %vm908, %v1264, -inf
      %1327 = vmax.xlane.f32.xlu0 %v1326
      %v1328 = vpop.xlane.xlu0 %1327
      %v1329 = vsel %vm908, %v1269, -inf
      %1330 = vmax.xlane.f32.xlu0 %v1329
      %v1331 = vpop.xlane.xlu0 %1330
      %v1332 = vsel %vm908, %v1272, -inf
      %1333 = vmax.xlane.f32.xlu0 %v1332
      %v1334 = vpop.xlane.xlu0 %1333
      %v1335 = vsel %vm908, %v1277, -inf
      %1336 = vmax.xlane.f32.xlu0 %v1335
      %v1337 = vpop.xlane.xlu0 %1336
      %v1338 = vsel %vm908, %v1280, -inf
      %1339 = vmax.xlane.f32.xlu0 %v1338
      %v1340 = vpop.xlane.xlu0 %1339
      %v1341 = vsel %vm908, %v1285, -inf
      %1342 = vmax.xlane.f32.xlu0 %v1341
      %v1343 = vpop.xlane.xlu0 %1342
      %v1344 = vsel %vm908, %v1288, -inf
      %1345 = vmax.xlane.f32.xlu0 %v1344
      %v1346 = vpop.xlane.xlu0 %1345
      %v1347 = vsel %vm908, %v1293, -inf
      %1348 = vmax.xlane.f32.xlu0 %v1347
      %v1349 = vpop.xlane.xlu0 %1348
      %v1350 = vsel %vm908, %v1296, -inf
      %1351 = vmax.xlane.f32.xlu0 %v1350
      %v1352 = vpop.xlane.xlu0 %1351
      %v1353 = vsel %vm908, %v1301, -inf
      %1354 = vmax.xlane.f32.xlu0 %v1353
      %v1355 = vpop.xlane.xlu0 %1354
      %v1356 = vsel %vm908, %v1304, -inf
      %1357 = vmax.xlane.f32.xlu0 %v1356
      %v1358 = vpop.xlane.xlu0 %1357
      %v1359 = vsel %vm908, %v1309, -inf
      %1360 = vmax.xlane.f32.xlu0 %v1359
      %v1361 = vpop.xlane.xlu0 %1360
      %v1362 = vsel %vm908, %v1312, -inf
      %1363 = vmax.xlane.f32.xlu0 %v1362
      %v1364 = vpop.xlane.xlu0 %1363
      %v1365 = vsel %vm908, %v1317, -inf
      %1366 = vmax.xlane.f32.xlu0 %v1365
      %v1367 = vpop.xlane.xlu0 %1366
      %v1368 = vsel %vm908, %v1320, -inf
      %1369 = vmax.xlane.f32.xlu0 %v1368
      %v1370 = vpop.xlane.xlu0 %1369
      %v1371 = vsub.f32 %v1261, %v1325
      %v1372 = vsub.f32 %v1264, %v1328
      %v1373 = vsub.f32 %v1269, %v1331
      %v1374 = vsub.f32 %v1272, %v1334
      %v1375 = vsub.f32 %v1277, %v1337
      %v1376 = vsub.f32 %v1280, %v1340
      %v1377 = vsub.f32 %v1285, %v1343
      %v1378 = vsub.f32 %v1288, %v1346
      %v1379 = vsub.f32 %v1293, %v1349
      %v1380 = vsub.f32 %v1296, %v1352
      %v1381 = vsub.f32 %v1301, %v1355
      %v1382 = vsub.f32 %v1304, %v1358
      %v1383 = vsub.f32 %v1309, %v1361
      %v1384 = vsub.f32 %v1312, %v1364
      %v1385 = vsub.f32 %v1317, %v1367
      %v1386 = vsub.f32 %v1320, %v1370
      %v1387 = vmul.f32 %v1371, 1.442695
      %v1388 = vpow.pop %v1387
      %v1389 = vmul.f32 %v1372, 1.442695
      %v1390 = vpow.pop %v1389
      %v1391 = vmul.f32 %v1373, 1.442695
      %v1392 = vpow.pop %v1391
      %v1393 = vmul.f32 %v1374, 1.442695
      %v1394 = vpow.pop %v1393
      %v1395 = vmul.f32 %v1375, 1.442695
      %v1396 = vpow.pop %v1395
      %v1397 = vmul.f32 %v1376, 1.442695
      %v1398 = vpow.pop %v1397
      %v1399 = vmul.f32 %v1377, 1.442695
      %v1400 = vpow.pop %v1399
      %v1401 = vmul.f32 %v1378, 1.442695
      %v1402 = vpow.pop %v1401
      %v1403 = vmul.f32 %v1379, 1.442695
      %v1404 = vpow.pop %v1403
      %v1405 = vmul.f32 %v1380, 1.442695
      %v1406 = vpow.pop %v1405
      %v1407 = vmul.f32 %v1381, 1.442695
      %v1408 = vpow.pop %v1407
      %v1409 = vmul.f32 %v1382, 1.442695
      %v1410 = vpow.pop %v1409
      %v1411 = vmul.f32 %v1383, 1.442695
      %v1412 = vpow.pop %v1411
      %v1413 = vmul.f32 %v1384, 1.442695
      %v1414 = vpow.pop %v1413
      %v1415 = vmul.f32 %v1385, 1.442695
      %v1416 = vpow.pop %v1415
      %v1417 = vmul.f32 %v1386, 1.442695
      %v1418 = vpow.pop %v1417
      %v1419 = vsel %vm908, %v1388, 0.0
      %1420 = vadd.xlane.f32.xlu0 %v1419
      %v1421 = vpop.xlane.xlu0 %1420
      %v1422 = vsel %vm908, %v1390, 0.0
      %1423 = vadd.xlane.f32.xlu0 %v1422
      %v1424 = vpop.xlane.xlu0 %1423
      %v1425 = vsel %vm908, %v1392, 0.0
      %1426 = vadd.xlane.f32.xlu0 %v1425
      %v1427 = vpop.xlane.xlu0 %1426
      %v1428 = vsel %vm908, %v1394, 0.0
      %1429 = vadd.xlane.f32.xlu0 %v1428
      %v1430 = vpop.xlane.xlu0 %1429
      %v1431 = vsel %vm908, %v1396, 0.0
      %1432 = vadd.xlane.f32.xlu0 %v1431
      %v1433 = vpop.xlane.xlu0 %1432
      %v1434 = vsel %vm908, %v1398, 0.0
      %1435 = vadd.xlane.f32.xlu0 %v1434
      %v1436 = vpop.xlane.xlu0 %1435
      %v1437 = vsel %vm908, %v1400, 0.0
      %1438 = vadd.xlane.f32.xlu0 %v1437
      %v1439 = vpop.xlane.xlu0 %1438
      %v1440 = vsel %vm908, %v1402, 0.0
      %1441 = vadd.xlane.f32.xlu0 %v1440
      %v1442 = vpop.xlane.xlu0 %1441
      %v1443 = vsel %vm908, %v1404, 0.0
      %1444 = vadd.xlane.f32.xlu0 %v1443
      %v1445 = vpop.xlane.xlu0 %1444
      %v1446 = vsel %vm908, %v1406, 0.0
      %1447 = vadd.xlane.f32.xlu0 %v1446
      %v1448 = vpop.xlane.xlu0 %1447
      %v1449 = vsel %vm908, %v1408, 0.0
      %1450 = vadd.xlane.f32.xlu0 %v1449
      %v1451 = vpop.xlane.xlu0 %1450
      %v1452 = vsel %vm908, %v1410, 0.0
      %1453 = vadd.xlane.f32.xlu0 %v1452
      %v1454 = vpop.xlane.xlu0 %1453
      %v1455 = vsel %vm908, %v1412, 0.0
      %1456 = vadd.xlane.f32.xlu0 %v1455
      %v1457 = vpop.xlane.xlu0 %1456
      %v1458 = vsel %vm908, %v1414, 0.0
      %1459 = vadd.xlane.f32.xlu0 %v1458
      %v1460 = vpop.xlane.xlu0 %1459
      %v1461 = vsel %vm908, %v1416, 0.0
      %1462 = vadd.xlane.f32.xlu0 %v1461
      %v1463 = vpop.xlane.xlu0 %1462
      %v1464 = vsel %vm908, %v1418, 0.0
      %1465 = vadd.xlane.f32.xlu0 %v1464
      %v1466 = vpop.xlane.xlu0 %1465
      %v1467 = vrcp.pop %v1421
      %v1468 = vrcp.pop %v1424
      %v1469 = vrcp.pop %v1427
      %v1470 = vrcp.pop %v1430
      %v1471 = vrcp.pop %v1433
      %v1472 = vrcp.pop %v1436
      %v1473 = vrcp.pop %v1439
      %v1474 = vrcp.pop %v1442
      %v1475 = vrcp.pop %v1445
      %v1476 = vrcp.pop %v1448
      %v1477 = vrcp.pop %v1451
      %v1478 = vrcp.pop %v1454
      %v1479 = vrcp.pop %v1457
      %v1480 = vrcp.pop %v1460
      %v1481 = vrcp.pop %v1463
      %v1482 = vrcp.pop %v1466
      %v1483 = vpack.c.bf16 %v1390, %v1388
      %v1484 = vpack.c.bf16 %v1394, %v1392
      %v1485 = vpack.c.bf16 %v1398, %v1396
      %v1486 = vpack.c.bf16 %v1402, %v1400
      %v1487 = vpack.c.bf16 %v1406, %v1404
      %v1488 = vpack.c.bf16 %v1410, %v1408
      %v1489 = vpack.c.bf16 %v1414, %v1412
      %v1490 = vpack.c.bf16 %v1418, %v1416
      %v1491 = vpack.c.bf16 %v1168, %v1165
      %v1492 = vpack.c.bf16 %v1176, %v1173
      %v1494 = vsel %vm908, %v1483, 0
      %v1497 = vsel %vm908, %v1484, 0
      %v1500 = vsel %vm908, %v1485, 0
      %v1503 = vsel %vm908, %v1486, 0
      %v1506 = vsel %vm908, %v1487, 0
      %v1509 = vsel %vm908, %v1488, 0
      %v1512 = vsel %vm908, %v1489, 0
      %v1515 = vsel %vm908, %v1490, 0
      %1517 = vmatprep.subr.bf16.mxu0 0
      %1518 = vmatpush1.bf16.msra.mxu0 0
      %1519 = vmatprep.subr.bf16.mxu0 0
      %1520 = vmatpush1.bf16.msra.mxu0 0
      %1521 = vmatprep.subr.bf16.mxu0 0
      %1522 = vmatpush1.bf16.msra.mxu0 0
      %1523 = vmatprep.subr.bf16.mxu0 0
      %1524 = vmatpush1.bf16.msra.mxu0 0
      %1525 = vmatprep.subr.bf16.mxu0 0
      %1526 = vmatpush1.bf16.msra.mxu0 0
      %1527 = vmatprep.subr.bf16.mxu0 0
      %1528 = vmatpush1.bf16.msra.mxu0 0
      %1529 = vmatprep.subr.bf16.mxu0 0
      %1530 = vmatpush1.bf16.msra.mxu0 %v1492
      %1531 = vmatprep.subr.bf16.mxu0 0
      %1532 = vmatpush1.bf16.msra.mxu0 %v1491
      %1533 = vmatprep.subr.bf16.mxu0 0
      %1534 = vmatpush2.bf16.msra.mxu0 0
      %1535 = vmatprep.subr.bf16.mxu0 0
      %1536 = vmatpush2.bf16.msra.mxu0 0
      %1537 = vmatprep.subr.bf16.mxu0 0
      %1538 = vmatpush2.bf16.msra.mxu0 0
      %1539 = vmatprep.subr.bf16.mxu0 0
      %1540 = vmatpush2.bf16.msra.mxu0 0
      %1541 = vmatprep.subr.bf16.mxu0 0
      %1542 = vmatpush2.bf16.msra.mxu0 0
      %1543 = vmatprep.subr.bf16.mxu0 0
      %1544 = vmatpush2.bf16.msra.mxu0 0
      %1545 = vmatprep.subr.bf16.mxu0 0
      %1546 = vmatpush2.bf16.msra.mxu0 0
      %1547 = vmatprep.subr.bf16.mxu0 0
      %1548 = vmatpush2.bf16.msra.mxu0 0
      %1549 = vmatprep.mubr.bf16.mxu0 0
      %1550 = vmatmul.mubr.bf16.gmra.mxu0 %v1494
      %v1551 = vpop.f32.mrf.mxu0
      %v1552 = vadd.f32 0.0, %v1551
      %v1553 = vpop.f32.mrf.mxu0
      %v1554 = vpop.f32.mrf.mxu0
      %v1555 = vadd.f32 0.0, %v1554
      %v1556 = vpop.f32.mrf.mxu0
      %1557 = vmatprep.mubr.bf16.mxu0 0
      %1558 = vmatmul.mubr.bf16.gmra.mxu0 %v1497
      %v1559 = vpop.f32.mrf.mxu0
      %v1560 = vadd.f32 0.0, %v1559
      %v1561 = vpop.f32.mrf.mxu0
      %v1562 = vpop.f32.mrf.mxu0
      %v1563 = vadd.f32 0.0, %v1562
      %v1564 = vpop.f32.mrf.mxu0
      %1565 = vmatprep.mubr.bf16.mxu0 0
      %1566 = vmatmul.mubr.bf16.gmra.mxu0 %v1500
      %v1567 = vpop.f32.mrf.mxu0
      %v1568 = vadd.f32 0.0, %v1567
      %v1569 = vpop.f32.mrf.mxu0
      %v1570 = vpop.f32.mrf.mxu0
      %v1571 = vadd.f32 0.0, %v1570
      %v1572 = vpop.f32.mrf.mxu0
      %1573 = vmatprep.mubr.bf16.mxu0 0
      %1574 = vmatmul.mubr.bf16.gmra.mxu0 %v1503
      %v1575 = vpop.f32.mrf.mxu0
      %v1576 = vadd.f32 0.0, %v1575
      %v1577 = vpop.f32.mrf.mxu0
      %v1578 = vpop.f32.mrf.mxu0
      %v1579 = vadd.f32 0.0, %v1578
      %v1580 = vpop.f32.mrf.mxu0
      %1581 = vmatprep.mubr.bf16.mxu0 0
      %1582 = vmatmul.mubr.bf16.gmra.mxu0 %v1506
      %v1583 = vpop.f32.mrf.mxu0
      %v1584 = vadd.f32 0.0, %v1583
      %v1585 = vpop.f32.mrf.mxu0
      %v1586 = vpop.f32.mrf.mxu0
      %v1587 = vadd.f32 0.0, %v1586
      %v1588 = vpop.f32.mrf.mxu0
      %1589 = vmatprep.mubr.bf16.mxu0 0
      %1590 = vmatmul.mubr.bf16.gmra.mxu0 %v1509
      %v1591 = vpop.f32.mrf.mxu0
      %v1592 = vadd.f32 0.0, %v1591
      %v1593 = vpop.f32.mrf.mxu0
      %v1594 = vpop.f32.mrf.mxu0
      %v1595 = vadd.f32 0.0, %v1594
      %v1596 = vpop.f32.mrf.mxu0
      %1597 = vmatprep.mubr.bf16.mxu0 0
      %1598 = vmatmul.mubr.bf16.gmra.mxu0 %v1512
      %v1599 = vpop.f32.mrf.mxu0
      %v1600 = vadd.f32 0.0, %v1599
      %v1601 = vpop.f32.mrf.mxu0
      %v1602 = vpop.f32.mrf.mxu0
      %v1603 = vadd.f32 0.0, %v1602
      %v1604 = vpop.f32.mrf.mxu0
      %1605 = vmatprep.mubr.bf16.mxu0 0
      %1606 = vmatmul.mubr.bf16.gmra.mxu0 %v1515
      %v1607 = vpop.f32.mrf.mxu0
      %v1608 = vadd.f32 0.0, %v1607
      %v1609 = vpop.f32.mrf.mxu0
      %v1610 = vpop.f32.mrf.mxu0
      %v1611 = vadd.f32 0.0, %v1610
      %v1612 = vpop.f32.mrf.mxu0
      %1613 = vdwg.mxu0
      %v1614 = vmul.f32 %v1552, %v1467
      %v1615 = vmul.f32 %v1555, %v1468
      %v1616 = vmul.f32 %v1560, %v1469
      %v1617 = vmul.f32 %v1563, %v1470
      %v1618 = vmul.f32 %v1568, %v1471
      %v1619 = vmul.f32 %v1571, %v1472
      %v1620 = vmul.f32 %v1576, %v1473
      %v1621 = vmul.f32 %v1579, %v1474
      %v1622 = vmul.f32 %v1584, %v1475
      %v1623 = vmul.f32 %v1587, %v1476
      %v1624 = vmul.f32 %v1592, %v1477
      %v1625 = vmul.f32 %v1595, %v1478
      %v1626 = vmul.f32 %v1600, %v1479
      %v1627 = vmul.f32 %v1603, %v1480
      %v1628 = vmul.f32 %v1608, %v1481
      %v1629 = vmul.f32 %v1611, %v1482
      %v1630 = vpack.c.bf16 %v1615, %v1614
      %v1631 = vpack.c.bf16 %v1617, %v1616
      %v1632 = vpack.c.bf16 %v1619, %v1618
      %v1633 = vpack.c.bf16 %v1621, %v1620
      %v1634 = vpack.c.bf16 %v1623, %v1622
      %v1635 = vpack.c.bf16 %v1625, %v1624
      %v1636 = vpack.c.bf16 %v1627, %v1626
      %v1637 = vpack.c.bf16 %v1629, %v1628
      %v1639 = vlaneseq
      %v1640 = vshrl.u32 %v1639, 7
      %v1641 = vsub.s32 0, %v1640
      %v1642 = vrot.slane %v1185, %v1641
      %v1648 = vunpack.c.l.b16 %v1180
      %v1649 = vunpack.c.l.b16 %v1181
      %v1650 = vunpack.c.l.b16 %v1182
      %v1651 = vunpack.c.l.b16 %v1183
      %v1652 = vpack.c.b16 %v1649, %v1648
      %v1653 = vpack.c.b16 %v1651, %v1650
      %v1657 = vsel %vm908, %v1630, 0
      %v1660 = vsel %vm908, %v1631, 0
      %v1663 = vsel %vm908, %v1632, 0
      %v1666 = vsel %vm908, %v1633, 0
      %v1669 = vsel %vm908, %v1634, 0
      %v1672 = vsel %vm908, %v1635, 0
      %v1675 = vsel %vm908, %v1636, 0
      %v1678 = vsel %vm908, %v1637, 0
      %1680 = vmatprep.subr.bf16.mxu0 0
      %1681 = vmatpush1.bf16.msra.mxu0 0
      %1682 = vmatprep.subr.bf16.mxu0 0
      %1683 = vmatpush1.bf16.msra.mxu0 0
      %1684 = vmatprep.subr.bf16.mxu0 0
      %1685 = vmatpush1.bf16.msra.mxu0 0
      %1686 = vmatprep.subr.bf16.mxu0 0
      %1687 = vmatpush1.bf16.msra.mxu0 0
      %1688 = vmatprep.subr.bf16.mxu0 0
      %1689 = vmatpush1.bf16.msra.mxu0 0
      %1690 = vmatprep.subr.bf16.mxu0 0
      %1691 = vmatpush1.bf16.msra.mxu0 0
      %1692 = vmatprep.subr.bf16.mxu0 0
      %1693 = vmatpush1.bf16.msra.mxu0 %v1653
      %1694 = vmatprep.subr.bf16.mxu0 0
      %1695 = vmatpush1.bf16.msra.mxu0 %v1652
      %1696 = vmatprep.subr.bf16.mxu0 0
      %1697 = vmatpush2.bf16.msra.mxu0 0
      %1698 = vmatprep.subr.bf16.mxu0 0
      %1699 = vmatpush2.bf16.msra.mxu0 0
      %1700 = vmatprep.subr.bf16.mxu0 0
      %1701 = vmatpush2.bf16.msra.mxu0 0
      %1702 = vmatprep.subr.bf16.mxu0 0
      %1703 = vmatpush2.bf16.msra.mxu0 0
      %1704 = vmatprep.subr.bf16.mxu0 0
      %1705 = vmatpush2.bf16.msra.mxu0 0
      %1706 = vmatprep.subr.bf16.mxu0 0
      %1707 = vmatpush2.bf16.msra.mxu0 0
      %1708 = vmatprep.subr.bf16.mxu0 0
      %1709 = vmatpush2.bf16.msra.mxu0 0
      %1710 = vmatprep.subr.bf16.mxu0 0
      %1711 = vmatpush2.bf16.msra.mxu0 0
      %1712 = vmatprep.mubr.bf16.mxu0 0
      %1713 = vmatmul.mubr.bf16.gmra.mxu0 %v1657
      %v1714 = vpop.f32.mrf.mxu0
      %v1715 = vadd.f32 %v1642, %v1714
      %v1716 = vpop.f32.mrf.mxu0
      %v1717 = vpop.f32.mrf.mxu0
      %v1718 = vadd.f32 %v1642, %v1717
      %v1719 = vpop.f32.mrf.mxu0
      %1720 = vmatprep.mubr.bf16.mxu0 0
      %1721 = vmatmul.mubr.bf16.gmra.mxu0 %v1660
      %v1722 = vpop.f32.mrf.mxu0
      %v1723 = vadd.f32 %v1642, %v1722
      %v1724 = vpop.f32.mrf.mxu0
      %v1725 = vpop.f32.mrf.mxu0
      %v1726 = vadd.f32 %v1642, %v1725
      %v1727 = vpop.f32.mrf.mxu0
      %1728 = vmatprep.mubr.bf16.mxu0 0
      %1729 = vmatmul.mubr.bf16.gmra.mxu0 %v1663
      %v1730 = vpop.f32.mrf.mxu0
      %v1731 = vadd.f32 %v1642, %v1730
      %v1732 = vpop.f32.mrf.mxu0
      %v1733 = vpop.f32.mrf.mxu0
      %v1734 = vadd.f32 %v1642, %v1733
      %v1735 = vpop.f32.mrf.mxu0
      %1736 = vmatprep.mubr.bf16.mxu0 0
      %1737 = vmatmul.mubr.bf16.gmra.mxu0 %v1666
      %v1738 = vpop.f32.mrf.mxu0
      %v1739 = vadd.f32 %v1642, %v1738
      %v1740 = vpop.f32.mrf.mxu0
      %v1741 = vpop.f32.mrf.mxu0
      %v1742 = vadd.f32 %v1642, %v1741
      %v1743 = vpop.f32.mrf.mxu0
      %1744 = vmatprep.mubr.bf16.mxu0 0
      %1745 = vmatmul.mubr.bf16.gmra.mxu0 %v1669
      %v1746 = vpop.f32.mrf.mxu0
      %v1747 = vadd.f32 %v1642, %v1746
      %v1748 = vpop.f32.mrf.mxu0
      %v1749 = vpop.f32.mrf.mxu0
      %v1750 = vadd.f32 %v1642, %v1749
      %v1751 = vpop.f32.mrf.mxu0
      %1752 = vmatprep.mubr.bf16.mxu0 0
      %1753 = vmatmul.mubr.bf16.gmra.mxu0 %v1672
      %v1754 = vpop.f32.mrf.mxu0
      %v1755 = vadd.f32 %v1642, %v1754
      %v1756 = vpop.f32.mrf.mxu0
      %v1757 = vpop.f32.mrf.mxu0
      %v1758 = vadd.f32 %v1642, %v1757
      %v1759 = vpop.f32.mrf.mxu0
      %1760 = vmatprep.mubr.bf16.mxu0 0
      %1761 = vmatmul.mubr.bf16.gmra.mxu0 %v1675
      %v1762 = vpop.f32.mrf.mxu0
      %v1763 = vadd.f32 %v1642, %v1762
      %v1764 = vpop.f32.mrf.mxu0
      %v1765 = vpop.f32.mrf.mxu0
      %v1766 = vadd.f32 %v1642, %v1765
      %v1767 = vpop.f32.mrf.mxu0
      %1768 = vmatprep.mubr.bf16.mxu0 0
      %1769 = vmatmul.mubr.bf16.gmra.mxu0 %v1678
      %v1770 = vpop.f32.mrf.mxu0
      %v1771 = vadd.f32 %v1642, %v1770
      %v1772 = vpop.f32.mrf.mxu0
      %v1773 = vpop.f32.mrf.mxu0
      %v1774 = vadd.f32 %v1642, %v1773
      %v1775 = vpop.f32.mrf.mxu0
      %1776 = vdwg.mxu0
      %v1777 = vadd.f32 %v578, %v1715
      %v1778 = vadd.f32 %v579, %v1718
      %v1779 = vadd.f32 %v580, %v1723
      %v1780 = vadd.f32 %v581, %v1726
      %v1781 = vadd.f32 %v582, %v1731
      %v1782 = vadd.f32 %v583, %v1734
      %v1783 = vadd.f32 %v584, %v1739
      %v1784 = vadd.f32 %v585, %v1742
      %v1785 = vadd.f32 %v586, %v1747
      %v1786 = vadd.f32 %v587, %v1750
      %v1787 = vadd.f32 %v588, %v1755
      %v1788 = vadd.f32 %v589, %v1758
      %v1789 = vadd.f32 %v590, %v1763
      %v1790 = vadd.f32 %v591, %v1766
      %v1791 = vadd.f32 %v592, %v1771
      %v1792 = vadd.f32 %v593, %v1774
      %v1793 = vld [vmem:[%s555] sm:$0xf]
      %v1794 = vld [vmem:[%s555 + $0x4] sm:$0xf]
      %v1795 = vld [vmem:[%s555 + $0x8] sm:$0xf]
      %v1796 = vld [vmem:[%s555 + $0xc] sm:$0xf]
      %v1797 = vld [vmem:[%s540] sm:$0xff]
      %v1798 = vld [vmem:[%s540 + $0x8] sm:$0xff]
      %v1799 = vld [vmem:[%s540 + $0x10] sm:$0xff]
      %v1800 = vld [vmem:[%s540 + $0x18] sm:$0xff]
      %v1805 = vunpack.c.l.b16 %v1793
      %v1806 = vunpack.c.l.b16 %v1794
      %v1807 = vunpack.c.l.b16 %v1795
      %v1808 = vunpack.c.l.b16 %v1796
      %v1809 = vpack.c.b16 %v1806, %v1805
      %v1810 = vpack.c.b16 %v1808, %v1807
      %1813 = vmatprep.subr.bf16.mxu0 0
      %1814 = vmatpush1.bf16.msra.mxu0 0
      %1815 = vmatprep.subr.bf16.mxu0 0
      %1816 = vmatpush1.bf16.msra.mxu0 0
      %1817 = vmatprep.subr.bf16.mxu0 0
      %1818 = vmatpush1.bf16.msra.mxu0 0
      %1819 = vmatprep.subr.bf16.mxu0 0
      %1820 = vmatpush1.bf16.msra.mxu0 0
      %1821 = vmatprep.subr.bf16.mxu0 0
      %1822 = vmatpush1.bf16.msra.mxu0 0
      %1823 = vmatprep.subr.bf16.mxu0 0
      %1824 = vmatpush1.bf16.msra.mxu0 0
      %1825 = vmatprep.subr.bf16.mxu0 0
      %1826 = vmatpush1.bf16.msra.mxu0 %v1810
      %1827 = vmatprep.subr.bf16.mxu0 0
      %1828 = vmatpush1.bf16.msra.mxu0 %v1809
      %1829 = vmatprep.subr.bf16.mxu0 0
      %1830 = vmatpush2.bf16.msra.mxu0 0
      %1831 = vmatprep.subr.bf16.mxu0 0
      %1832 = vmatpush2.bf16.msra.mxu0 0
      %1833 = vmatprep.subr.bf16.mxu0 0
      %1834 = vmatpush2.bf16.msra.mxu0 0
      %1835 = vmatprep.subr.bf16.mxu0 0
      %1836 = vmatpush2.bf16.msra.mxu0 0
      %1837 = vmatprep.subr.bf16.mxu0 0
      %1838 = vmatpush2.bf16.msra.mxu0 0
      %1839 = vmatprep.subr.bf16.mxu0 0
      %1840 = vmatpush2.bf16.msra.mxu0 0
      %1841 = vmatprep.subr.bf16.mxu0 0
      %1842 = vmatpush2.bf16.msra.mxu0 0
      %1843 = vmatprep.subr.bf16.mxu0 0
      %1844 = vmatpush2.bf16.msra.mxu0 0
      %1845 = vmatprep.mubr.bf16.mxu0 0
      %1846 = vmatmul.mubr.bf16.gmra.mxu0 %v1052
      %v1847 = vpop.f32.mrf.mxu0
      %v1848 = vadd.f32 %v1797, %v1847
      %v1849 = vpop.f32.mrf.mxu0
      %v1850 = vpop.f32.mrf.mxu0
      %v1851 = vadd.f32 %v1798, %v1850
      %v1852 = vpop.f32.mrf.mxu0
      %1853 = vmatprep.mubr.bf16.mxu0 0
      %1854 = vmatmul.mubr.bf16.gmra.mxu0 %v1055
      %v1855 = vpop.f32.mrf.mxu0
      %v1856 = vadd.f32 %v1799, %v1855
      %v1857 = vpop.f32.mrf.mxu0
      %v1858 = vpop.f32.mrf.mxu0
      %v1859 = vadd.f32 %v1800, %v1858
      %v1860 = vpop.f32.mrf.mxu0
      %1861 = vdwg.mxu0
      %s1862 = scalar_lea.vmem %s555, 16
      %v1863 = vld [vmem:[%s1862] sm:$0xf]
      %v1864 = vld [vmem:[%s1862 + $0x4] sm:$0xf]
      %v1865 = vld [vmem:[%s1862 + $0x8] sm:$0xf]
      %v1866 = vld [vmem:[%s1862 + $0xc] sm:$0xf]
      %v1867 = vld [vmem:[%s545] sm:$0xff]
      %v1868 = vld [vmem:[%s545 + $0x8] sm:$0xff]
      %v1869 = vld [vmem:[%s545 + $0x10] sm:$0xff]
      %v1870 = vld [vmem:[%s545 + $0x18] sm:$0xff]
      %v1871 = vld [vmem:[%s545 + $0x20] sm:$0xff]
      %v1872 = vld [vmem:[%s545 + $0x28] sm:$0xff]
      %v1873 = vld [vmem:[%s545 + $0x30] sm:$0xff]
      %v1874 = vld [vmem:[%s545 + $0x38] sm:$0xff]
      %v1875 = vld [vmem:[%s545 + $0x40] sm:$0xff]
      %v1876 = vld [vmem:[%s545 + $0x48] sm:$0xff]
      %v1877 = vld [vmem:[%s545 + $0x50] sm:$0xff]
      %v1878 = vld [vmem:[%s545 + $0x58] sm:$0xff]
      %v1879 = vld [vmem:[%s545 + $0x60] sm:$0xff]
      %v1880 = vld [vmem:[%s545 + $0x68] sm:$0xff]
      %v1881 = vld [vmem:[%s545 + $0x70] sm:$0xff]
      %v1882 = vld [vmem:[%s545 + $0x78] sm:$0xff]
      %v1887 = vunpack.c.l.b16 %v1863
      %v1888 = vunpack.c.l.b16 %v1864
      %v1889 = vunpack.c.l.b16 %v1865
      %v1890 = vunpack.c.l.b16 %v1866
      %v1891 = vpack.c.b16 %v1888, %v1887
      %v1892 = vpack.c.b16 %v1890, %v1889
      %1895 = vmatprep.subr.bf16.mxu0 0
      %1896 = vmatpush1.bf16.msra.mxu0 0
      %1897 = vmatprep.subr.bf16.mxu0 0
      %1898 = vmatpush1.bf16.msra.mxu0 0
      %1899 = vmatprep.subr.bf16.mxu0 0
      %1900 = vmatpush1.bf16.msra.mxu0 0
      %1901 = vmatprep.subr.bf16.mxu0 0
      %1902 = vmatpush1.bf16.msra.mxu0 0
      %1903 = vmatprep.subr.bf16.mxu0 0
      %1904 = vmatpush1.bf16.msra.mxu0 0
      %1905 = vmatprep.subr.bf16.mxu0 0
      %1906 = vmatpush1.bf16.msra.mxu0 0
      %1907 = vmatprep.subr.bf16.mxu0 0
      %1908 = vmatpush1.bf16.msra.mxu0 %v1892
      %1909 = vmatprep.subr.bf16.mxu0 0
      %1910 = vmatpush1.bf16.msra.mxu0 %v1891
      %1911 = vmatprep.subr.bf16.mxu0 0
      %1912 = vmatpush2.bf16.msra.mxu0 0
      %1913 = vmatprep.subr.bf16.mxu0 0
      %1914 = vmatpush2.bf16.msra.mxu0 0
      %1915 = vmatprep.subr.bf16.mxu0 0
      %1916 = vmatpush2.bf16.msra.mxu0 0
      %1917 = vmatprep.subr.bf16.mxu0 0
      %1918 = vmatpush2.bf16.msra.mxu0 0
      %1919 = vmatprep.subr.bf16.mxu0 0
      %1920 = vmatpush2.bf16.msra.mxu0 0
      %1921 = vmatprep.subr.bf16.mxu0 0
      %1922 = vmatpush2.bf16.msra.mxu0 0
      %1923 = vmatprep.subr.bf16.mxu0 0
      %1924 = vmatpush2.bf16.msra.mxu0 0
      %1925 = vmatprep.subr.bf16.mxu0 0
      %1926 = vmatpush2.bf16.msra.mxu0 0
      %1927 = vmatprep.mubr.bf16.mxu0 0
      %1928 = vmatmul.mubr.bf16.gmra.mxu0 %v910
      %v1929 = vpop.f32.mrf.mxu0
      %v1930 = vadd.f32 %v1867, %v1929
      %v1931 = vpop.f32.mrf.mxu0
      %v1932 = vpop.f32.mrf.mxu0
      %v1933 = vadd.f32 %v1868, %v1932
      %v1934 = vpop.f32.mrf.mxu0
      %1935 = vmatprep.mubr.bf16.mxu0 0
      %1936 = vmatmul.mubr.bf16.gmra.mxu0 %v913
      %v1937 = vpop.f32.mrf.mxu0
      %v1938 = vadd.f32 %v1869, %v1937
      %v1939 = vpop.f32.mrf.mxu0
      %v1940 = vpop.f32.mrf.mxu0
      %v1941 = vadd.f32 %v1870, %v1940
      %v1942 = vpop.f32.mrf.mxu0
      %1943 = vmatprep.mubr.bf16.mxu0 0
      %1944 = vmatmul.mubr.bf16.gmra.mxu0 %v916
      %v1945 = vpop.f32.mrf.mxu0
      %v1946 = vadd.f32 %v1871, %v1945
      %v1947 = vpop.f32.mrf.mxu0
      %v1948 = vpop.f32.mrf.mxu0
      %v1949 = vadd.f32 %v1872, %v1948
      %v1950 = vpop.f32.mrf.mxu0
      %1951 = vmatprep.mubr.bf16.mxu0 0
      %1952 = vmatmul.mubr.bf16.gmra.mxu0 %v919
      %v1953 = vpop.f32.mrf.mxu0
      %v1954 = vadd.f32 %v1873, %v1953
      %v1955 = vpop.f32.mrf.mxu0
      %v1956 = vpop.f32.mrf.mxu0
      %v1957 = vadd.f32 %v1874, %v1956
      %v1958 = vpop.f32.mrf.mxu0
      %1959 = vmatprep.mubr.bf16.mxu0 0
      %1960 = vmatmul.mubr.bf16.gmra.mxu0 %v922
      %v1961 = vpop.f32.mrf.mxu0
      %v1962 = vadd.f32 %v1875, %v1961
      %v1963 = vpop.f32.mrf.mxu0
      %v1964 = vpop.f32.mrf.mxu0
      %v1965 = vadd.f32 %v1876, %v1964
      %v1966 = vpop.f32.mrf.mxu0
      %1967 = vmatprep.mubr.bf16.mxu0 0
      %1968 = vmatmul.mubr.bf16.gmra.mxu0 %v925
      %v1969 = vpop.f32.mrf.mxu0
      %v1970 = vadd.f32 %v1877, %v1969
      %v1971 = vpop.f32.mrf.mxu0
      %v1972 = vpop.f32.mrf.mxu0
      %v1973 = vadd.f32 %v1878, %v1972
      %v1974 = vpop.f32.mrf.mxu0
      %1975 = vmatprep.mubr.bf16.mxu0 0
      %1976 = vmatmul.mubr.bf16.gmra.mxu0 %v928
      %v1977 = vpop.f32.mrf.mxu0
      %v1978 = vadd.f32 %v1879, %v1977
      %v1979 = vpop.f32.mrf.mxu0
      %v1980 = vpop.f32.mrf.mxu0
      %v1981 = vadd.f32 %v1880, %v1980
      %v1982 = vpop.f32.mrf.mxu0
      %1983 = vmatprep.mubr.bf16.mxu0 0
      %1984 = vmatmul.mubr.bf16.gmra.mxu0 %v931
      %v1985 = vpop.f32.mrf.mxu0
      %v1986 = vadd.f32 %v1881, %v1985
      %v1987 = vpop.f32.mrf.mxu0
      %v1988 = vpop.f32.mrf.mxu0
      %v1989 = vadd.f32 %v1882, %v1988
      %v1990 = vpop.f32.mrf.mxu0
      %1991 = vdwg.mxu0
      %s1992 = scalar_lea.vmem %s555, 32
      %v1993 = vld [vmem:[%s1992] sm:$0xf]
      %v1994 = vld [vmem:[%s1992 + $0x4] sm:$0xf]
      %v1995 = vld [vmem:[%s1992 + $0x8] sm:$0xf]
      %v1996 = vld [vmem:[%s1992 + $0xc] sm:$0xf]
      %v1997 = vld [vmem:[%s563] sm:$0x1]
      %v1999 = vlaneseq
      %v2000 = vshrl.u32 %v1999, 7
      %v2001 = vsub.s32 0, %v2000
      %v2002 = vrot.slane %v1997, %v2001
      %v2008 = vunpack.c.l.b16 %v1993
      %v2009 = vunpack.c.l.b16 %v1994
      %v2010 = vunpack.c.l.b16 %v1995
      %v2011 = vunpack.c.l.b16 %v1996
      %v2012 = vpack.c.b16 %v2009, %v2008
      %v2013 = vpack.c.b16 %v2011, %v2010
      %2016 = vmatprep.subr.bf16.mxu0 0
      %2017 = vmatpush1.bf16.msra.mxu0 0
      %2018 = vmatprep.subr.bf16.mxu0 0
      %2019 = vmatpush1.bf16.msra.mxu0 0
      %2020 = vmatprep.subr.bf16.mxu0 0
      %2021 = vmatpush1.bf16.msra.mxu0 0
      %2022 = vmatprep.subr.bf16.mxu0 0
      %2023 = vmatpush1.bf16.msra.mxu0 0
      %2024 = vmatprep.subr.bf16.mxu0 0
      %2025 = vmatpush1.bf16.msra.mxu0 0
      %2026 = vmatprep.subr.bf16.mxu0 0
      %2027 = vmatpush1.bf16.msra.mxu0 0
      %2028 = vmatprep.subr.bf16.mxu0 0
      %2029 = vmatpush1.bf16.msra.mxu0 %v2013
      %2030 = vmatprep.subr.bf16.mxu0 0
      %2031 = vmatpush1.bf16.msra.mxu0 %v2012
      %2032 = vmatprep.subr.bf16.mxu0 0
      %2033 = vmatpush2.bf16.msra.mxu0 0
      %2034 = vmatprep.subr.bf16.mxu0 0
      %2035 = vmatpush2.bf16.msra.mxu0 0
      %2036 = vmatprep.subr.bf16.mxu0 0
      %2037 = vmatpush2.bf16.msra.mxu0 0
      %2038 = vmatprep.subr.bf16.mxu0 0
      %2039 = vmatpush2.bf16.msra.mxu0 0
      %2040 = vmatprep.subr.bf16.mxu0 0
      %2041 = vmatpush2.bf16.msra.mxu0 0
      %2042 = vmatprep.subr.bf16.mxu0 0
      %2043 = vmatpush2.bf16.msra.mxu0 0
      %2044 = vmatprep.subr.bf16.mxu0 0
      %2045 = vmatpush2.bf16.msra.mxu0 0
      %2046 = vmatprep.subr.bf16.mxu0 0
      %2047 = vmatpush2.bf16.msra.mxu0 0
      %2048 = vmatprep.mubr.bf16.mxu0 0
      %2049 = vmatmul.mubr.bf16.gmra.mxu0 %v910
      %v2050 = vpop.f32.mrf.mxu0
      %v2051 = vadd.f32 %v2002, %v2050
      %v2052 = vpop.f32.mrf.mxu0
      %v2053 = vpop.f32.mrf.mxu0
      %v2054 = vadd.f32 %v2002, %v2053
      %v2055 = vpop.f32.mrf.mxu0
      %2056 = vmatprep.mubr.bf16.mxu0 0
      %2057 = vmatmul.mubr.bf16.gmra.mxu0 %v913
      %v2058 = vpop.f32.mrf.mxu0
      %v2059 = vadd.f32 %v2002, %v2058
      %v2060 = vpop.f32.mrf.mxu0
      %v2061 = vpop.f32.mrf.mxu0
      %v2062 = vadd.f32 %v2002, %v2061
      %v2063 = vpop.f32.mrf.mxu0
      %2064 = vmatprep.mubr.bf16.mxu0 0
      %2065 = vmatmul.mubr.bf16.gmra.mxu0 %v916
      %v2066 = vpop.f32.mrf.mxu0
      %v2067 = vadd.f32 %v2002, %v2066
      %v2068 = vpop.f32.mrf.mxu0
      %v2069 = vpop.f32.mrf.mxu0
      %v2070 = vadd.f32 %v2002, %v2069
      %v2071 = vpop.f32.mrf.mxu0
      %2072 = vmatprep.mubr.bf16.mxu0 0
      %2073 = vmatmul.mubr.bf16.gmra.mxu0 %v919
      %v2074 = vpop.f32.mrf.mxu0
      %v2075 = vadd.f32 %v2002, %v2074
      %v2076 = vpop.f32.mrf.mxu0
      %v2077 = vpop.f32.mrf.mxu0
      %v2078 = vadd.f32 %v2002, %v2077
      %v2079 = vpop.f32.mrf.mxu0
      %2080 = vmatprep.mubr.bf16.mxu0 0
      %2081 = vmatmul.mubr.bf16.gmra.mxu0 %v922
      %v2082 = vpop.f32.mrf.mxu0
      %v2083 = vadd.f32 %v2002, %v2082
      %v2084 = vpop.f32.mrf.mxu0
      %v2085 = vpop.f32.mrf.mxu0
      %v2086 = vadd.f32 %v2002, %v2085
      %v2087 = vpop.f32.mrf.mxu0
      %2088 = vmatprep.mubr.bf16.mxu0 0
      %2089 = vmatmul.mubr.bf16.gmra.mxu0 %v925
      %v2090 = vpop.f32.mrf.mxu0
      %v2091 = vadd.f32 %v2002, %v2090
      %v2092 = vpop.f32.mrf.mxu0
      %v2093 = vpop.f32.mrf.mxu0
      %v2094 = vadd.f32 %v2002, %v2093
      %v2095 = vpop.f32.mrf.mxu0
      %2096 = vmatprep.mubr.bf16.mxu0 0
      %2097 = vmatmul.mubr.bf16.gmra.mxu0 %v928
      %v2098 = vpop.f32.mrf.mxu0
      %v2099 = vadd.f32 %v2002, %v2098
      %v2100 = vpop.f32.mrf.mxu0
      %v2101 = vpop.f32.mrf.mxu0
      %v2102 = vadd.f32 %v2002, %v2101
      %v2103 = vpop.f32.mrf.mxu0
      %2104 = vmatprep.mubr.bf16.mxu0 0
      %2105 = vmatmul.mubr.bf16.gmra.mxu0 %v931
      %v2106 = vpop.f32.mrf.mxu0
      %v2107 = vadd.f32 %v2002, %v2106
      %v2108 = vpop.f32.mrf.mxu0
      %v2109 = vpop.f32.mrf.mxu0
      %v2110 = vadd.f32 %v2002, %v2109
      %v2111 = vpop.f32.mrf.mxu0
      %2112 = vdwg.mxu0
      %s2113 = scalar_lea.vmem %s555, 48
      %v2114 = vld [vmem:[%s2113] sm:$0xf]
      %v2115 = vld [vmem:[%s2113 + $0x4] sm:$0xf]
      %v2116 = vld [vmem:[%s2113 + $0x8] sm:$0xf]
      %v2117 = vld [vmem:[%s2113 + $0xc] sm:$0xf]
      %s2118 = scalar_lea.vmem %s563, 1
      %v2119 = vld [vmem:[%s2118] sm:$0x1]
      %v2120 = vpack.c.bf16 %v1851, %v1848
      %v2121 = vpack.c.bf16 %v1859, %v1856
      %v2122 = vpack.c.bf16 %v1933, %v1930
      %v2123 = vpack.c.bf16 %v1941, %v1938
      %v2124 = vpack.c.bf16 %v1949, %v1946
      %v2125 = vpack.c.bf16 %v1957, %v1954
      %v2126 = vpack.c.bf16 %v1965, %v1962
      %v2127 = vpack.c.bf16 %v1973, %v1970
      %v2128 = vpack.c.bf16 %v1981, %v1978
      %v2129 = vpack.c.bf16 %v1989, %v1986
      %v2131 = vsel %vm908, %v2120, 0
      %v2134 = vsel %vm908, %v2121, 0
      %v2137 = vsel %vm908, %v2122, 0
      %v2140 = vsel %vm908, %v2123, 0
      %v2143 = vsel %vm908, %v2124, 0
      %v2146 = vsel %vm908, %v2125, 0
      %v2149 = vsel %vm908, %v2126, 0
      %v2152 = vsel %vm908, %v2127, 0
      %v2155 = vsel %vm908, %v2128, 0
      %v2158 = vsel %vm908, %v2129, 0
      %2160 = vmatprep.subr.bf16.mxu0 0
      %2161 = vmatpush1.bf16.xpose.msra.mxu0 %v2158
      %2162 = vmatprep.subr.bf16.mxu0 0
      %2163 = vmatpush1.bf16.xpose.msra.mxu0 %v2155
      %2164 = vmatprep.subr.bf16.mxu0 0
      %2165 = vmatpush1.bf16.xpose.msra.mxu0 %v2152
      %2166 = vmatprep.subr.bf16.mxu0 0
      %2167 = vmatpush1.bf16.xpose.msra.mxu0 %v2149
      %2168 = vmatprep.subr.bf16.mxu0 0
      %2169 = vmatpush1.bf16.xpose.msra.mxu0 %v2146
      %2170 = vmatprep.subr.bf16.mxu0 0
      %2171 = vmatpush1.bf16.xpose.msra.mxu0 %v2143
      %2172 = vmatprep.subr.bf16.mxu0 0
      %2173 = vmatpush1.bf16.xpose.msra.mxu0 %v2140
      %2174 = vmatprep.subr.bf16.mxu0 0
      %2175 = vmatpush1.bf16.xpose.msra.mxu0 %v2137
      %2176 = vmatprep.subr.bf16.mxu0 0
      %2177 = vmatpush2.bf16.xpose.msra.mxu0 0
      %2178 = vmatprep.subr.bf16.mxu0 0
      %2179 = vmatpush2.bf16.xpose.msra.mxu0 0
      %2180 = vmatprep.subr.bf16.mxu0 0
      %2181 = vmatpush2.bf16.xpose.msra.mxu0 0
      %2182 = vmatprep.subr.bf16.mxu0 0
      %2183 = vmatpush2.bf16.xpose.msra.mxu0 0
      %2184 = vmatprep.subr.bf16.mxu0 0
      %2185 = vmatpush2.bf16.xpose.msra.mxu0 0
      %2186 = vmatprep.subr.bf16.mxu0 0
      %2187 = vmatpush2.bf16.xpose.msra.mxu0 0
      %2188 = vmatprep.subr.bf16.mxu0 0
      %2189 = vmatpush2.bf16.xpose.msra.mxu0 0
      %2190 = vmatprep.subr.bf16.mxu0 0
      %2191 = vmatpush2.bf16.xpose.msra.mxu0 0
      %2192 = vmatprep.mubr.bf16.mxu0 0
      %2193 = vmatmul.mubr.bf16.gmra.mxu0 %v2131
      %v2194 = vpop.f32.mrf.mxu0
      %v2195 = vadd.f32 %v872, %v2194
      %v2196 = vpop.f32.mrf.mxu0
      %v2197 = vpop.f32.mrf.mxu0
      %v2198 = vadd.f32 %v873, %v2197
      %v2199 = vpop.f32.mrf.mxu0
      %2200 = vmatprep.mubr.bf16.mxu0 0
      %2201 = vmatmul.mubr.bf16.gmra.mxu0 %v2134
      %v2202 = vpop.f32.mrf.mxu0
      %v2203 = vadd.f32 %v874, %v2202
      %v2204 = vpop.f32.mrf.mxu0
      %v2205 = vpop.f32.mrf.mxu0
      %v2206 = vadd.f32 %v875, %v2205
      %v2207 = vpop.f32.mrf.mxu0
      %2208 = vdwg.mxu0
      %2209 = vmax.xlane.f32.xlu0 %v2195
      %v2210 = vpop.xlane.xlu0 %2209
      %2211 = vmax.xlane.f32.xlu0 %v2198
      %v2212 = vpop.xlane.xlu0 %2211
      %2213 = vmax.xlane.f32.xlu0 %v2203
      %v2214 = vpop.xlane.xlu0 %2213
      %2215 = vmax.xlane.f32.xlu0 %v2206
      %v2216 = vpop.xlane.xlu0 %2215
      %v2217 = vsub.f32 %v2195, %v2210
      %v2218 = vsub.f32 %v2198, %v2212
      %v2219 = vsub.f32 %v2203, %v2214
      %v2220 = vsub.f32 %v2206, %v2216
      %v2221 = vmul.f32 %v2217, 1.442695
      %v2222 = vpow.pop %v2221
      %v2223 = vmul.f32 %v2218, 1.442695
      %v2224 = vpow.pop %v2223
      %v2225 = vmul.f32 %v2219, 1.442695
      %v2226 = vpow.pop %v2225
      %v2227 = vmul.f32 %v2220, 1.442695
      %v2228 = vpow.pop %v2227
      %2229 = vadd.xlane.f32.xlu0 %v2222
      %v2230 = vpop.xlane.xlu0 %2229
      %2231 = vadd.xlane.f32.xlu0 %v2224
      %v2232 = vpop.xlane.xlu0 %2231
      %2233 = vadd.xlane.f32.xlu0 %v2226
      %v2234 = vpop.xlane.xlu0 %2233
      %2235 = vadd.xlane.f32.xlu0 %v2228
      %v2236 = vpop.xlane.xlu0 %2235
      %v2237 = vrcp.pop %v2230
      %v2238 = vrcp.pop %v2232
      %v2239 = vrcp.pop %v2234
      %v2240 = vrcp.pop %v2236
      %v2241 = vpack.c.bf16 %v2224, %v2222
      %v2242 = vpack.c.bf16 %v2228, %v2226
      %v2243 = vpack.c.bf16 %v2054, %v2051
      %v2244 = vpack.c.bf16 %v2062, %v2059
      %v2245 = vpack.c.bf16 %v2070, %v2067
      %v2246 = vpack.c.bf16 %v2078, %v2075
      %v2247 = vpack.c.bf16 %v2086, %v2083
      %v2248 = vpack.c.bf16 %v2094, %v2091
      %v2249 = vpack.c.bf16 %v2102, %v2099
      %v2250 = vpack.c.bf16 %v2110, %v2107
      %2251 = vmatprep.subr.bf16.mxu0 0
      %2252 = vmatpush1.bf16.msra.mxu0 %v2250
      %2253 = vmatprep.subr.bf16.mxu0 0
      %2254 = vmatpush1.bf16.msra.mxu0 %v2249
      %2255 = vmatprep.subr.bf16.mxu0 0
      %2256 = vmatpush1.bf16.msra.mxu0 %v2248
      %2257 = vmatprep.subr.bf16.mxu0 0
      %2258 = vmatpush1.bf16.msra.mxu0 %v2247
      %2259 = vmatprep.subr.bf16.mxu0 0
      %2260 = vmatpush1.bf16.msra.mxu0 %v2246
      %2261 = vmatprep.subr.bf16.mxu0 0
      %2262 = vmatpush1.bf16.msra.mxu0 %v2245
      %2263 = vmatprep.subr.bf16.mxu0 0
      %2264 = vmatpush1.bf16.msra.mxu0 %v2244
      %2265 = vmatprep.subr.bf16.mxu0 0
      %2266 = vmatpush1.bf16.msra.mxu0 %v2243
      %2267 = vmatprep.subr.bf16.mxu0 0
      %2268 = vmatpush2.bf16.msra.mxu0 0
      %2269 = vmatprep.subr.bf16.mxu0 0
      %2270 = vmatpush2.bf16.msra.mxu0 0
      %2271 = vmatprep.subr.bf16.mxu0 0
      %2272 = vmatpush2.bf16.msra.mxu0 0
      %2273 = vmatprep.subr.bf16.mxu0 0
      %2274 = vmatpush2.bf16.msra.mxu0 0
      %2275 = vmatprep.subr.bf16.mxu0 0
      %2276 = vmatpush2.bf16.msra.mxu0 0
      %2277 = vmatprep.subr.bf16.mxu0 0
      %2278 = vmatpush2.bf16.msra.mxu0 0
      %2279 = vmatprep.subr.bf16.mxu0 0
      %2280 = vmatpush2.bf16.msra.mxu0 0
      %2281 = vmatprep.subr.bf16.mxu0 0
      %2282 = vmatpush2.bf16.msra.mxu0 0
      %2283 = vmatprep.mubr.bf16.mxu0 0
      %2284 = vmatmul.mubr.bf16.gmra.mxu0 %v2241
      %v2285 = vpop.f32.mrf.mxu0
      %v2286 = vadd.f32 0.0, %v2285
      %v2287 = vpop.f32.mrf.mxu0
      %v2288 = vpop.f32.mrf.mxu0
      %v2289 = vadd.f32 0.0, %v2288
      %v2290 = vpop.f32.mrf.mxu0
      %2291 = vmatprep.mubr.bf16.mxu0 0
      %2292 = vmatmul.mubr.bf16.gmra.mxu0 %v2242
      %v2293 = vpop.f32.mrf.mxu0
      %v2294 = vadd.f32 0.0, %v2293
      %v2295 = vpop.f32.mrf.mxu0
      %v2296 = vpop.f32.mrf.mxu0
      %v2297 = vadd.f32 0.0, %v2296
      %v2298 = vpop.f32.mrf.mxu0
      %2299 = vdwg.mxu0
      %v2300 = vmul.f32 %v2286, %v2237
      %v2301 = vmul.f32 %v2289, %v2238
      %v2302 = vmul.f32 %v2294, %v2239
      %v2303 = vmul.f32 %v2297, %v2240
      %v2304 = vpack.c.bf16 %v2301, %v2300
      %v2305 = vpack.c.bf16 %v2303, %v2302
      %v2307 = vlaneseq
      %v2308 = vshrl.u32 %v2307, 7
      %v2309 = vsub.s32 0, %v2308
      %v2310 = vrot.slane %v2119, %v2309
      %v2316 = vunpack.c.l.b16 %v2114
      %v2317 = vunpack.c.l.b16 %v2115
      %v2318 = vunpack.c.l.b16 %v2116
      %v2319 = vunpack.c.l.b16 %v2117
      %v2320 = vpack.c.b16 %v2317, %v2316
      %v2321 = vpack.c.b16 %v2319, %v2318
      %v2325 = vsel %vm908, %v2304, 0
      %v2328 = vsel %vm908, %v2305, 0
      %2330 = vmatprep.subr.bf16.mxu0 0
      %2331 = vmatpush1.bf16.msra.mxu0 0
      %2332 = vmatprep.subr.bf16.mxu0 0
      %2333 = vmatpush1.bf16.msra.mxu0 0
      %2334 = vmatprep.subr.bf16.mxu0 0
      %2335 = vmatpush1.bf16.msra.mxu0 0
      %2336 = vmatprep.subr.bf16.mxu0 0
      %2337 = vmatpush1.bf16.msra.mxu0 0
      %2338 = vmatprep.subr.bf16.mxu0 0
      %2339 = vmatpush1.bf16.msra.mxu0 0
      %2340 = vmatprep.subr.bf16.mxu0 0
      %2341 = vmatpush1.bf16.msra.mxu0 0
      %2342 = vmatprep.subr.bf16.mxu0 0
      %2343 = vmatpush1.bf16.msra.mxu0 %v2321
      %2344 = vmatprep.subr.bf16.mxu0 0
      %2345 = vmatpush1.bf16.msra.mxu0 %v2320
      %2346 = vmatprep.subr.bf16.mxu0 0
      %2347 = vmatpush2.bf16.msra.mxu0 0
      %2348 = vmatprep.subr.bf16.mxu0 0
      %2349 = vmatpush2.bf16.msra.mxu0 0
      %2350 = vmatprep.subr.bf16.mxu0 0
      %2351 = vmatpush2.bf16.msra.mxu0 0
      %2352 = vmatprep.subr.bf16.mxu0 0
      %2353 = vmatpush2.bf16.msra.mxu0 0
      %2354 = vmatprep.subr.bf16.mxu0 0
      %2355 = vmatpush2.bf16.msra.mxu0 0
      %2356 = vmatprep.subr.bf16.mxu0 0
      %2357 = vmatpush2.bf16.msra.mxu0 0
      %2358 = vmatprep.subr.bf16.mxu0 0
      %2359 = vmatpush2.bf16.msra.mxu0 0
      %2360 = vmatprep.subr.bf16.mxu0 0
      %2361 = vmatpush2.bf16.msra.mxu0 0
      %2362 = vmatprep.mubr.bf16.mxu0 0
      %2363 = vmatmul.mubr.bf16.gmra.mxu0 %v2325
      %v2364 = vpop.f32.mrf.mxu0
      %v2365 = vadd.f32 %v2310, %v2364
      %v2366 = vpop.f32.mrf.mxu0
      %v2367 = vpop.f32.mrf.mxu0
      %v2368 = vadd.f32 %v2310, %v2367
      %v2369 = vpop.f32.mrf.mxu0
      %2370 = vmatprep.mubr.bf16.mxu0 0
      %2371 = vmatmul.mubr.bf16.gmra.mxu0 %v2328
      %v2372 = vpop.f32.mrf.mxu0
      %v2373 = vadd.f32 %v2310, %v2372
      %v2374 = vpop.f32.mrf.mxu0
      %v2375 = vpop.f32.mrf.mxu0
      %v2376 = vadd.f32 %v2310, %v2375
      %v2377 = vpop.f32.mrf.mxu0
      %2378 = vdwg.mxu0
      %v2379 = vadd.f32 %v594, %v2365
      %v2380 = vadd.f32 %v595, %v2368
      %v2381 = vadd.f32 %v596, %v2373
      %v2382 = vadd.f32 %v597, %v2376
      %2383 = vst.msk [vmem:[%s568] sm:$0xff] %vm908, %v1777
      %2384 = vst.msk [vmem:[%s568 + $0x8] sm:$0xff] %vm908, %v1778
      %2385 = vst.msk [vmem:[%s568 + $0x10] sm:$0xff] %vm908, %v1779
      %2386 = vst.msk [vmem:[%s568 + $0x18] sm:$0xff] %vm908, %v1780
      %2387 = vst.msk [vmem:[%s568 + $0x20] sm:$0xff] %vm908, %v1781
      %2388 = vst.msk [vmem:[%s568 + $0x28] sm:$0xff] %vm908, %v1782
      %2389 = vst.msk [vmem:[%s568 + $0x30] sm:$0xff] %vm908, %v1783
      %2390 = vst.msk [vmem:[%s568 + $0x38] sm:$0xff] %vm908, %v1784
      %2391 = vst.msk [vmem:[%s568 + $0x40] sm:$0xff] %vm908, %v1785
      %2392 = vst.msk [vmem:[%s568 + $0x48] sm:$0xff] %vm908, %v1786
      %2393 = vst.msk [vmem:[%s568 + $0x50] sm:$0xff] %vm908, %v1787
      %2394 = vst.msk [vmem:[%s568 + $0x58] sm:$0xff] %vm908, %v1788
      %2395 = vst.msk [vmem:[%s568 + $0x60] sm:$0xff] %vm908, %v1789
      %2396 = vst.msk [vmem:[%s568 + $0x68] sm:$0xff] %vm908, %v1790
      %2397 = vst.msk [vmem:[%s568 + $0x70] sm:$0xff] %vm908, %v1791
      %2398 = vst.msk [vmem:[%s568 + $0x78] sm:$0xff] %vm908, %v1792
      %2399 = vst.msk [vmem:[%s573] sm:$0xff] %vm908, %v2379
      %2400 = vst.msk [vmem:[%s573 + $0x8] sm:$0xff] %vm908, %v2380
      %2401 = vst.msk [vmem:[%s573 + $0x10] sm:$0xff] %vm908, %v2381
      %2402 = vst.msk [vmem:[%s573 + $0x18] sm:$0xff] %vm908, %v2382
      %p2403 = scmp.lt.s32.totalorder %s23, 1
      %s2404 = scalar_select %p2403, %s23, 1
      %s2405 = smul.addr %s2404, 16
      %s2406 = smul.addr %s2405, 8
      %s2407 = scalar_lea.vmem %s10, %s2406
      %p2408 = scmp.lt.s32.totalorder %s23, 1
      %s2409 = scalar_select %p2408, %s23, 1
      %s2410 = smul.addr %s2409, 4
      %s2411 = smul.addr %s2410, 8
      %s2412 = scalar_lea.vmem %s11, %s2411
      // Predicated region
      $region61: #{forward.3} parent=59 // pred_check
        %p2413 = pneg %p301
      $region62: #{forward.3} parent=59 // pred_check_branch
        %2415 = sbr.rel (%p2413) target = $region64
      $region63: #{forward.3} parent=59 // pred_region
        _
      $region64: #{forward.3} parent=59 // pred_fallthru
        _
      // Predicated region
      $region65: #{forward.3} parent=59 // pred_check
        %p2416 = pneg %p327
      $region66: #{forward.3} parent=59 // pred_check_branch
        %2418 = sbr.rel (%p2416) target = $region68
      $region67: #{forward.3} parent=59 // pred_region
        _
      $region68: #{forward.3} parent=59 // pred_fallthru
        _
    $region60: #{forward.3} parent=5 // pred_fallthru
      _
    %p2419 = scmp.le.s32.totalorder 2, %s18
    // Predicated region
    $region69: #{forward.3} parent=5 // pred_check
      %p2420 = pneg %p2419
    $region70: #{forward.3} parent=5 // pred_check_branch
      %2422 = sbr.rel (%p2420) target = $region72
    $region71: #{forward.3} parent=5 // pred_region
      %s2423 = ssub.s32 %s18, 2
      // Predicated region
      $region73: #{forward.3} parent=71 // pred_check
        %p2424 = pneg %p307
      $region74: #{forward.3} parent=71 // pred_check_branch
        %2426 = sbr.rel (%p2424) target = $region76
      $region75: #{forward.3} parent=71 // pred_region
        %p2427 = scmp.lt.s32.totalorder %s24, 1
        %s2428 = scalar_select %p2427, %s24, 1
        %s2429 = smul.addr %s2428, 16
        %s2430 = smul.addr %s2429, 8
        %s2431 = scalar_lea.vmem %s10, %s2430
      $region76: #{forward.3} parent=71 // pred_fallthru
        _
      // Predicated region
      $region77: #{forward.3} parent=71 // pred_check
        %p2432 = pneg %p333
      $region78: #{forward.3} parent=71 // pred_check_branch
        %2434 = sbr.rel (%p2432) target = $region80
      $region79: #{forward.3} parent=71 // pred_region
        %p2435 = scmp.lt.s32.totalorder %s24, 1
        %s2436 = scalar_select %p2435, %s24, 1
        %s2437 = smul.addr %s2436, 4
        %s2438 = smul.addr %s2437, 8
        %s2439 = scalar_lea.vmem %s11, %s2438
      $region80: #{forward.3} parent=71 // pred_fallthru
        _
    $region72: #{forward.3} parent=5 // pred_fallthru
      _
  $region6: #{forward.3} parent=0 // loop_footer
    %s22 = sadd.s32 1, %s18
  $region7: #{forward.3} parent=0 // loop_footer_branch
    %17 = sbr.rel target = $region3
  $region8: #{forward.3} parent=0 // loop_exit
    _

// kernel: forward.2
$region0: #{forward.2}
  #allocation0 [shape = 'u32[]', space=smem, size = 0x4, offset = 0x4, fixed_abs, tag = 'smem constant byte address 0x4 - core index']
  #allocation1 [shape = 'u32[144,128]{1,0:T(1,128)}', space=vmem, size = 0x12000, scoped, tag = 'internal scratch']
  #allocation2 [shape = 'f32[160,32]{1,0:T(8,128)}', space=vmem, size = 0x14000, scoped, tag = 'scratch operand']
  #allocation3 [shape = 'f32[160,160]{1,0:T(8,128)}', space=vmem, size = 0x28000, scoped, tag = 'scratch operand']
  %s0 = inlined_call_operand.vmem [shape: f32[2,160,32], index: 0, kind: input, shape index: {}, may-alias: {0,9}]
  %s1 = inlined_call_operand.vmem [shape: f32[2,2,160,32], index: 1, kind: input, shape index: {}]
  %s2 = inlined_call_operand.vmem [shape: f32[2,2,160,32], index: 2, kind: input, shape index: {}]
  %s3 = inlined_call_operand.vmem [shape: bf16[2,2,32,32], index: 3, kind: input, shape index: {}]
  %s4 = inlined_call_operand.vmem [shape: bf16[2,2,32,32], index: 4, kind: input, shape index: {}]
  %s5 = inlined_call_operand.vmem [shape: bf16[2,2,32,32], index: 5, kind: input, shape index: {}]
  %s6 = inlined_call_operand.vmem [shape: bf16[2,2,32,32], index: 6, kind: input, shape index: {}]
  %s7 = inlined_call_operand.vmem [shape: f32[2,2,1,32], index: 7, kind: input, shape index: {}]
  %s8 = inlined_call_operand.vmem [shape: f32[2,2,1,32], index: 8, kind: input, shape index: {}]
  %s9 = inlined_call_operand.vmem [shape: f32[2,160,32], index: 9, kind: output, shape index: {}, may-alias: {0,9}]
  %s10 = sld [smem:[#allocation0]]
  $region73: #{forward.2} parent=0
    _
  %s12 = ssub.s32 1, %s10
  %s13 = scalar_select 0, %s12, %s10
  loop: start=0, step=1, limit=6
  $region2: #{forward.2} parent=0 // loop_pre_header
    _
  $region3: #{forward.2} parent=0 // loop_header
    %s15 = sphi 0, %s19
    %p16 = scmp.ge.s32.totalorder %s15, 6
    %s22 = sphi 0, %s34
    %s23 = sphi 0, %s30
    %s24 = sphi 0, %s22
    %s25 = sphi 0, %s23
    %s26 = sphi 0, %s24
    %s27 = sphi 0, %s25
    %s37 = sphi 0, %s39
    %s40 = sphi 0, %s37
    %s41 = sphi 0, %s40
    %s57 = sphi 0, %s41
    %s65 = sphi 0, %s67
    %s68 = sphi 0, %s65
    %s69 = sphi 0, %s68
    %s85 = sphi 0, %s69
    %s93 = sphi 0, %s95
    %s96 = sphi 0, %s93
    %s97 = sphi 0, %s96
    %s113 = sphi 0, %s97
    %s121 = sphi 0, %s123
    %s124 = sphi 0, %s121
    %s125 = sphi 0, %s124
    %s141 = sphi 0, %s125
    %s149 = sphi 0, %s151
    %s152 = sphi 0, %s149
    %s153 = sphi 0, %s152
    %s169 = sphi 0, %s153
    %s177 = sphi 0, %s179
    %s180 = sphi 0, %s177
    %s181 = sphi 0, %s180
    %s197 = sphi 0, %s181
    %s205 = sphi 0, %s207
    %s208 = sphi 0, %s205
    %s209 = sphi 0, %s208
    %s225 = sphi 0, %s209
    %s233 = sphi 0, %s235
    %s236 = sphi 0, %s233
    %s237 = sphi 0, %s236
    %s253 = sphi 0, %s237
    %s261 = sphi 0, %s263
    %s264 = sphi 0, %s261
    %s265 = sphi 0, %s264
    %s281 = sphi 0, %s265
    %s287 = sphi 0, %s289
    %s290 = sphi 0, %s287
    %s291 = sphi 0, %s290
    %s307 = sphi 0, %s291
  $region4: #{forward.2} parent=0 // loop_header_branch
    %18 = sbr.rel (%p16) target = $region8
  $region5: #{forward.2} parent=0 // loop_body
    %s20 = ssub.s32 %s15, 1
    %s21 = ssub.s32 %s15, 2
    %s28 = sadd.s32 1, %s23
    %p29 = scmp.ge.s32.totalorder %s28, 2
    %s30 = scalar_select %p29, 0, %s28
    %s31 = sadd.s32 1, %s22
    %s32 = scalar_select %p29, %s31, %s22
    %p33 = scmp.ge.s32.totalorder %s32, 2
    %s34 = scalar_select %p33, 0, %s32
    %s35 = ssub.s32 %s22, %s34
    %p36 = scmp.eq.s32.totalorder %s35, 0
    %s38 = sadd.s32 %s37, 1
    %s39 = scalar_select %p36, %s37, %s38
    %p42 = pneg %p36
    %p43 = scmp.eq.s32.totalorder %s15, 3
    %p44 = por %p42, %p43
    %p45 = scmp.ne.s32.totalorder %s37, %s40
    %p46 = scmp.eq.s32.totalorder %s15, 0
    %p47 = por %p45, %p46
    %p48 = scmp.ne.s32.totalorder %s37, %s40
    %p49 = scmp.eq.s32.totalorder %s20, 3
    %p50 = por %p48, %p49
    %p51 = scmp.ne.s32.totalorder %s40, %s41
    %p52 = scmp.eq.s32.totalorder %s20, 0
    %p53 = por %p51, %p52
    %p54 = scmp.ne.s32.totalorder %s40, %s41
    %p55 = scmp.eq.s32.totalorder %s21, 3
    %p56 = por %p54, %p55
    %p58 = scmp.ne.s32.totalorder %s41, %s57
    %p59 = scmp.eq.s32.totalorder %s21, 0
    %p60 = por %p58, %p59
    %s61 = ssub.s32 %s22, %s34
    %s62 = ssub.s32 %s23, %s30
    %s63 = sor.u32 %s61, %s62
    %p64 = scmp.eq.s32.totalorder %s63, 0
    %s66 = sadd.s32 %s65, 1
    %s67 = scalar_select %p64, %s65, %s66
    %p70 = pneg %p64
    %p71 = scmp.eq.s32.totalorder %s15, 3
    %p72 = por %p70, %p71
    %p73 = scmp.ne.s32.totalorder %s65, %s68
    %p74 = scmp.eq.s32.totalorder %s15, 0
    %p75 = por %p73, %p74
    %p76 = scmp.ne.s32.totalorder %s65, %s68
    %p77 = scmp.eq.s32.totalorder %s20, 3
    %p78 = por %p76, %p77
    %p79 = scmp.ne.s32.totalorder %s68, %s69
    %p80 = scmp.eq.s32.totalorder %s20, 0
    %p81 = por %p79, %p80
    %p82 = scmp.ne.s32.totalorder %s68, %s69
    %p83 = scmp.eq.s32.totalorder %s21, 3
    %p84 = por %p82, %p83
    %p86 = scmp.ne.s32.totalorder %s69, %s85
    %p87 = scmp.eq.s32.totalorder %s21, 0
    %p88 = por %p86, %p87
    %s89 = ssub.s32 %s22, %s34
    %s90 = ssub.s32 %s23, %s30
    %s91 = sor.u32 %s89, %s90
    %p92 = scmp.eq.s32.totalorder %s91, 0
    %s94 = sadd.s32 %s93, 1
    %s95 = scalar_select %p92, %s93, %s94
    %p98 = pneg %p92
    %p99 = scmp.eq.s32.totalorder %s15, 3
    %p100 = por %p98, %p99
    %p101 = scmp.ne.s32.totalorder %s93, %s96
    %p102 = scmp.eq.s32.totalorder %s15, 0
    %p103 = por %p101, %p102
    %p104 = scmp.ne.s32.totalorder %s93, %s96
    %p105 = scmp.eq.s32.totalorder %s20, 3
    %p106 = por %p104, %p105
    %p107 = scmp.ne.s32.totalorder %s96, %s97
    %p108 = scmp.eq.s32.totalorder %s20, 0
    %p109 = por %p107, %p108
    %p110 = scmp.ne.s32.totalorder %s96, %s97
    %p111 = scmp.eq.s32.totalorder %s21, 3
    %p112 = por %p110, %p111
    %p114 = scmp.ne.s32.totalorder %s97, %s113
    %p115 = scmp.eq.s32.totalorder %s21, 0
    %p116 = por %p114, %p115
    %s117 = ssub.s32 %s22, %s34
    %s118 = ssub.s32 %s23, %s30
    %s119 = sor.u32 %s117, %s118
    %p120 = scmp.eq.s32.totalorder %s119, 0
    %s122 = sadd.s32 %s121, 1
    %s123 = scalar_select %p120, %s121, %s122
    %p126 = pneg %p120
    %p127 = scmp.eq.s32.totalorder %s15, 3
    %p128 = por %p126, %p127
    %p129 = scmp.ne.s32.totalorder %s121, %s124
    %p130 = scmp.eq.s32.totalorder %s15, 0
    %p131 = por %p129, %p130
    %p132 = scmp.ne.s32.totalorder %s121, %s124
    %p133 = scmp.eq.s32.totalorder %s20, 3
    %p134 = por %p132, %p133
    %p135 = scmp.ne.s32.totalorder %s124, %s125
    %p136 = scmp.eq.s32.totalorder %s20, 0
    %p137 = por %p135, %p136
    %p138 = scmp.ne.s32.totalorder %s124, %s125
    %p139 = scmp.eq.s32.totalorder %s21, 3
    %p140 = por %p138, %p139
    %p142 = scmp.ne.s32.totalorder %s125, %s141
    %p143 = scmp.eq.s32.totalorder %s21, 0
    %p144 = por %p142, %p143
    %s145 = ssub.s32 %s22, %s34
    %s146 = ssub.s32 %s23, %s30
    %s147 = sor.u32 %s145, %s146
    %p148 = scmp.eq.s32.totalorder %s147, 0
    %s150 = sadd.s32 %s149, 1
    %s151 = scalar_select %p148, %s149, %s150
    %p154 = pneg %p148
    %p155 = scmp.eq.s32.totalorder %s15, 3
    %p156 = por %p154, %p155
    %p157 = scmp.ne.s32.totalorder %s149, %s152
    %p158 = scmp.eq.s32.totalorder %s15, 0
    %p159 = por %p157, %p158
    %p160 = scmp.ne.s32.totalorder %s149, %s152
    %p161 = scmp.eq.s32.totalorder %s20, 3
    %p162 = por %p160, %p161
    %p163 = scmp.ne.s32.totalorder %s152, %s153
    %p164 = scmp.eq.s32.totalorder %s20, 0
    %p165 = por %p163, %p164
    %p166 = scmp.ne.s32.totalorder %s152, %s153
    %p167 = scmp.eq.s32.totalorder %s21, 3
    %p168 = por %p166, %p167
    %p170 = scmp.ne.s32.totalorder %s153, %s169
    %p171 = scmp.eq.s32.totalorder %s21, 0
    %p172 = por %p170, %p171
    %s173 = ssub.s32 %s22, %s34
    %s174 = ssub.s32 %s23, %s30
    %s175 = sor.u32 %s173, %s174
    %p176 = scmp.eq.s32.totalorder %s175, 0
    %s178 = sadd.s32 %s177, 1
    %s179 = scalar_select %p176, %s177, %s178
    %p182 = pneg %p176
    %p183 = scmp.eq.s32.totalorder %s15, 3
    %p184 = por %p182, %p183
    %p185 = scmp.ne.s32.totalorder %s177, %s180
    %p186 = scmp.eq.s32.totalorder %s15, 0
    %p187 = por %p185, %p186
    %p188 = scmp.ne.s32.totalorder %s177, %s180
    %p189 = scmp.eq.s32.totalorder %s20, 3
    %p190 = por %p188, %p189
    %p191 = scmp.ne.s32.totalorder %s180, %s181
    %p192 = scmp.eq.s32.totalorder %s20, 0
    %p193 = por %p191, %p192
    %p194 = scmp.ne.s32.totalorder %s180, %s181
    %p195 = scmp.eq.s32.totalorder %s21, 3
    %p196 = por %p194, %p195
    %p198 = scmp.ne.s32.totalorder %s181, %s197
    %p199 = scmp.eq.s32.totalorder %s21, 0
    %p200 = por %p198, %p199
    %s201 = ssub.s32 %s22, %s34
    %s202 = ssub.s32 %s23, %s30
    %s203 = sor.u32 %s201, %s202
    %p204 = scmp.eq.s32.totalorder %s203, 0
    %s206 = sadd.s32 %s205, 1
    %s207 = scalar_select %p204, %s205, %s206
    %p210 = pneg %p204
    %p211 = scmp.eq.s32.totalorder %s15, 3
    %p212 = por %p210, %p211
    %p213 = scmp.ne.s32.totalorder %s205, %s208
    %p214 = scmp.eq.s32.totalorder %s15, 0
    %p215 = por %p213, %p214
    %p216 = scmp.ne.s32.totalorder %s205, %s208
    %p217 = scmp.eq.s32.totalorder %s20, 3
    %p218 = por %p216, %p217
    %p219 = scmp.ne.s32.totalorder %s208, %s209
    %p220 = scmp.eq.s32.totalorder %s20, 0
    %p221 = por %p219, %p220
    %p222 = scmp.ne.s32.totalorder %s208, %s209
    %p223 = scmp.eq.s32.totalorder %s21, 3
    %p224 = por %p222, %p223
    %p226 = scmp.ne.s32.totalorder %s209, %s225
    %p227 = scmp.eq.s32.totalorder %s21, 0
    %p228 = por %p226, %p227
    %s229 = ssub.s32 %s22, %s34
    %s230 = ssub.s32 %s23, %s30
    %s231 = sor.u32 %s229, %s230
    %p232 = scmp.eq.s32.totalorder %s231, 0
    %s234 = sadd.s32 %s233, 1
    %s235 = scalar_select %p232, %s233, %s234
    %p238 = pneg %p232
    %p239 = scmp.eq.s32.totalorder %s15, 3
    %p240 = por %p238, %p239
    %p241 = scmp.ne.s32.totalorder %s233, %s236
    %p242 = scmp.eq.s32.totalorder %s15, 0
    %p243 = por %p241, %p242
    %p244 = scmp.ne.s32.totalorder %s233, %s236
    %p245 = scmp.eq.s32.totalorder %s20, 3
    %p246 = por %p244, %p245
    %p247 = scmp.ne.s32.totalorder %s236, %s237
    %p248 = scmp.eq.s32.totalorder %s20, 0
    %p249 = por %p247, %p248
    %p250 = scmp.ne.s32.totalorder %s236, %s237
    %p251 = scmp.eq.s32.totalorder %s21, 3
    %p252 = por %p250, %p251
    %p254 = scmp.ne.s32.totalorder %s237, %s253
    %p255 = scmp.eq.s32.totalorder %s21, 0
    %p256 = por %p254, %p255
    %s257 = ssub.s32 %s22, %s34
    %s258 = ssub.s32 %s23, %s30
    %s259 = sor.u32 %s257, %s258
    %p260 = scmp.eq.s32.totalorder %s259, 0
    %s262 = sadd.s32 %s261, 1
    %s263 = scalar_select %p260, %s261, %s262
    %p266 = pneg %p260
    %p267 = scmp.eq.s32.totalorder %s15, 3
    %p268 = por %p266, %p267
    %p269 = scmp.ne.s32.totalorder %s261, %s264
    %p270 = scmp.eq.s32.totalorder %s15, 0
    %p271 = por %p269, %p270
    %p272 = scmp.ne.s32.totalorder %s261, %s264
    %p273 = scmp.eq.s32.totalorder %s20, 3
    %p274 = por %p272, %p273
    %p275 = scmp.ne.s32.totalorder %s264, %s265
    %p276 = scmp.eq.s32.totalorder %s20, 0
    %p277 = por %p275, %p276
    %p278 = scmp.ne.s32.totalorder %s264, %s265
    %p279 = scmp.eq.s32.totalorder %s21, 3
    %p280 = por %p278, %p279
    %p282 = scmp.ne.s32.totalorder %s265, %s281
    %p283 = scmp.eq.s32.totalorder %s21, 0
    %p284 = por %p282, %p283
    %s285 = ssub.s32 %s22, %s34
    %p286 = scmp.eq.s32.totalorder %s285, 0
    %s288 = sadd.s32 %s287, 1
    %s289 = scalar_select %p286, %s287, %s288
    %p292 = pneg %p286
    %p293 = scmp.eq.s32.totalorder %s15, 3
    %p294 = por %p292, %p293
    %p295 = scmp.ne.s32.totalorder %s287, %s290
    %p296 = scmp.eq.s32.totalorder %s15, 0
    %p297 = por %p295, %p296
    %p298 = scmp.ne.s32.totalorder %s287, %s290
    %p299 = scmp.eq.s32.totalorder %s20, 3
    %p300 = por %p298, %p299
    %p301 = scmp.ne.s32.totalorder %s290, %s291
    %p302 = scmp.eq.s32.totalorder %s20, 0
    %p303 = por %p301, %p302
    %p304 = scmp.ne.s32.totalorder %s290, %s291
    %p305 = scmp.eq.s32.totalorder %s21, 3
    %p306 = por %p304, %p305
    %p308 = scmp.ne.s32.totalorder %s291, %s307
    %p309 = scmp.eq.s32.totalorder %s21, 0
    %p310 = por %p308, %p309
    %p311 = scmp.le.s32.totalorder 1, %s15
    %p312 = scmp.lt.s32.totalorder %s15, 5
    %p313 = pnand %p311, %p312
    %p314 = pneg %p313
    // Predicated region
    $region9: #{forward.2} parent=5 // pred_check
      _
    $region10: #{forward.2} parent=5 // pred_check_branch
      %316 = sbr.rel (%p313) target = $region12
    $region11: #{forward.2} parent=5 // pred_region
      %s317 = ssub.s32 %s15, 1
    $region12: #{forward.2} parent=5 // pred_fallthru
      _
    %p318 = scmp.lt.s32.totalorder %s15, 4
    // Predicated region
    $region13: #{forward.2} parent=5 // pred_check
      %p319 = pneg %p318
    $region14: #{forward.2} parent=5 // pred_check_branch
      %321 = sbr.rel (%p319) target = $region16
    $region15: #{forward.2} parent=5 // pred_region
      // Predicated region
      $region17: #{forward.2} parent=15 // pred_check
        %p322 = pneg %p47
      $region18: #{forward.2} parent=15 // pred_check_branch
        %324 = sbr.rel (%p322) target = $region20
      $region19: #{forward.2} parent=15 // pred_region
        %p325 = scmp.lt.s32.totalorder %s22, 1
        %s326 = scalar_select %p325, %s22, 1
        %s327 = smul.addr %s326, 20
        %s328 = smul.addr %s327, 8
        %s329 = scalar_lea.vmem %s0, %s328
      $region20: #{forward.2} parent=15 // pred_fallthru
        _
      // Predicated region
      $region21: #{forward.2} parent=15 // pred_check
        %p330 = pneg %p75
      $region22: #{forward.2} parent=15 // pred_check_branch
        %332 = sbr.rel (%p330) target = $region24
      $region23: #{forward.2} parent=15 // pred_region
        %p333 = scmp.lt.s32.totalorder %s22, 1
        %s334 = scalar_select %p333, %s22, 1
        %p335 = scmp.lt.s32.totalorder %s23, 1
        %s336 = scalar_select %p335, %s23, 1
        %s337 = smul.addr %s336, 20
        %s338 = smul.addr %s334, 40
        %s339 = sadd.s32 %s337, %s338
        %s340 = smul.addr %s339, 8
        %s341 = scalar_lea.vmem %s1, %s340
      $region24: #{forward.2} parent=15 // pred_fallthru
        _
      // Predicated region
      $region25: #{forward.2} parent=15 // pred_check
        %p342 = pneg %p103
      $region26: #{forward.2} parent=15 // pred_check_branch
        %344 = sbr.rel (%p342) target = $region28
      $region27: #{forward.2} parent=15 // pred_region
        %p345 = scmp.lt.s32.totalorder %s22, 1
        %s346 = scalar_select %p345, %s22, 1
        %p347 = scmp.lt.s32.totalorder %s23, 1
        %s348 = scalar_select %p347, %s23, 1
        %s349 = smul.addr %s348, 20
        %s350 = smul.addr %s346, 40
        %s351 = sadd.s32 %s349, %s350
        %s352 = smul.addr %s351, 8
        %s353 = scalar_lea.vmem %s2, %s352
      $region28: #{forward.2} parent=15 // pred_fallthru
        _
      // Predicated region
      $region29: #{forward.2} parent=15 // pred_check
        %p354 = pneg %p131
      $region30: #{forward.2} parent=15 // pred_check_branch
        %356 = sbr.rel (%p354) target = $region32
      $region31: #{forward.2} parent=15 // pred_region
        %p357 = scmp.lt.s32.totalorder %s22, 1
        %s358 = scalar_select %p357, %s22, 1
        %p359 = scmp.lt.s32.totalorder %s23, 1
        %s360 = scalar_select %p359, %s23, 1
        %s361 = smul.addr %s360, 4
        %s362 = smul.addr %s358, 8
        %s363 = sadd.s32 %s361, %s362
        %s364 = smul.addr %s363, 4
        %s365 = scalar_lea.vmem %s3, %s364
      $region32: #{forward.2} parent=15 // pred_fallthru
        _
      // Predicated region
      $region33: #{forward.2} parent=15 // pred_check
        %p366 = pneg %p159
      $region34: #{forward.2} parent=15 // pred_check_branch
        %368 = sbr.rel (%p366) target = $region36
      $region35: #{forward.2} parent=15 // pred_region
        %p369 = scmp.lt.s32.totalorder %s22, 1
        %s370 = scalar_select %p369, %s22, 1
        %p371 = scmp.lt.s32.totalorder %s23, 1
        %s372 = scalar_select %p371, %s23, 1
        %s373 = smul.addr %s372, 4
        %s374 = smul.addr %s370, 8
        %s375 = sadd.s32 %s373, %s374
        %s376 = smul.addr %s375, 4
        %s377 = scalar_lea.vmem %s4, %s376
      $region36: #{forward.2} parent=15 // pred_fallthru
        _
      // Predicated region
      $region37: #{forward.2} parent=15 // pred_check
        %p378 = pneg %p187
      $region38: #{forward.2} parent=15 // pred_check_branch
        %380 = sbr.rel (%p378) target = $region40
      $region39: #{forward.2} parent=15 // pred_region
        %p381 = scmp.lt.s32.totalorder %s22, 1
        %s382 = scalar_select %p381, %s22, 1
        %p383 = scmp.lt.s32.totalorder %s23, 1
        %s384 = scalar_select %p383, %s23, 1
        %s385 = smul.addr %s384, 4
        %s386 = smul.addr %s382, 8
        %s387 = sadd.s32 %s385, %s386
        %s388 = smul.addr %s387, 4
        %s389 = scalar_lea.vmem %s5, %s388
      $region40: #{forward.2} parent=15 // pred_fallthru
        _
      // Predicated region
      $region41: #{forward.2} parent=15 // pred_check
        %p390 = pneg %p215
      $region42: #{forward.2} parent=15 // pred_check_branch
        %392 = sbr.rel (%p390) target = $region44
      $region43: #{forward.2} parent=15 // pred_region
        %p393 = scmp.lt.s32.totalorder %s22, 1
        %s394 = scalar_select %p393, %s22, 1
        %p395 = scmp.lt.s32.totalorder %s23, 1
        %s396 = scalar_select %p395, %s23, 1
        %s397 = smul.addr %s396, 4
        %s398 = smul.addr %s394, 8
        %s399 = sadd.s32 %s397, %s398
        %s400 = smul.addr %s399, 4
        %s401 = scalar_lea.vmem %s6, %s400
      $region44: #{forward.2} parent=15 // pred_fallthru
        _
      // Predicated region
      $region45: #{forward.2} parent=15 // pred_check
        %p402 = pneg %p243
      $region46: #{forward.2} parent=15 // pred_check_branch
        %404 = sbr.rel (%p402) target = $region48
      $region47: #{forward.2} parent=15 // pred_region
        %p405 = scmp.lt.s32.totalorder %s22, 1
        %s406 = scalar_select %p405, %s22, 1
        %p407 = scmp.lt.s32.totalorder %s23, 1
        %s408 = scalar_select %p407, %s23, 1
        %s409 = smul.addr %s406, 2
        %s410 = sadd.s32 %s408, %s409
        %s411 = scalar_lea.vmem %s7, %s410
      $region48: #{forward.2} parent=15 // pred_fallthru
        _
      // Predicated region
      $region49: #{forward.2} parent=15 // pred_check
        %p412 = pneg %p271
      $region50: #{forward.2} parent=15 // pred_check_branch
        %414 = sbr.rel (%p412) target = $region52
      $region51: #{forward.2} parent=15 // pred_region
        %p415 = scmp.lt.s32.totalorder %s22, 1
        %s416 = scalar_select %p415, %s22, 1
        %p417 = scmp.lt.s32.totalorder %s23, 1
        %s418 = scalar_select %p417, %s23, 1
        %s419 = smul.addr %s416, 2
        %s420 = sadd.s32 %s418, %s419
        %s421 = scalar_lea.vmem %s8, %s420
      $region52: #{forward.2} parent=15 // pred_fallthru
        _
    $region16: #{forward.2} parent=5 // pred_fallthru
      _
    %p422 = scmp.le.s32.totalorder 1, %s15
    %p423 = scmp.lt.s32.totalorder %s15, 5
    %p424 = pnand %p422, %p423
    %p425 = pneg %p424
    // Predicated region
    $region53: #{forward.2} parent=5 // pred_check
      _
    $region54: #{forward.2} parent=5 // pred_check_branch
      %427 = sbr.rel (%p424) target = $region56
    $region55: #{forward.2} parent=5 // pred_region
      %s428 = ssub.s32 %s15, 1
      %p429 = scmp.lt.s32.totalorder %s24, 1
      %s430 = scalar_select %p429, %s24, 1
      %s431 = smul.addr %s430, 20
      %s432 = smul.addr %s431, 8
      %s433 = scalar_lea.vmem %s0, %s432
      %p434 = pneg %p53
      %p435 = pneg %p50
      %p436 = scmp.lt.s32.totalorder %s24, 1
      %s437 = scalar_select %p436, %s24, 1
      %p438 = scmp.lt.s32.totalorder %s25, 1
      %s439 = scalar_select %p438, %s25, 1
      %s440 = smul.addr %s439, 20
      %s441 = smul.addr %s437, 40
      %s442 = sadd.s32 %s440, %s441
      %s443 = smul.addr %s442, 8
      %s444 = scalar_lea.vmem %s1, %s443
      %p445 = pneg %p81
      %p446 = pneg %p78
      %p447 = scmp.lt.s32.totalorder %s24, 1
      %s448 = scalar_select %p447, %s24, 1
      %p449 = scmp.lt.s32.totalorder %s25, 1
      %s450 = scalar_select %p449, %s25, 1
      %s451 = smul.addr %s450, 20
      %s452 = smul.addr %s448, 40
      %s453 = sadd.s32 %s451, %s452
      %s454 = smul.addr %s453, 8
      %s455 = scalar_lea.vmem %s2, %s454
      %p456 = pneg %p109
      %p457 = pneg %p106
      %p458 = scmp.lt.s32.totalorder %s24, 1
      %s459 = scalar_select %p458, %s24, 1
      %p460 = scmp.lt.s32.totalorder %s25, 1
      %s461 = scalar_select %p460, %s25, 1
      %s462 = smul.addr %s461, 4
      %s463 = smul.addr %s459, 8
      %s464 = sadd.s32 %s462, %s463
      %s465 = smul.addr %s464, 4
      %s466 = scalar_lea.vmem %s3, %s465
      %p467 = pneg %p137
      %p468 = pneg %p134
      %p469 = scmp.lt.s32.totalorder %s24, 1
      %s470 = scalar_select %p469, %s24, 1
      %p471 = scmp.lt.s32.totalorder %s25, 1
      %s472 = scalar_select %p471, %s25, 1
      %s473 = smul.addr %s472, 4
      %s474 = smul.addr %s470, 8
      %s475 = sadd.s32 %s473, %s474
      %s476 = smul.addr %s475, 4
      %s477 = scalar_lea.vmem %s4, %s476
      %p478 = pneg %p165
      %p479 = pneg %p162
      %p480 = scmp.lt.s32.totalorder %s24, 1
      %s481 = scalar_select %p480, %s24, 1
      %p482 = scmp.lt.s32.totalorder %s25, 1
      %s483 = scalar_select %p482, %s25, 1
      %s484 = smul.addr %s483, 4
      %s485 = smul.addr %s481, 8
      %s486 = sadd.s32 %s484, %s485
      %s487 = smul.addr %s486, 4
      %s488 = scalar_lea.vmem %s5, %s487
      %p489 = pneg %p193
      %p490 = pneg %p190
      %p491 = scmp.lt.s32.totalorder %s24, 1
      %s492 = scalar_select %p491, %s24, 1
      %p493 = scmp.lt.s32.totalorder %s25, 1
      %s494 = scalar_select %p493, %s25, 1
      %s495 = smul.addr %s494, 4
      %s496 = smul.addr %s492, 8
      %s497 = sadd.s32 %s495, %s496
      %s498 = smul.addr %s497, 4
      %s499 = scalar_lea.vmem %s6, %s498
      %p500 = pneg %p221
      %p501 = pneg %p218
      %p502 = scmp.lt.s32.totalorder %s24, 1
      %s503 = scalar_select %p502, %s24, 1
      %p504 = scmp.lt.s32.totalorder %s25, 1
      %s505 = scalar_select %p504, %s25, 1
      %s506 = smul.addr %s503, 2
      %s507 = sadd.s32 %s505, %s506
      %s508 = scalar_lea.vmem %s7, %s507
      %p509 = pneg %p249
      %p510 = pneg %p246
      %p511 = scmp.lt.s32.totalorder %s24, 1
      %s512 = scalar_select %p511, %s24, 1
      %p513 = scmp.lt.s32.totalorder %s25, 1
      %s514 = scalar_select %p513, %s25, 1
      %s515 = smul.addr %s512, 2
      %s516 = sadd.s32 %s514, %s515
      %s517 = scalar_lea.vmem %s8, %s516
      %p518 = pneg %p277
      %p519 = pneg %p274
      %p520 = pneg %p303
      %p521 = pneg %p300
      %p522 = scmp.lt.s32.totalorder %s24, 1
      %s523 = scalar_select %p522, %s24, 1
      %s524 = smul.addr %s523, 20
      %s525 = smul.addr %s524, 8
      %s526 = scalar_lea.vmem %s9, %s525
      %p527 = scmp.lt.s32.totalorder %s24, 1
      %s528 = scalar_select %p527, %s24, 1
      %s529 = smul.addr %s528, 20
      %s530 = smul.addr %s529, 8
      %s531 = scalar_lea.vmem %s0, %s530
      %p532 = scmp.lt.s32.totalorder %s24, 1
      %s533 = scalar_select %p532, %s24, 1
      %p534 = scmp.lt.s32.totalorder %s25, 1
      %s535 = scalar_select %p534, %s25, 1
      %s536 = smul.addr %s535, 20
      %s537 = smul.addr %s533, 40
      %s538 = sadd.s32 %s536, %s537
      %s539 = smul.addr %s538, 8
      %s540 = scalar_lea.vmem %s1, %s539
      %p541 = scmp.lt.s32.totalorder %s24, 1
      %s542 = scalar_select %p541, %s24, 1
      %p543 = scmp.lt.s32.totalorder %s25, 1
      %s544 = scalar_select %p543, %s25, 1
      %s545 = smul.addr %s544, 20
      %s546 = smul.addr %s542, 40
      %s547 = sadd.s32 %s545, %s546
      %s548 = smul.addr %s547, 8
      %s549 = scalar_lea.vmem %s2, %s548
      %p550 = scmp.lt.s32.totalorder %s24, 1
      %s551 = scalar_select %p550, %s24, 1
      %p552 = scmp.lt.s32.totalorder %s25, 1
      %s553 = scalar_select %p552, %s25, 1
      %s554 = smul.addr %s553, 4
      %s555 = smul.addr %s551, 8
      %s556 = sadd.s32 %s554, %s555
      %s557 = smul.addr %s556, 4
      %s558 = scalar_lea.vmem %s3, %s557
      %p559 = scmp.lt.s32.totalorder %s24, 1
      %s560 = scalar_select %p559, %s24, 1
      %p561 = scmp.lt.s32.totalorder %s25, 1
      %s562 = scalar_select %p561, %s25, 1
      %s563 = smul.addr %s562, 4
      %s564 = smul.addr %s560, 8
      %s565 = sadd.s32 %s563, %s564
      %s566 = smul.addr %s565, 4
      %s567 = scalar_lea.vmem %s4, %s566
      %p568 = scmp.lt.s32.totalorder %s24, 1
      %s569 = scalar_select %p568, %s24, 1
      %p570 = scmp.lt.s32.totalorder %s25, 1
      %s571 = scalar_select %p570, %s25, 1
      %s572 = smul.addr %s571, 4
      %s573 = smul.addr %s569, 8
      %s574 = sadd.s32 %s572, %s573
      %s575 = smul.addr %s574, 4
      %s576 = scalar_lea.vmem %s5, %s575
      %p577 = scmp.lt.s32.totalorder %s24, 1
      %s578 = scalar_select %p577, %s24, 1
      %p579 = scmp.lt.s32.totalorder %s25, 1
      %s580 = scalar_select %p579, %s25, 1
      %s581 = smul.addr %s580, 4
      %s582 = smul.addr %s578, 8
      %s583 = sadd.s32 %s581, %s582
      %s584 = smul.addr %s583, 4
      %s585 = scalar_lea.vmem %s6, %s584
      %p586 = scmp.lt.s32.totalorder %s24, 1
      %s587 = scalar_select %p586, %s24, 1
      %p588 = scmp.lt.s32.totalorder %s25, 1
      %s589 = scalar_select %p588, %s25, 1
      %s590 = smul.addr %s587, 2
      %s591 = sadd.s32 %s589, %s590
      %s592 = scalar_lea.vmem %s7, %s591
      %p593 = scmp.lt.s32.totalorder %s24, 1
      %s594 = scalar_select %p593, %s24, 1
      %p595 = scmp.lt.s32.totalorder %s25, 1
      %s596 = scalar_select %p595, %s25, 1
      %s597 = smul.addr %s594, 2
      %s598 = sadd.s32 %s596, %s597
      %s599 = scalar_lea.vmem %s8, %s598
      %p600 = scmp.lt.s32.totalorder %s24, 1
      %s601 = scalar_select %p600, %s24, 1
      %s602 = smul.addr %s601, 20
      %s603 = smul.addr %s602, 8
      %s604 = scalar_lea.vmem %s9, %s603
      %p606 = scmp.eq.s32.totalorder %s25, 0
      // Predicated region
      $region57: #{forward.2} parent=55 // pred_check
        %p607 = pneg %p606
      $region58: #{forward.2} parent=55 // pred_check_branch
        %609 = sbr.rel (%p607) target = $region60
      $region59: #{forward.2} parent=55 // pred_region
        %v610 = vld [vmem:[%s531] sm:$0xff]
        %v611 = vld [vmem:[%s531 + $0x8] sm:$0xff]
        %v612 = vld [vmem:[%s531 + $0x10] sm:$0xff]
        %v613 = vld [vmem:[%s531 + $0x18] sm:$0xff]
        %v614 = vld [vmem:[%s531 + $0x20] sm:$0xff]
        %v615 = vld [vmem:[%s531 + $0x28] sm:$0xff]
        %v616 = vld [vmem:[%s531 + $0x30] sm:$0xff]
        %v617 = vld [vmem:[%s531 + $0x38] sm:$0xff]
        %v618 = vld [vmem:[%s531 + $0x40] sm:$0xff]
        %v619 = vld [vmem:[%s531 + $0x48] sm:$0xff]
        %v620 = vld [vmem:[%s531 + $0x50] sm:$0xff]
        %v621 = vld [vmem:[%s531 + $0x58] sm:$0xff]
        %v622 = vld [vmem:[%s531 + $0x60] sm:$0xff]
        %v623 = vld [vmem:[%s531 + $0x68] sm:$0xff]
        %v624 = vld [vmem:[%s531 + $0x70] sm:$0xff]
        %v625 = vld [vmem:[%s531 + $0x78] sm:$0xff]
        %v626 = vld [vmem:[%s531 + $0x80] sm:$0xff]
        %v627 = vld [vmem:[%s531 + $0x88] sm:$0xff]
        %v628 = vld [vmem:[%s531 + $0x90] sm:$0xff]
        %v629 = vld [vmem:[%s531 + $0x98] sm:$0xff]
        %vm630 = vcmask 261120
        %631 = vst.msk [vmem:[#allocation2] sm:$0xff] %vm630, %v610
        %632 = vst.msk [vmem:[#allocation2 + $0x8] sm:$0xff] %vm630, %v611
        %633 = vst.msk [vmem:[#allocation2 + $0x10] sm:$0xff] %vm630, %v612
        %634 = vst.msk [vmem:[#allocation2 + $0x18] sm:$0xff] %vm630, %v613
        %635 = vst.msk [vmem:[#allocation2 + $0x20] sm:$0xff] %vm630, %v614
        %636 = vst.msk [vmem:[#allocation2 + $0x28] sm:$0xff] %vm630, %v615
        %637 = vst.msk [vmem:[#allocation2 + $0x30] sm:$0xff] %vm630, %v616
        %638 = vst.msk [vmem:[#allocation2 + $0x38] sm:$0xff] %vm630, %v617
        %639 = vst.msk [vmem:[#allocation2 + $0x40] sm:$0xff] %vm630, %v618
        %640 = vst.msk [vmem:[#allocation2 + $0x48] sm:$0xff] %vm630, %v619
        %641 = vst.msk [vmem:[#allocation2 + $0x50] sm:$0xff] %vm630, %v620
        %642 = vst.msk [vmem:[#allocation2 + $0x58] sm:$0xff] %vm630, %v621
        %643 = vst.msk [vmem:[#allocation2 + $0x60] sm:$0xff] %vm630, %v622
        %644 = vst.msk [vmem:[#allocation2 + $0x68] sm:$0xff] %vm630, %v623
        %645 = vst.msk [vmem:[#allocation2 + $0x70] sm:$0xff] %vm630, %v624
        %646 = vst.msk [vmem:[#allocation2 + $0x78] sm:$0xff] %vm630, %v625
        %647 = vst.msk [vmem:[#allocation2 + $0x80] sm:$0xff] %vm630, %v626
        %648 = vst.msk [vmem:[#allocation2 + $0x88] sm:$0xff] %vm630, %v627
        %649 = vst.msk [vmem:[#allocation2 + $0x90] sm:$0xff] %vm630, %v628
        %650 = vst.msk [vmem:[#allocation2 + $0x98] sm:$0xff] %vm630, %v629
        %p651 = scmp.eq.s32.totalorder %s24, 0
        %s652 = scalar_select %p651, 80, 20
        %v653 = vlaneseq
        %v654 = vshrl.u32 %v653, 7
        %v655 = vadd.s32 %v654, 8
        %v656 = vadd.s32 %v654, 16
        %v657 = vadd.s32 %v654, 24
        %v658 = vadd.s32 %v654, 32
        %v659 = vadd.s32 %v654, 40
        %v660 = vadd.s32 %v654, 48
        %v661 = vadd.s32 %v654, 56
        %v662 = vadd.s32 %v654, 64
        %v663 = vadd.s32 %v654, 72
        %v664 = vadd.s32 %v654, 80
        %v665 = vadd.s32 %v654, 88
        %v666 = vadd.s32 %v654, 96
        %v667 = vadd.s32 %v654, 104
        %v668 = vadd.s32 %v654, 112
        %v669 = vadd.s32 %v654, 120
        %v670 = vadd.s32 %v654, 128
        %v671 = vadd.s32 %v654, 136
        %v672 = vadd.s32 %v654, 144
        %v673 = vadd.s32 %v654, 152
        %v674 = vlaneseq
        %v675 = vand.u32 %v674, 127
        %v676 = vadd.s32 %v675, 128
        %vm677 = vcmp.ge.s32.totalorder %v654, 0
        %vm678 = vcmp.ge.s32.totalorder %v655, 0
        %vm679 = vcmp.ge.s32.totalorder %v656, 0
        %vm680 = vcmp.ge.s32.totalorder %v657, 0
        %vm681 = vcmp.ge.s32.totalorder %v658, 0
        %vm682 = vcmp.ge.s32.totalorder %v659, 0
        %vm683 = vcmp.ge.s32.totalorder %v660, 0
        %vm684 = vcmp.ge.s32.totalorder %v661, 0
        %vm685 = vcmp.ge.s32.totalorder %v662, 0
        %vm686 = vcmp.ge.s32.totalorder %v663, 0
        %vm687 = vcmp.ge.s32.totalorder %v664, 0
        %vm688 = vcmp.ge.s32.totalorder %v665, 0
        %vm689 = vcmp.ge.s32.totalorder %v666, 0
        %vm690 = vcmp.ge.s32.totalorder %v667, 0
        %vm691 = vcmp.ge.s32.totalorder %v668, 0
        %vm692 = vcmp.ge.s32.totalorder %v669, 0
        %vm693 = vcmp.ge.s32.totalorder %v670, 0
        %vm694 = vcmp.ge.s32.totalorder %v671, 0
        %vm695 = vcmp.ge.s32.totalorder %v672, 0
        %vm696 = vcmp.ge.s32.totalorder %v673, 0
        %vm697 = vcmp.lt.s32.totalorder %v654, 80
        %vm698 = vcmp.lt.s32.totalorder %v655, 80
        %vm699 = vcmp.lt.s32.totalorder %v656, 80
        %vm700 = vcmp.lt.s32.totalorder %v657, 80
        %vm701 = vcmp.lt.s32.totalorder %v658, 80
        %vm702 = vcmp.lt.s32.totalorder %v659, 80
        %vm703 = vcmp.lt.s32.totalorder %v660, 80
        %vm704 = vcmp.lt.s32.totalorder %v661, 80
        %vm705 = vcmp.lt.s32.totalorder %v662, 80
        %vm706 = vcmp.lt.s32.totalorder %v663, 80
        %vm707 = vcmp.lt.s32.totalorder %v664, 80
        %vm708 = vcmp.lt.s32.totalorder %v665, 80
        %vm709 = vcmp.lt.s32.totalorder %v666, 80
        %vm710 = vcmp.lt.s32.totalorder %v667, 80
        %vm711 = vcmp.lt.s32.totalorder %v668, 80
        %vm712 = vcmp.lt.s32.totalorder %v669, 80
        %vm713 = vcmp.lt.s32.totalorder %v670, 80
        %vm714 = vcmp.lt.s32.totalorder %v671, 80
        %vm715 = vcmp.lt.s32.totalorder %v672, 80
        %vm716 = vcmp.lt.s32.totalorder %v673, 80
        %vm717 = vmand %vm677, %vm697
        %vm718 = vmand %vm678, %vm698
        %vm719 = vmand %vm679, %vm699
        %vm720 = vmand %vm680, %vm700
        %vm721 = vmand %vm681, %vm701
        %vm722 = vmand %vm682, %vm702
        %vm723 = vmand %vm683, %vm703
        %vm724 = vmand %vm684, %vm704
        %vm725 = vmand %vm685, %vm705
        %vm726 = vmand %vm686, %vm706
        %vm727 = vmand %vm687, %vm707
        %vm728 = vmand %vm688, %vm708
        %vm729 = vmand %vm689, %vm709
        %vm730 = vmand %vm690, %vm710
        %vm731 = vmand %vm691, %vm711
        %vm732 = vmand %vm692, %vm712
        %vm733 = vmand %vm693, %vm713
        %vm734 = vmand %vm694, %vm714
        %vm735 = vmand %vm695, %vm715
        %vm736 = vmand %vm696, %vm716
        %vm737 = vcmp.ge.s32.totalorder %v675, 0
        %vm738 = vcmp.ge.s32.totalorder %v676, 0
        %vm739 = vmand %vm717, %vm737
        %vm740 = vmand %vm717, %vm738
        %vm741 = vmand %vm718, %vm737
        %vm742 = vmand %vm718, %vm738
        %vm743 = vmand %vm719, %vm737
        %vm744 = vmand %vm719, %vm738
        %vm745 = vmand %vm720, %vm737
        %vm746 = vmand %vm720, %vm738
        %vm747 = vmand %vm721, %vm737
        %vm748 = vmand %vm721, %vm738
        %vm749 = vmand %vm722, %vm737
        %vm750 = vmand %vm722, %vm738
        %vm751 = vmand %vm723, %vm737
        %vm752 = vmand %vm723, %vm738
        %vm753 = vmand %vm724, %vm737
        %vm754 = vmand %vm724, %vm738
        %vm755 = vmand %vm725, %vm737
        %vm756 = vmand %vm725, %vm738
        %vm757 = vmand %vm726, %vm737
        %vm758 = vmand %vm726, %vm738
        %vm759 = vmand %vm727, %vm737
        %vm760 = vmand %vm727, %vm738
        %vm761 = vmand %vm728, %vm737
        %vm762 = vmand %vm728, %vm738
        %vm763 = vmand %vm729, %vm737
        %vm764 = vmand %vm729, %vm738
        %vm765 = vmand %vm730, %vm737
        %vm766 = vmand %vm730, %vm738
        %vm767 = vmand %vm731, %vm737
        %vm768 = vmand %vm731, %vm738
        %vm769 = vmand %vm732, %vm737
        %vm770 = vmand %vm732, %vm738
        %vm771 = vmand %vm733, %vm737
        %vm772 = vmand %vm733, %vm738
        %vm773 = vmand %vm734, %vm737
        %vm774 = vmand %vm734, %vm738
        %vm775 = vmand %vm735, %vm737
        %vm776 = vmand %vm735, %vm738
        %vm777 = vmand %vm736, %vm737
        %vm778 = vmand %vm736, %vm738
        %v779 = vstv %s652
        %vm780 = vcmp.lt.s32.totalorder %v675, %v779
        %vm781 = vcmp.lt.s32.totalorder %v676, %v779
        %vm782 = vmand %vm739, %vm780
        %vm783 = vmand %vm740, %vm781
        %vm784 = vmand %vm741, %vm780
        %vm785 = vmand %vm742, %vm781
        %vm786 = vmand %vm743, %vm780
        %vm787 = vmand %vm744, %vm781
        %vm788 = vmand %vm745, %vm780
        %vm789 = vmand %vm746, %vm781
        %vm790 = vmand %vm747, %vm780
        %vm791 = vmand %vm748, %vm781
        %vm792 = vmand %vm749, %vm780
        %vm793 = vmand %vm750, %vm781
        %vm794 = vmand %vm751, %vm780
        %vm795 = vmand %vm752, %vm781
        %vm796 = vmand %vm753, %vm780
        %vm797 = vmand %vm754, %vm781
        %vm798 = vmand %vm755, %vm780
        %vm799 = vmand %vm756, %vm781
        %vm800 = vmand %vm757, %vm780
        %vm801 = vmand %vm758, %vm781
        %vm802 = vmand %vm759, %vm780
        %vm803 = vmand %vm760, %vm781
        %vm804 = vmand %vm761, %vm780
        %vm805 = vmand %vm762, %vm781
        %vm806 = vmand %vm763, %vm780
        %vm807 = vmand %vm764, %vm781
        %vm808 = vmand %vm765, %vm780
        %vm809 = vmand %vm766, %vm781
        %vm810 = vmand %vm767, %vm780
        %vm811 = vmand %vm768, %vm781
        %vm812 = vmand %vm769, %vm780
        %vm813 = vmand %vm770, %vm781
        %vm814 = vmand %vm771, %vm780
        %vm815 = vmand %vm772, %vm781
        %vm816 = vmand %vm773, %vm780
        %vm817 = vmand %vm774, %vm781
        %vm818 = vmand %vm775, %vm780
        %vm819 = vmand %vm776, %vm781
        %vm820 = vmand %vm777, %vm780
        %vm821 = vmand %vm778, %vm781
        %vm822 = vcmp.ge.s32.totalorder %v654, 80
        %vm823 = vcmp.ge.s32.totalorder %v655, 80
        %vm824 = vcmp.ge.s32.totalorder %v656, 80
        %vm825 = vcmp.ge.s32.totalorder %v657, 80
        %vm826 = vcmp.ge.s32.totalorder %v658, 80
        %vm827 = vcmp.ge.s32.totalorder %v659, 80
        %vm828 = vcmp.ge.s32.totalorder %v660, 80
        %vm829 = vcmp.ge.s32.totalorder %v661, 80
        %vm830 = vcmp.ge.s32.totalorder %v662, 80
        %vm831 = vcmp.ge.s32.totalorder %v663, 80
        %vm832 = vcmp.ge.s32.totalorder %v664, 80
        %vm833 = vcmp.ge.s32.totalorder %v665, 80
        %vm834 = vcmp.ge.s32.totalorder %v666, 80
        %vm835 = vcmp.ge.s32.totalorder %v667, 80
        %vm836 = vcmp.ge.s32.totalorder %v668, 80
        %vm837 = vcmp.ge.s32.totalorder %v669, 80
        %vm838 = vcmp.ge.s32.totalorder %v670, 80
        %vm839 = vcmp.ge.s32.totalorder %v671, 80
        %vm840 = vcmp.ge.s32.totalorder %v672, 80
        %vm841 = vcmp.ge.s32.totalorder %v673, 80
        %vm842 = vcmp.lt.s32.totalorder %v654, 160
        %vm843 = vcmp.lt.s32.totalorder %v655, 160
        %vm844 = vcmp.lt.s32.totalorder %v656, 160
        %vm845 = vcmp.lt.s32.totalorder %v657, 160
        %vm846 = vcmp.lt.s32.totalorder %v658, 160
        %vm847 = vcmp.lt.s32.totalorder %v659, 160
        %vm848 = vcmp.lt.s32.totalorder %v660, 160
        %vm849 = vcmp.lt.s32.totalorder %v661, 160
        %vm850 = vcmp.lt.s32.totalorder %v662, 160
        %vm851 = vcmp.lt.s32.totalorder %v663, 160
        %vm852 = vcmp.lt.s32.totalorder %v664, 160
        %vm853 = vcmp.lt.s32.totalorder %v665, 160
        %vm854 = vcmp.lt.s32.totalorder %v666, 160
        %vm855 = vcmp.lt.s32.totalorder %v667, 160
        %vm856 = vcmp.lt.s32.totalorder %v668, 160
        %vm857 = vcmp.lt.s32.totalorder %v669, 160
        %vm858 = vcmp.lt.s32.totalorder %v670, 160
        %vm859 = vcmp.lt.s32.totalorder %v671, 160
        %vm860 = vcmp.lt.s32.totalorder %v672, 160
        %vm861 = vcmp.lt.s32.totalorder %v673, 160
        %vm862 = vmand %vm822, %vm842
        %vm863 = vmand %vm823, %vm843
        %vm864 = vmand %vm824, %vm844
        %vm865 = vmand %vm825, %vm845
        %vm866 = vmand %vm826, %vm846
        %vm867 = vmand %vm827, %vm847
        %vm868 = vmand %vm828, %vm848
        %vm869 = vmand %vm829, %vm849
        %vm870 = vmand %vm830, %vm850
        %vm871 = vmand %vm831, %vm851
        %vm872 = vmand %vm832, %vm852
        %vm873 = vmand %vm833, %vm853
        %vm874 = vmand %vm834, %vm854
        %vm875 = vmand %vm835, %vm855
        %vm876 = vmand %vm836, %vm856
        %vm877 = vmand %vm837, %vm857
        %vm878 = vmand %vm838, %vm858
        %vm879 = vmand %vm839, %vm859
        %vm880 = vmand %vm840, %vm860
        %vm881 = vmand %vm841, %vm861
        %vm882 = vcmp.ge.s32.totalorder %v675, 80
        %vm883 = vcmp.ge.s32.totalorder %v676, 80
        %vm884 = vmand %vm862, %vm882
        %vm885 = vmand %vm862, %vm883
        %vm886 = vmand %vm863, %vm882
        %vm887 = vmand %vm863, %vm883
        %vm888 = vmand %vm864, %vm882
        %vm889 = vmand %vm864, %vm883
        %vm890 = vmand %vm865, %vm882
        %vm891 = vmand %vm865, %vm883
        %vm892 = vmand %vm866, %vm882
        %vm893 = vmand %vm866, %vm883
        %vm894 = vmand %vm867, %vm882
        %vm895 = vmand %vm867, %vm883
        %vm896 = vmand %vm868, %vm882
        %vm897 = vmand %vm868, %vm883
        %vm898 = vmand %vm869, %vm882
        %vm899 = vmand %vm869, %vm883
        %vm900 = vmand %vm870, %vm882
        %vm901 = vmand %vm870, %vm883
        %vm902 = vmand %vm871, %vm882
        %vm903 = vmand %vm871, %vm883
        %vm904 = vmand %vm872, %vm882
        %vm905 = vmand %vm872, %vm883
        %vm906 = vmand %vm873, %vm882
        %vm907 = vmand %vm873, %vm883
        %vm908 = vmand %vm874, %vm882
        %vm909 = vmand %vm874, %vm883
        %vm910 = vmand %vm875, %vm882
        %vm911 = vmand %vm875, %vm883
        %vm912 = vmand %vm876, %vm882
        %vm913 = vmand %vm876, %vm883
        %vm914 = vmand %vm877, %vm882
        %vm915 = vmand %vm877, %vm883
        %vm916 = vmand %vm878, %vm882
        %vm917 = vmand %vm878, %vm883
        %vm918 = vmand %vm879, %vm882
        %vm919 = vmand %vm879, %vm883
        %vm920 = vmand %vm880, %vm882
        %vm921 = vmand %vm880, %vm883
        %vm922 = vmand %vm881, %vm882
        %vm923 = vmand %vm881, %vm883
        %s924 = sadd.s32 %s652, 80
        %v925 = vstv %s924
        %vm926 = vcmp.lt.s32.totalorder %v675, %v925
        %vm927 = vcmp.lt.s32.totalorder %v676, %v925
        %vm928 = vmand %vm884, %vm926
        %vm929 = vmand %vm885, %vm927
        %vm930 = vmand %vm886, %vm926
        %vm931 = vmand %vm887, %vm927
        %vm932 = vmand %vm888, %vm926
        %vm933 = vmand %vm889, %vm927
        %vm934 = vmand %vm890, %vm926
        %vm935 = vmand %vm891, %vm927
        %vm936 = vmand %vm892, %vm926
        %vm937 = vmand %vm893, %vm927
        %vm938 = vmand %vm894, %vm926
        %vm939 = vmand %vm895, %vm927
        %vm940 = vmand %vm896, %vm926
        %vm941 = vmand %vm897, %vm927
        %vm942 = vmand %vm898, %vm926
        %vm943 = vmand %vm899, %vm927
        %vm944 = vmand %vm900, %vm926
        %vm945 = vmand %vm901, %vm927
        %vm946 = vmand %vm902, %vm926
        %vm947 = vmand %vm903, %vm927
        %vm948 = vmand %vm904, %vm926
        %vm949 = vmand %vm905, %vm927
        %vm950 = vmand %vm906, %vm926
        %vm951 = vmand %vm907, %vm927
        %vm952 = vmand %vm908, %vm926
        %vm953 = vmand %vm909, %vm927
        %vm954 = vmand %vm910, %vm926
        %vm955 = vmand %vm911, %vm927
        %vm956 = vmand %vm912, %vm926
        %vm957 = vmand %vm913, %vm927
        %vm958 = vmand %vm914, %vm926
        %vm959 = vmand %vm915, %vm927
        %vm960 = vmand %vm916, %vm926
        %vm961 = vmand %vm917, %vm927
        %vm962 = vmand %vm918, %vm926
        %vm963 = vmand %vm919, %vm927
        %vm964 = vmand %vm920, %vm926
        %vm965 = vmand %vm921, %vm927
        %vm966 = vmand %vm922, %vm926
        %vm967 = vmand %vm923, %vm927
        %vm968 = vmor %vm782, %vm928
        %vm969 = vmor %vm783, %vm929
        %vm970 = vmor %vm784, %vm930
        %vm971 = vmor %vm785, %vm931
        %vm972 = vmor %vm786, %vm932
        %vm973 = vmor %vm787, %vm933
        %vm974 = vmor %vm788, %vm934
        %vm975 = vmor %vm789, %vm935
        %vm976 = vmor %vm790, %vm936
        %vm977 = vmor %vm791, %vm937
        %vm978 = vmor %vm792, %vm938
        %vm979 = vmor %vm793, %vm939
        %vm980 = vmor %vm794, %vm940
        %vm981 = vmor %vm795, %vm941
        %vm982 = vmor %vm796, %vm942
        %vm983 = vmor %vm797, %vm943
        %vm984 = vmor %vm798, %vm944
        %vm985 = vmor %vm799, %vm945
        %vm986 = vmor %vm800, %vm946
        %vm987 = vmor %vm801, %vm947
        %vm988 = vmor %vm802, %vm948
        %vm989 = vmor %vm803, %vm949
        %vm990 = vmor %vm804, %vm950
        %vm991 = vmor %vm805, %vm951
        %vm992 = vmor %vm806, %vm952
        %vm993 = vmor %vm807, %vm953
        %vm994 = vmor %vm808, %vm954
        %vm995 = vmor %vm809, %vm955
        %vm996 = vmor %vm810, %vm956
        %vm997 = vmor %vm811, %vm957
        %vm998 = vmor %vm812, %vm958
        %vm999 = vmor %vm813, %vm959
        %vm1000 = vmor %vm814, %vm960
        %vm1001 = vmor %vm815, %vm961
        %vm1002 = vmor %vm816, %vm962
        %vm1003 = vmor %vm817, %vm963
        %vm1004 = vmor %vm818, %vm964
        %vm1005 = vmor %vm819, %vm965
        %vm1006 = vmor %vm820, %vm966
        %vm1007 = vmor %vm821, %vm967
        %v1008 = vsel %vm968, 0.0, -1e+30
        %v1009 = vsel %vm969, 0.0, -1e+30
        %v1010 = vsel %vm970, 0.0, -1e+30
        %v1011 = vsel %vm971, 0.0, -1e+30
        %v1012 = vsel %vm972, 0.0, -1e+30
        %v1013 = vsel %vm973, 0.0, -1e+30
        %v1014 = vsel %vm974, 0.0, -1e+30
        %v1015 = vsel %vm975, 0.0, -1e+30
        %v1016 = vsel %vm976, 0.0, -1e+30
        %v1017 = vsel %vm977, 0.0, -1e+30
        %v1018 = vsel %vm978, 0.0, -1e+30
        %v1019 = vsel %vm979, 0.0, -1e+30
        %v1020 = vsel %vm980, 0.0, -1e+30
        %v1021 = vsel %vm981, 0.0, -1e+30
        %v1022 = vsel %vm982, 0.0, -1e+30
        %v1023 = vsel %vm983, 0.0, -1e+30
        %v1024 = vsel %vm984, 0.0, -1e+30
        %v1025 = vsel %vm985, 0.0, -1e+30
        %v1026 = vsel %vm986, 0.0, -1e+30
        %v1027 = vsel %vm987, 0.0, -1e+30
        %v1028 = vsel %vm988, 0.0, -1e+30
        %v1029 = vsel %vm989, 0.0, -1e+30
        %v1030 = vsel %vm990, 0.0, -1e+30
        %v1031 = vsel %vm991, 0.0, -1e+30
        %v1032 = vsel %vm992, 0.0, -1e+30
        %v1033 = vsel %vm993, 0.0, -1e+30
        %v1034 = vsel %vm994, 0.0, -1e+30
        %v1035 = vsel %vm995, 0.0, -1e+30
        %v1036 = vsel %vm996, 0.0, -1e+30
        %v1037 = vsel %vm997, 0.0, -1e+30
        %v1038 = vsel %vm998, 0.0, -1e+30
        %v1039 = vsel %vm999, 0.0, -1e+30
        %v1040 = vsel %vm1000, 0.0, -1e+30
        %v1041 = vsel %vm1001, 0.0, -1e+30
        %v1042 = vsel %vm1002, 0.0, -1e+30
        %v1043 = vsel %vm1003, 0.0, -1e+30
        %v1044 = vsel %vm1004, 0.0, -1e+30
        %v1045 = vsel %vm1005, 0.0, -1e+30
        %v1046 = vsel %vm1006, 0.0, -1e+30
        %v1047 = vsel %vm1007, 0.0, -1e+30
        %1048 = vst [vmem:[#allocation3] sm:$0xff] %v1008
        %1049 = vst.msk [vmem:[#allocation3 + $0x8] sm:$0xff] %vm630, %v1009
        %1050 = vst [vmem:[#allocation3 + $0x10] sm:$0xff] %v1010
        %1051 = vst.msk [vmem:[#allocation3 + $0x18] sm:$0xff] %vm630, %v1011
        %1052 = vst [vmem:[#allocation3 + $0x20] sm:$0xff] %v1012
        %1053 = vst.msk [vmem:[#allocation3 + $0x28] sm:$0xff] %vm630, %v1013
        %1054 = vst [vmem:[#allocation3 + $0x30] sm:$0xff] %v1014
        %1055 = vst.msk [vmem:[#allocation3 + $0x38] sm:$0xff] %vm630, %v1015
        %1056 = vst [vmem:[#allocation3 + $0x40] sm:$0xff] %v1016
        %1057 = vst.msk [vmem:[#allocation3 + $0x48] sm:$0xff] %vm630, %v1017
        %1058 = vst [vmem:[#allocation3 + $0x50] sm:$0xff] %v1018
        %1059 = vst.msk [vmem:[#allocation3 + $0x58] sm:$0xff] %vm630, %v1019
        %1060 = vst [vmem:[#allocation3 + $0x60] sm:$0xff] %v1020
        %1061 = vst.msk [vmem:[#allocation3 + $0x68] sm:$0xff] %vm630, %v1021
        %1062 = vst [vmem:[#allocation3 + $0x70] sm:$0xff] %v1022
        %1063 = vst.msk [vmem:[#allocation3 + $0x78] sm:$0xff] %vm630, %v1023
        %1064 = vst [vmem:[#allocation3 + $0x80] sm:$0xff] %v1024
        %1065 = vst.msk [vmem:[#allocation3 + $0x88] sm:$0xff] %vm630, %v1025
        %1066 = vst [vmem:[#allocation3 + $0x90] sm:$0xff] %v1026
        %1067 = vst.msk [vmem:[#allocation3 + $0x98] sm:$0xff] %vm630, %v1027
        %1068 = vst [vmem:[#allocation3 + $0xa0] sm:$0xff] %v1028
        %1069 = vst.msk [vmem:[#allocation3 + $0xa8] sm:$0xff] %vm630, %v1029
        %1070 = vst [vmem:[#allocation3 + $0xb0] sm:$0xff] %v1030
        %1071 = vst.msk [vmem:[#allocation3 + $0xb8] sm:$0xff] %vm630, %v1031
        %1072 = vst [vmem:[#allocation3 + $0xc0] sm:$0xff] %v1032
        %1073 = vst.msk [vmem:[#allocation3 + $0xc8] sm:$0xff] %vm630, %v1033
        %1074 = vst [vmem:[#allocation3 + $0xd0] sm:$0xff] %v1034
        %1075 = vst.msk [vmem:[#allocation3 + $0xd8] sm:$0xff] %vm630, %v1035
        %1076 = vst [vmem:[#allocation3 + $0xe0] sm:$0xff] %v1036
        %1077 = vst.msk [vmem:[#allocation3 + $0xe8] sm:$0xff] %vm630, %v1037
        %1078 = vst [vmem:[#allocation3 + $0xf0] sm:$0xff] %v1038
        %1079 = vst.msk [vmem:[#allocation3 + $0xf8] sm:$0xff] %vm630, %v1039
        %1080 = vst [vmem:[#allocation3 + $0x100] sm:$0xff] %v1040
        %1081 = vst.msk [vmem:[#allocation3 + $0x108] sm:$0xff] %vm630, %v1041
        %1082 = vst [vmem:[#allocation3 + $0x110] sm:$0xff] %v1042
        %1083 = vst.msk [vmem:[#allocation3 + $0x118] sm:$0xff] %vm630, %v1043
        %1084 = vst [vmem:[#allocation3 + $0x120] sm:$0xff] %v1044
        %1085 = vst.msk [vmem:[#allocation3 + $0x128] sm:$0xff] %vm630, %v1045
        %1086 = vst [vmem:[#allocation3 + $0x130] sm:$0xff] %v1046
        %1087 = vst.msk [vmem:[#allocation3 + $0x138] sm:$0xff] %vm630, %v1047
      $region60: #{forward.2} parent=55 // pred_fallthru
        _
      %v1088 = vld [vmem:[#allocation2] sm:$0xff]
      %v1089 = vld [vmem:[#allocation2 + $0x8] sm:$0xff]
      %v1090 = vld [vmem:[#allocation2 + $0x10] sm:$0xff]
      %v1091 = vld [vmem:[#allocation2 + $0x18] sm:$0xff]
      %v1092 = vld [vmem:[#allocation2 + $0x20] sm:$0xff]
      %v1093 = vld [vmem:[#allocation2 + $0x28] sm:$0xff]
      %v1094 = vld [vmem:[#allocation2 + $0x30] sm:$0xff]
      %v1095 = vld [vmem:[#allocation2 + $0x38] sm:$0xff]
      %v1096 = vld [vmem:[#allocation2 + $0x40] sm:$0xff]
      %v1097 = vld [vmem:[#allocation2 + $0x48] sm:$0xff]
      %v1098 = vld [vmem:[#allocation2 + $0x50] sm:$0xff]
      %v1099 = vld [vmem:[#allocation2 + $0x58] sm:$0xff]
      %v1100 = vld [vmem:[#allocation2 + $0x60] sm:$0xff]
      %v1101 = vld [vmem:[#allocation2 + $0x68] sm:$0xff]
      %v1102 = vld [vmem:[#allocation2 + $0x70] sm:$0xff]
      %v1103 = vld [vmem:[#allocation2 + $0x78] sm:$0xff]
      %v1104 = vld [vmem:[#allocation2 + $0x80] sm:$0xff]
      %v1105 = vld [vmem:[#allocation2 + $0x88] sm:$0xff]
      %v1106 = vld [vmem:[#allocation2 + $0x90] sm:$0xff]
      %v1107 = vld [vmem:[#allocation2 + $0x98] sm:$0xff]
      %v1108 = vpack.c.bf16 %v1089, %v1088
      %v1109 = vpack.c.bf16 %v1091, %v1090
      %v1110 = vpack.c.bf16 %v1093, %v1092
      %v1111 = vpack.c.bf16 %v1095, %v1094
      %v1112 = vpack.c.bf16 %v1097, %v1096
      %v1113 = vpack.c.bf16 %v1099, %v1098
      %v1114 = vpack.c.bf16 %v1101, %v1100
      %v1115 = vpack.c.bf16 %v1103, %v1102
      %v1116 = vpack.c.bf16 %v1105, %v1104
      %v1117 = vpack.c.bf16 %v1107, %v1106
      %v1118 = vld [vmem:[%s558] sm:$0xf]
      %v1119 = vld [vmem:[%s558 + $0x4] sm:$0xf]
      %v1120 = vld [vmem:[%s558 + $0x8] sm:$0xf]
      %v1121 = vld [vmem:[%s558 + $0xc] sm:$0xf]
      %v1122 = vld [vmem:[%s540] sm:$0xff]
      %v1123 = vld [vmem:[%s540 + $0x8] sm:$0xff]
      %v1124 = vld [vmem:[%s540 + $0x10] sm:$0xff]
      %v1125 = vld [vmem:[%s540 + $0x18] sm:$0xff]
      %v1126 = vld [vmem:[%s540 + $0x20] sm:$0xff]
      %v1127 = vld [vmem:[%s540 + $0x28] sm:$0xff]
      %v1128 = vld [vmem:[%s540 + $0x30] sm:$0xff]
      %v1129 = vld [vmem:[%s540 + $0x38] sm:$0xff]
      %v1130 = vld [vmem:[%s540 + $0x40] sm:$0xff]
      %v1131 = vld [vmem:[%s540 + $0x48] sm:$0xff]
      %v1132 = vld [vmem:[%s540 + $0x50] sm:$0xff]
      %v1133 = vld [vmem:[%s540 + $0x58] sm:$0xff]
      %v1134 = vld [vmem:[%s540 + $0x60] sm:$0xff]
      %v1135 = vld [vmem:[%s540 + $0x68] sm:$0xff]
      %v1136 = vld [vmem:[%s540 + $0x70] sm:$0xff]
      %v1137 = vld [vmem:[%s540 + $0x78] sm:$0xff]
      %v1138 = vld [vmem:[%s540 + $0x80] sm:$0xff]
      %v1139 = vld [vmem:[%s540 + $0x88] sm:$0xff]
      %v1140 = vld [vmem:[%s540 + $0x90] sm:$0xff]
      %v1141 = vld [vmem:[%s540 + $0x98] sm:$0xff]
      %v1146 = vunpack.c.l.b16 %v1118
      %v1147 = vunpack.c.l.b16 %v1119
      %v1148 = vunpack.c.l.b16 %v1120
      %v1149 = vunpack.c.l.b16 %v1121
      %v1150 = vpack.c.b16 %v1147, %v1146
      %v1151 = vpack.c.b16 %v1149, %v1148
      %vm1154 = vcmask 261120
      %v1156 = vsel %vm1154, %v1108, 0
      %v1159 = vsel %vm1154, %v1109, 0
      %v1162 = vsel %vm1154, %v1110, 0
      %v1165 = vsel %vm1154, %v1111, 0
      %v1168 = vsel %vm1154, %v1112, 0
      %v1171 = vsel %vm1154, %v1113, 0
      %v1174 = vsel %vm1154, %v1114, 0
      %v1177 = vsel %vm1154, %v1115, 0
      %v1180 = vsel %vm1154, %v1116, 0
      %v1183 = vsel %vm1154, %v1117, 0
      %1185 = vmatprep.subr.bf16.mxu0 0
      %1186 = vmatpush1.bf16.msra.mxu0 0
      %1187 = vmatprep.subr.bf16.mxu0 0
      %1188 = vmatpush1.bf16.msra.mxu0 0
      %1189 = vmatprep.subr.bf16.mxu0 0
      %1190 = vmatpush1.bf16.msra.mxu0 0
      %1191 = vmatprep.subr.bf16.mxu0 0
      %1192 = vmatpush1.bf16.msra.mxu0 0
      %1193 = vmatprep.subr.bf16.mxu0 0
      %1194 = vmatpush1.bf16.msra.mxu0 0
      %1195 = vmatprep.subr.bf16.mxu0 0
      %1196 = vmatpush1.bf16.msra.mxu0 0
      %1197 = vmatprep.subr.bf16.mxu0 0
      %1198 = vmatpush1.bf16.msra.mxu0 %v1151
      %1199 = vmatprep.subr.bf16.mxu0 0
      %1200 = vmatpush1.bf16.msra.mxu0 %v1150
      %1201 = vmatprep.subr.bf16.mxu0 0
      %1202 = vmatpush2.bf16.msra.mxu0 0
      %1203 = vmatprep.subr.bf16.mxu0 0
      %1204 = vmatpush2.bf16.msra.mxu0 0
      %1205 = vmatprep.subr.bf16.mxu0 0
      %1206 = vmatpush2.bf16.msra.mxu0 0
      %1207 = vmatprep.subr.bf16.mxu0 0
      %1208 = vmatpush2.bf16.msra.mxu0 0
      %1209 = vmatprep.subr.bf16.mxu0 0
      %1210 = vmatpush2.bf16.msra.mxu0 0
      %1211 = vmatprep.subr.bf16.mxu0 0
      %1212 = vmatpush2.bf16.msra.mxu0 0
      %1213 = vmatprep.subr.bf16.mxu0 0
      %1214 = vmatpush2.bf16.msra.mxu0 0
      %1215 = vmatprep.subr.bf16.mxu0 0
      %1216 = vmatpush2.bf16.msra.mxu0 0
      %1217 = vmatprep.mubr.bf16.mxu0 0
      %1218 = vmatmul.mubr.bf16.gmra.mxu0 %v1156
      %v1219 = vpop.f32.mrf.mxu0
      %v1220 = vadd.f32 %v1122, %v1219
      %v1221 = vpop.f32.mrf.mxu0
      %v1222 = vpop.f32.mrf.mxu0
      %v1223 = vadd.f32 %v1123, %v1222
      %v1224 = vpop.f32.mrf.mxu0
      %1225 = vmatprep.mubr.bf16.mxu0 0
      %1226 = vmatmul.mubr.bf16.gmra.mxu0 %v1159
      %v1227 = vpop.f32.mrf.mxu0
      %v1228 = vadd.f32 %v1124, %v1227
      %v1229 = vpop.f32.mrf.mxu0
      %v1230 = vpop.f32.mrf.mxu0
      %v1231 = vadd.f32 %v1125, %v1230
      %v1232 = vpop.f32.mrf.mxu0
      %1233 = vmatprep.mubr.bf16.mxu0 0
      %1234 = vmatmul.mubr.bf16.gmra.mxu0 %v1162
      %v1235 = vpop.f32.mrf.mxu0
      %v1236 = vadd.f32 %v1126, %v1235
      %v1237 = vpop.f32.mrf.mxu0
      %v1238 = vpop.f32.mrf.mxu0
      %v1239 = vadd.f32 %v1127, %v1238
      %v1240 = vpop.f32.mrf.mxu0
      %1241 = vmatprep.mubr.bf16.mxu0 0
      %1242 = vmatmul.mubr.bf16.gmra.mxu0 %v1165
      %v1243 = vpop.f32.mrf.mxu0
      %v1244 = vadd.f32 %v1128, %v1243
      %v1245 = vpop.f32.mrf.mxu0
      %v1246 = vpop.f32.mrf.mxu0
      %v1247 = vadd.f32 %v1129, %v1246
      %v1248 = vpop.f32.mrf.mxu0
      %1249 = vmatprep.mubr.bf16.mxu0 0
      %1250 = vmatmul.mubr.bf16.gmra.mxu0 %v1168
      %v1251 = vpop.f32.mrf.mxu0
      %v1252 = vadd.f32 %v1130, %v1251
      %v1253 = vpop.f32.mrf.mxu0
      %v1254 = vpop.f32.mrf.mxu0
      %v1255 = vadd.f32 %v1131, %v1254
      %v1256 = vpop.f32.mrf.mxu0
      %1257 = vmatprep.mubr.bf16.mxu0 0
      %1258 = vmatmul.mubr.bf16.gmra.mxu0 %v1171
      %v1259 = vpop.f32.mrf.mxu0
      %v1260 = vadd.f32 %v1132, %v1259
      %v1261 = vpop.f32.mrf.mxu0
      %v1262 = vpop.f32.mrf.mxu0
      %v1263 = vadd.f32 %v1133, %v1262
      %v1264 = vpop.f32.mrf.mxu0
      %1265 = vmatprep.mubr.bf16.mxu0 0
      %1266 = vmatmul.mubr.bf16.gmra.mxu0 %v1174
      %v1267 = vpop.f32.mrf.mxu0
      %v1268 = vadd.f32 %v1134, %v1267
      %v1269 = vpop.f32.mrf.mxu0
      %v1270 = vpop.f32.mrf.mxu0
      %v1271 = vadd.f32 %v1135, %v1270
      %v1272 = vpop.f32.mrf.mxu0
      %1273 = vmatprep.mubr.bf16.mxu0 0
      %1274 = vmatmul.mubr.bf16.gmra.mxu0 %v1177
      %v1275 = vpop.f32.mrf.mxu0
      %v1276 = vadd.f32 %v1136, %v1275
      %v1277 = vpop.f32.mrf.mxu0
      %v1278 = vpop.f32.mrf.mxu0
      %v1279 = vadd.f32 %v1137, %v1278
      %v1280 = vpop.f32.mrf.mxu0
      %1281 = vmatprep.mubr.bf16.mxu0 0
      %1282 = vmatmul.mubr.bf16.gmra.mxu0 %v1180
      %v1283 = vpop.f32.mrf.mxu0
      %v1284 = vadd.f32 %v1138, %v1283
      %v1285 = vpop.f32.mrf.mxu0
      %v1286 = vpop.f32.mrf.mxu0
      %v1287 = vadd.f32 %v1139, %v1286
      %v1288 = vpop.f32.mrf.mxu0
      %1289 = vmatprep.mubr.bf16.mxu0 0
      %1290 = vmatmul.mubr.bf16.gmra.mxu0 %v1183
      %v1291 = vpop.f32.mrf.mxu0
      %v1292 = vadd.f32 %v1140, %v1291
      %v1293 = vpop.f32.mrf.mxu0
      %v1294 = vpop.f32.mrf.mxu0
      %v1295 = vadd.f32 %v1141, %v1294
      %v1296 = vpop.f32.mrf.mxu0
      %1297 = vdwg.mxu0
      %v1298 = vld [vmem:[%s567] sm:$0xf]
      %v1299 = vld [vmem:[%s567 + $0x4] sm:$0xf]
      %v1300 = vld [vmem:[%s567 + $0x8] sm:$0xf]
      %v1301 = vld [vmem:[%s567 + $0xc] sm:$0xf]
      %v1302 = vld [vmem:[%s549] sm:$0xff]
      %v1303 = vld [vmem:[%s549 + $0x8] sm:$0xff]
      %v1304 = vld [vmem:[%s549 + $0x10] sm:$0xff]
      %v1305 = vld [vmem:[%s549 + $0x18] sm:$0xff]
      %v1306 = vld [vmem:[%s549 + $0x20] sm:$0xff]
      %v1307 = vld [vmem:[%s549 + $0x28] sm:$0xff]
      %v1308 = vld [vmem:[%s549 + $0x30] sm:$0xff]
      %v1309 = vld [vmem:[%s549 + $0x38] sm:$0xff]
      %v1310 = vld [vmem:[%s549 + $0x40] sm:$0xff]
      %v1311 = vld [vmem:[%s549 + $0x48] sm:$0xff]
      %v1312 = vld [vmem:[%s549 + $0x50] sm:$0xff]
      %v1313 = vld [vmem:[%s549 + $0x58] sm:$0xff]
      %v1314 = vld [vmem:[%s549 + $0x60] sm:$0xff]
      %v1315 = vld [vmem:[%s549 + $0x68] sm:$0xff]
      %v1316 = vld [vmem:[%s549 + $0x70] sm:$0xff]
      %v1317 = vld [vmem:[%s549 + $0x78] sm:$0xff]
      %v1318 = vld [vmem:[%s549 + $0x80] sm:$0xff]
      %v1319 = vld [vmem:[%s549 + $0x88] sm:$0xff]
      %v1320 = vld [vmem:[%s549 + $0x90] sm:$0xff]
      %v1321 = vld [vmem:[%s549 + $0x98] sm:$0xff]
      %v1326 = vunpack.c.l.b16 %v1298
      %v1327 = vunpack.c.l.b16 %v1299
      %v1328 = vunpack.c.l.b16 %v1300
      %v1329 = vunpack.c.l.b16 %v1301
      %v1330 = vpack.c.b16 %v1327, %v1326
      %v1331 = vpack.c.b16 %v1329, %v1328
      %1334 = vmatprep.subr.bf16.mxu0 0
      %1335 = vmatpush1.bf16.msra.mxu0 0
      %1336 = vmatprep.subr.bf16.mxu0 0
      %1337 = vmatpush1.bf16.msra.mxu0 0
      %1338 = vmatprep.subr.bf16.mxu0 0
      %1339 = vmatpush1.bf16.msra.mxu0 0
      %1340 = vmatprep.subr.bf16.mxu0 0
      %1341 = vmatpush1.bf16.msra.mxu0 0
      %1342 = vmatprep.subr.bf16.mxu0 0
      %1343 = vmatpush1.bf16.msra.mxu0 0
      %1344 = vmatprep.subr.bf16.mxu0 0
      %1345 = vmatpush1.bf16.msra.mxu0 0
      %1346 = vmatprep.subr.bf16.mxu0 0
      %1347 = vmatpush1.bf16.msra.mxu0 %v1331
      %1348 = vmatprep.subr.bf16.mxu0 0
      %1349 = vmatpush1.bf16.msra.mxu0 %v1330
      %1350 = vmatprep.subr.bf16.mxu0 0
      %1351 = vmatpush2.bf16.msra.mxu0 0
      %1352 = vmatprep.subr.bf16.mxu0 0
      %1353 = vmatpush2.bf16.msra.mxu0 0
      %1354 = vmatprep.subr.bf16.mxu0 0
      %1355 = vmatpush2.bf16.msra.mxu0 0
      %1356 = vmatprep.subr.bf16.mxu0 0
      %1357 = vmatpush2.bf16.msra.mxu0 0
      %1358 = vmatprep.subr.bf16.mxu0 0
      %1359 = vmatpush2.bf16.msra.mxu0 0
      %1360 = vmatprep.subr.bf16.mxu0 0
      %1361 = vmatpush2.bf16.msra.mxu0 0
      %1362 = vmatprep.subr.bf16.mxu0 0
      %1363 = vmatpush2.bf16.msra.mxu0 0
      %1364 = vmatprep.subr.bf16.mxu0 0
      %1365 = vmatpush2.bf16.msra.mxu0 0
      %1366 = vmatprep.mubr.bf16.mxu0 0
      %1367 = vmatmul.mubr.bf16.gmra.mxu0 %v1156
      %v1368 = vpop.f32.mrf.mxu0
      %v1369 = vadd.f32 %v1302, %v1368
      %v1370 = vpop.f32.mrf.mxu0
      %v1371 = vpop.f32.mrf.mxu0
      %v1372 = vadd.f32 %v1303, %v1371
      %v1373 = vpop.f32.mrf.mxu0
      %1374 = vmatprep.mubr.bf16.mxu0 0
      %1375 = vmatmul.mubr.bf16.gmra.mxu0 %v1159
      %v1376 = vpop.f32.mrf.mxu0
      %v1377 = vadd.f32 %v1304, %v1376
      %v1378 = vpop.f32.mrf.mxu0
      %v1379 = vpop.f32.mrf.mxu0
      %v1380 = vadd.f32 %v1305, %v1379
      %v1381 = vpop.f32.mrf.mxu0
      %1382 = vmatprep.mubr.bf16.mxu0 0
      %1383 = vmatmul.mubr.bf16.gmra.mxu0 %v1162
      %v1384 = vpop.f32.mrf.mxu0
      %v1385 = vadd.f32 %v1306, %v1384
      %v1386 = vpop.f32.mrf.mxu0
      %v1387 = vpop.f32.mrf.mxu0
      %v1388 = vadd.f32 %v1307, %v1387
      %v1389 = vpop.f32.mrf.mxu0
      %1390 = vmatprep.mubr.bf16.mxu0 0
      %1391 = vmatmul.mubr.bf16.gmra.mxu0 %v1165
      %v1392 = vpop.f32.mrf.mxu0
      %v1393 = vadd.f32 %v1308, %v1392
      %v1394 = vpop.f32.mrf.mxu0
      %v1395 = vpop.f32.mrf.mxu0
      %v1396 = vadd.f32 %v1309, %v1395
      %v1397 = vpop.f32.mrf.mxu0
      %1398 = vmatprep.mubr.bf16.mxu0 0
      %1399 = vmatmul.mubr.bf16.gmra.mxu0 %v1168
      %v1400 = vpop.f32.mrf.mxu0
      %v1401 = vadd.f32 %v1310, %v1400
      %v1402 = vpop.f32.mrf.mxu0
      %v1403 = vpop.f32.mrf.mxu0
      %v1404 = vadd.f32 %v1311, %v1403
      %v1405 = vpop.f32.mrf.mxu0
      %1406 = vmatprep.mubr.bf16.mxu0 0
      %1407 = vmatmul.mubr.bf16.gmra.mxu0 %v1171
      %v1408 = vpop.f32.mrf.mxu0
      %v1409 = vadd.f32 %v1312, %v1408
      %v1410 = vpop.f32.mrf.mxu0
      %v1411 = vpop.f32.mrf.mxu0
      %v1412 = vadd.f32 %v1313, %v1411
      %v1413 = vpop.f32.mrf.mxu0
      %1414 = vmatprep.mubr.bf16.mxu0 0
      %1415 = vmatmul.mubr.bf16.gmra.mxu0 %v1174
      %v1416 = vpop.f32.mrf.mxu0
      %v1417 = vadd.f32 %v1314, %v1416
      %v1418 = vpop.f32.mrf.mxu0
      %v1419 = vpop.f32.mrf.mxu0
      %v1420 = vadd.f32 %v1315, %v1419
      %v1421 = vpop.f32.mrf.mxu0
      %1422 = vmatprep.mubr.bf16.mxu0 0
      %1423 = vmatmul.mubr.bf16.gmra.mxu0 %v1177
      %v1424 = vpop.f32.mrf.mxu0
      %v1425 = vadd.f32 %v1316, %v1424
      %v1426 = vpop.f32.mrf.mxu0
      %v1427 = vpop.f32.mrf.mxu0
      %v1428 = vadd.f32 %v1317, %v1427
      %v1429 = vpop.f32.mrf.mxu0
      %1430 = vmatprep.mubr.bf16.mxu0 0
      %1431 = vmatmul.mubr.bf16.gmra.mxu0 %v1180
      %v1432 = vpop.f32.mrf.mxu0
      %v1433 = vadd.f32 %v1318, %v1432
      %v1434 = vpop.f32.mrf.mxu0
      %v1435 = vpop.f32.mrf.mxu0
      %v1436 = vadd.f32 %v1319, %v1435
      %v1437 = vpop.f32.mrf.mxu0
      %1438 = vmatprep.mubr.bf16.mxu0 0
      %1439 = vmatmul.mubr.bf16.gmra.mxu0 %v1183
      %v1440 = vpop.f32.mrf.mxu0
      %v1441 = vadd.f32 %v1320, %v1440
      %v1442 = vpop.f32.mrf.mxu0
      %v1443 = vpop.f32.mrf.mxu0
      %v1444 = vadd.f32 %v1321, %v1443
      %v1445 = vpop.f32.mrf.mxu0
      %1446 = vdwg.mxu0
      %v1447 = vld [vmem:[%s576] sm:$0xf]
      %v1448 = vld [vmem:[%s576 + $0x4] sm:$0xf]
      %v1449 = vld [vmem:[%s576 + $0x8] sm:$0xf]
      %v1450 = vld [vmem:[%s576 + $0xc] sm:$0xf]
      %v1451 = vld [vmem:[%s592] sm:$0x1]
      %v1453 = vlaneseq
      %v1454 = vshrl.u32 %v1453, 7
      %v1455 = vsub.s32 0, %v1454
      %v1456 = vrot.slane %v1451, %v1455
      %v1462 = vunpack.c.l.b16 %v1447
      %v1463 = vunpack.c.l.b16 %v1448
      %v1464 = vunpack.c.l.b16 %v1449
      %v1465 = vunpack.c.l.b16 %v1450
      %v1466 = vpack.c.b16 %v1463, %v1462
      %v1467 = vpack.c.b16 %v1465, %v1464
      %1470 = vmatprep.subr.bf16.mxu0 0
      %1471 = vmatpush1.bf16.msra.mxu0 0
      %1472 = vmatprep.subr.bf16.mxu0 0
      %1473 = vmatpush1.bf16.msra.mxu0 0
      %1474 = vmatprep.subr.bf16.mxu0 0
      %1475 = vmatpush1.bf16.msra.mxu0 0
      %1476 = vmatprep.subr.bf16.mxu0 0
      %1477 = vmatpush1.bf16.msra.mxu0 0
      %1478 = vmatprep.subr.bf16.mxu0 0
      %1479 = vmatpush1.bf16.msra.mxu0 0
      %1480 = vmatprep.subr.bf16.mxu0 0
      %1481 = vmatpush1.bf16.msra.mxu0 0
      %1482 = vmatprep.subr.bf16.mxu0 0
      %1483 = vmatpush1.bf16.msra.mxu0 %v1467
      %1484 = vmatprep.subr.bf16.mxu0 0
      %1485 = vmatpush1.bf16.msra.mxu0 %v1466
      %1486 = vmatprep.subr.bf16.mxu0 0
      %1487 = vmatpush2.bf16.msra.mxu0 0
      %1488 = vmatprep.subr.bf16.mxu0 0
      %1489 = vmatpush2.bf16.msra.mxu0 0
      %1490 = vmatprep.subr.bf16.mxu0 0
      %1491 = vmatpush2.bf16.msra.mxu0 0
      %1492 = vmatprep.subr.bf16.mxu0 0
      %1493 = vmatpush2.bf16.msra.mxu0 0
      %1494 = vmatprep.subr.bf16.mxu0 0
      %1495 = vmatpush2.bf16.msra.mxu0 0
      %1496 = vmatprep.subr.bf16.mxu0 0
      %1497 = vmatpush2.bf16.msra.mxu0 0
      %1498 = vmatprep.subr.bf16.mxu0 0
      %1499 = vmatpush2.bf16.msra.mxu0 0
      %1500 = vmatprep.subr.bf16.mxu0 0
      %1501 = vmatpush2.bf16.msra.mxu0 0
      %1502 = vmatprep.mubr.bf16.mxu0 0
      %1503 = vmatmul.mubr.bf16.gmra.mxu0 %v1156
      %v1504 = vpop.f32.mrf.mxu0
      %v1505 = vadd.f32 %v1456, %v1504
      %v1506 = vpop.f32.mrf.mxu0
      %v1507 = vpop.f32.mrf.mxu0
      %v1508 = vadd.f32 %v1456, %v1507
      %v1509 = vpop.f32.mrf.mxu0
      %1510 = vmatprep.mubr.bf16.mxu0 0
      %1511 = vmatmul.mubr.bf16.gmra.mxu0 %v1159
      %v1512 = vpop.f32.mrf.mxu0
      %v1513 = vadd.f32 %v1456, %v1512
      %v1514 = vpop.f32.mrf.mxu0
      %v1515 = vpop.f32.mrf.mxu0
      %v1516 = vadd.f32 %v1456, %v1515
      %v1517 = vpop.f32.mrf.mxu0
      %1518 = vmatprep.mubr.bf16.mxu0 0
      %1519 = vmatmul.mubr.bf16.gmra.mxu0 %v1162
      %v1520 = vpop.f32.mrf.mxu0
      %v1521 = vadd.f32 %v1456, %v1520
      %v1522 = vpop.f32.mrf.mxu0
      %v1523 = vpop.f32.mrf.mxu0
      %v1524 = vadd.f32 %v1456, %v1523
      %v1525 = vpop.f32.mrf.mxu0
      %1526 = vmatprep.mubr.bf16.mxu0 0
      %1527 = vmatmul.mubr.bf16.gmra.mxu0 %v1165
      %v1528 = vpop.f32.mrf.mxu0
      %v1529 = vadd.f32 %v1456, %v1528
      %v1530 = vpop.f32.mrf.mxu0
      %v1531 = vpop.f32.mrf.mxu0
      %v1532 = vadd.f32 %v1456, %v1531
      %v1533 = vpop.f32.mrf.mxu0
      %1534 = vmatprep.mubr.bf16.mxu0 0
      %1535 = vmatmul.mubr.bf16.gmra.mxu0 %v1168
      %v1536 = vpop.f32.mrf.mxu0
      %v1537 = vadd.f32 %v1456, %v1536
      %v1538 = vpop.f32.mrf.mxu0
      %v1539 = vpop.f32.mrf.mxu0
      %v1540 = vadd.f32 %v1456, %v1539
      %v1541 = vpop.f32.mrf.mxu0
      %1542 = vmatprep.mubr.bf16.mxu0 0
      %1543 = vmatmul.mubr.bf16.gmra.mxu0 %v1171
      %v1544 = vpop.f32.mrf.mxu0
      %v1545 = vadd.f32 %v1456, %v1544
      %v1546 = vpop.f32.mrf.mxu0
      %v1547 = vpop.f32.mrf.mxu0
      %v1548 = vadd.f32 %v1456, %v1547
      %v1549 = vpop.f32.mrf.mxu0
      %1550 = vmatprep.mubr.bf16.mxu0 0
      %1551 = vmatmul.mubr.bf16.gmra.mxu0 %v1174
      %v1552 = vpop.f32.mrf.mxu0
      %v1553 = vadd.f32 %v1456, %v1552
      %v1554 = vpop.f32.mrf.mxu0
      %v1555 = vpop.f32.mrf.mxu0
      %v1556 = vadd.f32 %v1456, %v1555
      %v1557 = vpop.f32.mrf.mxu0
      %1558 = vmatprep.mubr.bf16.mxu0 0
      %1559 = vmatmul.mubr.bf16.gmra.mxu0 %v1177
      %v1560 = vpop.f32.mrf.mxu0
      %v1561 = vadd.f32 %v1456, %v1560
      %v1562 = vpop.f32.mrf.mxu0
      %v1563 = vpop.f32.mrf.mxu0
      %v1564 = vadd.f32 %v1456, %v1563
      %v1565 = vpop.f32.mrf.mxu0
      %1566 = vmatprep.mubr.bf16.mxu0 0
      %1567 = vmatmul.mubr.bf16.gmra.mxu0 %v1180
      %v1568 = vpop.f32.mrf.mxu0
      %v1569 = vadd.f32 %v1456, %v1568
      %v1570 = vpop.f32.mrf.mxu0
      %v1571 = vpop.f32.mrf.mxu0
      %v1572 = vadd.f32 %v1456, %v1571
      %v1573 = vpop.f32.mrf.mxu0
      %1574 = vmatprep.mubr.bf16.mxu0 0
      %1575 = vmatmul.mubr.bf16.gmra.mxu0 %v1183
      %v1576 = vpop.f32.mrf.mxu0
      %v1577 = vadd.f32 %v1456, %v1576
      %v1578 = vpop.f32.mrf.mxu0
      %v1579 = vpop.f32.mrf.mxu0
      %v1580 = vadd.f32 %v1456, %v1579
      %v1581 = vpop.f32.mrf.mxu0
      %1582 = vdwg.mxu0
      %v1583 = vld [vmem:[#allocation3] sm:$0xff]
      %v1584 = vld [vmem:[#allocation3 + $0x8] sm:$0xff]
      %v1585 = vld [vmem:[#allocation3 + $0x10] sm:$0xff]
      %v1586 = vld [vmem:[#allocation3 + $0x18] sm:$0xff]
      %v1587 = vld [vmem:[#allocation3 + $0x20] sm:$0xff]
      %v1588 = vld [vmem:[#allocation3 + $0x28] sm:$0xff]
      %v1589 = vld [vmem:[#allocation3 + $0x30] sm:$0xff]
      %v1590 = vld [vmem:[#allocation3 + $0x38] sm:$0xff]
      %v1591 = vld [vmem:[#allocation3 + $0x40] sm:$0xff]
      %v1592 = vld [vmem:[#allocation3 + $0x48] sm:$0xff]
      %v1593 = vld [vmem:[#allocation3 + $0x50] sm:$0xff]
      %v1594 = vld [vmem:[#allocation3 + $0x58] sm:$0xff]
      %v1595 = vld [vmem:[#allocation3 + $0x60] sm:$0xff]
      %v1596 = vld [vmem:[#allocation3 + $0x68] sm:$0xff]
      %v1597 = vld [vmem:[#allocation3 + $0x70] sm:$0xff]
      %v1598 = vld [vmem:[#allocation3 + $0x78] sm:$0xff]
      %v1599 = vld [vmem:[#allocation3 + $0x80] sm:$0xff]
      %v1600 = vld [vmem:[#allocation3 + $0x88] sm:$0xff]
      %v1601 = vld [vmem:[#allocation3 + $0x90] sm:$0xff]
      %v1602 = vld [vmem:[#allocation3 + $0x98] sm:$0xff]
      %v1603 = vld [vmem:[#allocation3 + $0xa0] sm:$0xff]
      %v1604 = vld [vmem:[#allocation3 + $0xa8] sm:$0xff]
      %v1605 = vld [vmem:[#allocation3 + $0xb0] sm:$0xff]
      %v1606 = vld [vmem:[#allocation3 + $0xb8] sm:$0xff]
      %v1607 = vld [vmem:[#allocation3 + $0xc0] sm:$0xff]
      %v1608 = vld [vmem:[#allocation3 + $0xc8] sm:$0xff]
      %v1609 = vld [vmem:[#allocation3 + $0xd0] sm:$0xff]
      %v1610 = vld [vmem:[#allocation3 + $0xd8] sm:$0xff]
      %v1611 = vld [vmem:[#allocation3 + $0xe0] sm:$0xff]
      %v1612 = vld [vmem:[#allocation3 + $0xe8] sm:$0xff]
      %v1613 = vld [vmem:[#allocation3 + $0xf0] sm:$0xff]
      %v1614 = vld [vmem:[#allocation3 + $0xf8] sm:$0xff]
      %v1615 = vld [vmem:[#allocation3 + $0x100] sm:$0xff]
      %v1616 = vld [vmem:[#allocation3 + $0x108] sm:$0xff]
      %v1617 = vld [vmem:[#allocation3 + $0x110] sm:$0xff]
      %v1618 = vld [vmem:[#allocation3 + $0x118] sm:$0xff]
      %v1619 = vld [vmem:[#allocation3 + $0x120] sm:$0xff]
      %v1620 = vld [vmem:[#allocation3 + $0x128] sm:$0xff]
      %v1621 = vld [vmem:[#allocation3 + $0x130] sm:$0xff]
      %v1622 = vld [vmem:[#allocation3 + $0x138] sm:$0xff]
      %v1623 = vld [vmem:[%s585] sm:$0xf]
      %v1624 = vld [vmem:[%s585 + $0x4] sm:$0xf]
      %v1625 = vld [vmem:[%s585 + $0x8] sm:$0xf]
      %v1626 = vld [vmem:[%s585 + $0xc] sm:$0xf]
      %v1627 = vld [vmem:[%s599] sm:$0x1]
      %v1628 = vpack.c.bf16 %v1223, %v1220
      %v1629 = vpack.c.bf16 %v1231, %v1228
      %v1630 = vpack.c.bf16 %v1239, %v1236
      %v1631 = vpack.c.bf16 %v1247, %v1244
      %v1632 = vpack.c.bf16 %v1255, %v1252
      %v1633 = vpack.c.bf16 %v1263, %v1260
      %v1634 = vpack.c.bf16 %v1271, %v1268
      %v1635 = vpack.c.bf16 %v1279, %v1276
      %v1636 = vpack.c.bf16 %v1287, %v1284
      %v1637 = vpack.c.bf16 %v1295, %v1292
      %v1638 = vpack.c.bf16 %v1372, %v1369
      %v1639 = vpack.c.bf16 %v1380, %v1377
      %v1640 = vpack.c.bf16 %v1388, %v1385
      %v1641 = vpack.c.bf16 %v1396, %v1393
      %v1642 = vpack.c.bf16 %v1404, %v1401
      %v1643 = vpack.c.bf16 %v1412, %v1409
      %v1644 = vpack.c.bf16 %v1420, %v1417
      %v1645 = vpack.c.bf16 %v1428, %v1425
      %v1646 = vpack.c.bf16 %v1436, %v1433
      %v1647 = vpack.c.bf16 %v1444, %v1441
      %v1649 = vsel %vm1154, %v1628, 0
      %v1652 = vsel %vm1154, %v1629, 0
      %v1655 = vsel %vm1154, %v1630, 0
      %v1658 = vsel %vm1154, %v1631, 0
      %v1661 = vsel %vm1154, %v1632, 0
      %v1664 = vsel %vm1154, %v1633, 0
      %v1667 = vsel %vm1154, %v1634, 0
      %v1670 = vsel %vm1154, %v1635, 0
      %v1673 = vsel %vm1154, %v1636, 0
      %v1676 = vsel %vm1154, %v1637, 0
      %v1679 = vsel %vm1154, %v1638, 0
      %v1682 = vsel %vm1154, %v1639, 0
      %v1685 = vsel %vm1154, %v1640, 0
      %v1688 = vsel %vm1154, %v1641, 0
      %v1691 = vsel %vm1154, %v1642, 0
      %v1694 = vsel %vm1154, %v1643, 0
      %v1697 = vsel %vm1154, %v1644, 0
      %v1700 = vsel %vm1154, %v1645, 0
      %v1703 = vsel %vm1154, %v1646, 0
      %v1706 = vsel %vm1154, %v1647, 0
      %1708 = vmatprep.subr.bf16.mxu0 0
      %1709 = vmatpush1.bf16.xpose.msra.mxu0 %v1700
      %1710 = vmatprep.subr.bf16.mxu0 0
      %1711 = vmatpush1.bf16.xpose.msra.mxu0 %v1697
      %1712 = vmatprep.subr.bf16.mxu0 0
      %1713 = vmatpush1.bf16.xpose.msra.mxu0 %v1694
      %1714 = vmatprep.subr.bf16.mxu0 0
      %1715 = vmatpush1.bf16.xpose.msra.mxu0 %v1691
      %1716 = vmatprep.subr.bf16.mxu0 0
      %1717 = vmatpush1.bf16.xpose.msra.mxu0 %v1688
      %1718 = vmatprep.subr.bf16.mxu0 0
      %1719 = vmatpush1.bf16.xpose.msra.mxu0 %v1685
      %1720 = vmatprep.subr.bf16.mxu0 0
      %1721 = vmatpush1.bf16.xpose.msra.mxu0 %v1682
      %1722 = vmatprep.subr.bf16.mxu0 0
      %1723 = vmatpush1.bf16.xpose.msra.mxu0 %v1679
      %1724 = vmatprep.subr.bf16.mxu0 0
      %1725 = vmatpush2.bf16.xpose.msra.mxu0 0
      %1726 = vmatprep.subr.bf16.mxu0 0
      %1727 = vmatpush2.bf16.xpose.msra.mxu0 0
      %1728 = vmatprep.subr.bf16.mxu0 0
      %1729 = vmatpush2.bf16.xpose.msra.mxu0 0
      %1730 = vmatprep.subr.bf16.mxu0 0
      %1731 = vmatpush2.bf16.xpose.msra.mxu0 0
      %1732 = vmatprep.subr.bf16.mxu0 0
      %1733 = vmatpush2.bf16.xpose.msra.mxu0 0
      %1734 = vmatprep.subr.bf16.mxu0 0
      %1735 = vmatpush2.bf16.xpose.msra.mxu0 0
      %1736 = vmatprep.subr.bf16.mxu0 0
      %1737 = vmatpush2.bf16.xpose.msra.mxu0 %v1706
      %1738 = vmatprep.subr.bf16.mxu0 0
      %1739 = vmatpush2.bf16.xpose.msra.mxu0 %v1703
      %1740 = vmatprep.mubr.bf16.mxu0 0
      %1741 = vmatmul.mubr.bf16.gmra.mxu0 %v1649
      %v1742 = vpop.f32.mrf.mxu0
      %v1743 = vadd.f32 %v1583, %v1742
      %v1744 = vpop.f32.mrf.mxu0
      %v1745 = vadd.f32 %v1584, %v1744
      %v1746 = vpop.f32.mrf.mxu0
      %v1747 = vadd.f32 %v1585, %v1746
      %v1748 = vpop.f32.mrf.mxu0
      %v1749 = vadd.f32 %v1586, %v1748
      %1750 = vmatprep.mubr.bf16.mxu0 0
      %1751 = vmatmul.mubr.bf16.gmra.mxu0 %v1652
      %v1752 = vpop.f32.mrf.mxu0
      %v1753 = vadd.f32 %v1587, %v1752
      %v1754 = vpop.f32.mrf.mxu0
      %v1755 = vadd.f32 %v1588, %v1754
      %v1756 = vpop.f32.mrf.mxu0
      %v1757 = vadd.f32 %v1589, %v1756
      %v1758 = vpop.f32.mrf.mxu0
      %v1759 = vadd.f32 %v1590, %v1758
      %1760 = vmatprep.mubr.bf16.mxu0 0
      %1761 = vmatmul.mubr.bf16.gmra.mxu0 %v1655
      %v1762 = vpop.f32.mrf.mxu0
      %v1763 = vadd.f32 %v1591, %v1762
      %v1764 = vpop.f32.mrf.mxu0
      %v1765 = vadd.f32 %v1592, %v1764
      %v1766 = vpop.f32.mrf.mxu0
      %v1767 = vadd.f32 %v1593, %v1766
      %v1768 = vpop.f32.mrf.mxu0
      %v1769 = vadd.f32 %v1594, %v1768
      %1770 = vmatprep.mubr.bf16.mxu0 0
      %1771 = vmatmul.mubr.bf16.gmra.mxu0 %v1658
      %v1772 = vpop.f32.mrf.mxu0
      %v1773 = vadd.f32 %v1595, %v1772
      %v1774 = vpop.f32.mrf.mxu0
      %v1775 = vadd.f32 %v1596, %v1774
      %v1776 = vpop.f32.mrf.mxu0
      %v1777 = vadd.f32 %v1597, %v1776
      %v1778 = vpop.f32.mrf.mxu0
      %v1779 = vadd.f32 %v1598, %v1778
      %1780 = vmatprep.mubr.bf16.mxu0 0
      %1781 = vmatmul.mubr.bf16.gmra.mxu0 %v1661
      %v1782 = vpop.f32.mrf.mxu0
      %v1783 = vadd.f32 %v1599, %v1782
      %v1784 = vpop.f32.mrf.mxu0
      %v1785 = vadd.f32 %v1600, %v1784
      %v1786 = vpop.f32.mrf.mxu0
      %v1787 = vadd.f32 %v1601, %v1786
      %v1788 = vpop.f32.mrf.mxu0
      %v1789 = vadd.f32 %v1602, %v1788
      %1790 = vmatprep.mubr.bf16.mxu0 0
      %1791 = vmatmul.mubr.bf16.gmra.mxu0 %v1664
      %v1792 = vpop.f32.mrf.mxu0
      %v1793 = vadd.f32 %v1603, %v1792
      %v1794 = vpop.f32.mrf.mxu0
      %v1795 = vadd.f32 %v1604, %v1794
      %v1796 = vpop.f32.mrf.mxu0
      %v1797 = vadd.f32 %v1605, %v1796
      %v1798 = vpop.f32.mrf.mxu0
      %v1799 = vadd.f32 %v1606, %v1798
      %1800 = vmatprep.mubr.bf16.mxu0 0
      %1801 = vmatmul.mubr.bf16.gmra.mxu0 %v1667
      %v1802 = vpop.f32.mrf.mxu0
      %v1803 = vadd.f32 %v1607, %v1802
      %v1804 = vpop.f32.mrf.mxu0
      %v1805 = vadd.f32 %v1608, %v1804
      %v1806 = vpop.f32.mrf.mxu0
      %v1807 = vadd.f32 %v1609, %v1806
      %v1808 = vpop.f32.mrf.mxu0
      %v1809 = vadd.f32 %v1610, %v1808
      %1810 = vmatprep.mubr.bf16.mxu0 0
      %1811 = vmatmul.mubr.bf16.gmra.mxu0 %v1670
      %v1812 = vpop.f32.mrf.mxu0
      %v1813 = vadd.f32 %v1611, %v1812
      %v1814 = vpop.f32.mrf.mxu0
      %v1815 = vadd.f32 %v1612, %v1814
      %v1816 = vpop.f32.mrf.mxu0
      %v1817 = vadd.f32 %v1613, %v1816
      %v1818 = vpop.f32.mrf.mxu0
      %v1819 = vadd.f32 %v1614, %v1818
      %1820 = vmatprep.mubr.bf16.mxu0 0
      %1821 = vmatmul.mubr.bf16.gmra.mxu0 %v1673
      %v1822 = vpop.f32.mrf.mxu0
      %v1823 = vadd.f32 %v1615, %v1822
      %v1824 = vpop.f32.mrf.mxu0
      %v1825 = vadd.f32 %v1616, %v1824
      %v1826 = vpop.f32.mrf.mxu0
      %v1827 = vadd.f32 %v1617, %v1826
      %v1828 = vpop.f32.mrf.mxu0
      %v1829 = vadd.f32 %v1618, %v1828
      %1830 = vmatprep.mubr.bf16.mxu0 0
      %1831 = vmatmul.mubr.bf16.gmra.mxu0 %v1676
      %v1832 = vpop.f32.mrf.mxu0
      %v1833 = vadd.f32 %v1619, %v1832
      %v1834 = vpop.f32.mrf.mxu0
      %v1835 = vadd.f32 %v1620, %v1834
      %v1836 = vpop.f32.mrf.mxu0
      %v1837 = vadd.f32 %v1621, %v1836
      %v1838 = vpop.f32.mrf.mxu0
      %v1839 = vadd.f32 %v1622, %v1838
      %1840 = vdwg.mxu0
      %v1841 = vsel %vm1154, %v1745, -inf
      %v1842 = vmax.f32 %v1743, %v1841
      %1843 = vmax.xlane.f32.xlu0 %v1842
      %v1844 = vpop.xlane.xlu0 %1843
      %v1845 = vsel %vm1154, %v1749, -inf
      %v1846 = vmax.f32 %v1747, %v1845
      %1847 = vmax.xlane.f32.xlu0 %v1846
      %v1848 = vpop.xlane.xlu0 %1847
      %v1849 = vsel %vm1154, %v1755, -inf
      %v1850 = vmax.f32 %v1753, %v1849
      %1851 = vmax.xlane.f32.xlu0 %v1850
      %v1852 = vpop.xlane.xlu0 %1851
      %v1853 = vsel %vm1154, %v1759, -inf
      %v1854 = vmax.f32 %v1757, %v1853
      %1855 = vmax.xlane.f32.xlu0 %v1854
      %v1856 = vpop.xlane.xlu0 %1855
      %v1857 = vsel %vm1154, %v1765, -inf
      %v1858 = vmax.f32 %v1763, %v1857
      %1859 = vmax.xlane.f32.xlu0 %v1858
      %v1860 = vpop.xlane.xlu0 %1859
      %v1861 = vsel %vm1154, %v1769, -inf
      %v1862 = vmax.f32 %v1767, %v1861
      %1863 = vmax.xlane.f32.xlu0 %v1862
      %v1864 = vpop.xlane.xlu0 %1863
      %v1865 = vsel %vm1154, %v1775, -inf
      %v1866 = vmax.f32 %v1773, %v1865
      %1867 = vmax.xlane.f32.xlu0 %v1866
      %v1868 = vpop.xlane.xlu0 %1867
      %v1869 = vsel %vm1154, %v1779, -inf
      %v1870 = vmax.f32 %v1777, %v1869
      %1871 = vmax.xlane.f32.xlu0 %v1870
      %v1872 = vpop.xlane.xlu0 %1871
      %v1873 = vsel %vm1154, %v1785, -inf
      %v1874 = vmax.f32 %v1783, %v1873
      %1875 = vmax.xlane.f32.xlu0 %v1874
      %v1876 = vpop.xlane.xlu0 %1875
      %v1877 = vsel %vm1154, %v1789, -inf
      %v1878 = vmax.f32 %v1787, %v1877
      %1879 = vmax.xlane.f32.xlu0 %v1878
      %v1880 = vpop.xlane.xlu0 %1879
      %v1881 = vsel %vm1154, %v1795, -inf
      %v1882 = vmax.f32 %v1793, %v1881
      %1883 = vmax.xlane.f32.xlu0 %v1882
      %v1884 = vpop.xlane.xlu0 %1883
      %v1885 = vsel %vm1154, %v1799, -inf
      %v1886 = vmax.f32 %v1797, %v1885
      %1887 = vmax.xlane.f32.xlu0 %v1886
      %v1888 = vpop.xlane.xlu0 %1887
      %v1889 = vsel %vm1154, %v1805, -inf
      %v1890 = vmax.f32 %v1803, %v1889
      %1891 = vmax.xlane.f32.xlu0 %v1890
      %v1892 = vpop.xlane.xlu0 %1891
      %v1893 = vsel %vm1154, %v1809, -inf
      %v1894 = vmax.f32 %v1807, %v1893
      %1895 = vmax.xlane.f32.xlu0 %v1894
      %v1896 = vpop.xlane.xlu0 %1895
      %v1897 = vsel %vm1154, %v1815, -inf
      %v1898 = vmax.f32 %v1813, %v1897
      %1899 = vmax.xlane.f32.xlu0 %v1898
      %v1900 = vpop.xlane.xlu0 %1899
      %v1901 = vsel %vm1154, %v1819, -inf
      %v1902 = vmax.f32 %v1817, %v1901
      %1903 = vmax.xlane.f32.xlu0 %v1902
      %v1904 = vpop.xlane.xlu0 %1903
      %v1905 = vsel %vm1154, %v1825, -inf
      %v1906 = vmax.f32 %v1823, %v1905
      %1907 = vmax.xlane.f32.xlu0 %v1906
      %v1908 = vpop.xlane.xlu0 %1907
      %v1909 = vsel %vm1154, %v1829, -inf
      %v1910 = vmax.f32 %v1827, %v1909
      %1911 = vmax.xlane.f32.xlu0 %v1910
      %v1912 = vpop.xlane.xlu0 %1911
      %v1913 = vsel %vm1154, %v1835, -inf
      %v1914 = vmax.f32 %v1833, %v1913
      %1915 = vmax.xlane.f32.xlu0 %v1914
      %v1916 = vpop.xlane.xlu0 %1915
      %v1917 = vsel %vm1154, %v1839, -inf
      %v1918 = vmax.f32 %v1837, %v1917
      %1919 = vmax.xlane.f32.xlu0 %v1918
      %v1920 = vpop.xlane.xlu0 %1919
      %v1921 = vsub.f32 %v1743, %v1844
      %v1922 = vsub.f32 %v1745, %v1844
      %v1923 = vsub.f32 %v1747, %v1848
      %v1924 = vsub.f32 %v1749, %v1848
      %v1925 = vsub.f32 %v1753, %v1852
      %v1926 = vsub.f32 %v1755, %v1852
      %v1927 = vsub.f32 %v1757, %v1856
      %v1928 = vsub.f32 %v1759, %v1856
      %v1929 = vsub.f32 %v1763, %v1860
      %v1930 = vsub.f32 %v1765, %v1860
      %v1931 = vsub.f32 %v1767, %v1864
      %v1932 = vsub.f32 %v1769, %v1864
      %v1933 = vsub.f32 %v1773, %v1868
      %v1934 = vsub.f32 %v1775, %v1868
      %v1935 = vsub.f32 %v1777, %v1872
      %v1936 = vsub.f32 %v1779, %v1872
      %v1937 = vsub.f32 %v1783, %v1876
      %v1938 = vsub.f32 %v1785, %v1876
      %v1939 = vsub.f32 %v1787, %v1880
      %v1940 = vsub.f32 %v1789, %v1880
      %v1941 = vsub.f32 %v1793, %v1884
      %v1942 = vsub.f32 %v1795, %v1884
      %v1943 = vsub.f32 %v1797, %v1888
      %v1944 = vsub.f32 %v1799, %v1888
      %v1945 = vsub.f32 %v1803, %v1892
      %v1946 = vsub.f32 %v1805, %v1892
      %v1947 = vsub.f32 %v1807, %v1896
      %v1948 = vsub.f32 %v1809, %v1896
      %v1949 = vsub.f32 %v1813, %v1900
      %v1950 = vsub.f32 %v1815, %v1900
      %v1951 = vsub.f32 %v1817, %v1904
      %v1952 = vsub.f32 %v1819, %v1904
      %v1953 = vsub.f32 %v1823, %v1908
      %v1954 = vsub.f32 %v1825, %v1908
      %v1955 = vsub.f32 %v1827, %v1912
      %v1956 = vsub.f32 %v1829, %v1912
      %v1957 = vsub.f32 %v1833, %v1916
      %v1958 = vsub.f32 %v1835, %v1916
      %v1959 = vsub.f32 %v1837, %v1920
      %v1960 = vsub.f32 %v1839, %v1920
      %v1961 = vmul.f32 %v1921, 1.442695
      %v1962 = vpow.pop %v1961
      %v1963 = vmul.f32 %v1922, 1.442695
      %v1964 = vpow.pop %v1963
      %v1965 = vmul.f32 %v1923, 1.442695
      %v1966 = vpow.pop %v1965
      %v1967 = vmul.f32 %v1924, 1.442695
      %v1968 = vpow.pop %v1967
      %v1969 = vmul.f32 %v1925, 1.442695
      %v1970 = vpow.pop %v1969
      %v1971 = vmul.f32 %v1926, 1.442695
      %v1972 = vpow.pop %v1971
      %v1973 = vmul.f32 %v1927, 1.442695
      %v1974 = vpow.pop %v1973
      %v1975 = vmul.f32 %v1928, 1.442695
      %v1976 = vpow.pop %v1975
      %v1977 = vmul.f32 %v1929, 1.442695
      %v1978 = vpow.pop %v1977
      %v1979 = vmul.f32 %v1930, 1.442695
      %v1980 = vpow.pop %v1979
      %v1981 = vmul.f32 %v1931, 1.442695
      %v1982 = vpow.pop %v1981
      %v1983 = vmul.f32 %v1932, 1.442695
      %v1984 = vpow.pop %v1983
      %v1985 = vmul.f32 %v1933, 1.442695
      %v1986 = vpow.pop %v1985
      %v1987 = vmul.f32 %v1934, 1.442695
      %v1988 = vpow.pop %v1987
      %v1989 = vmul.f32 %v1935, 1.442695
      %v1990 = vpow.pop %v1989
      %v1991 = vmul.f32 %v1936, 1.442695
      %v1992 = vpow.pop %v1991
      %v1993 = vmul.f32 %v1937, 1.442695
      %v1994 = vpow.pop %v1993
      %v1995 = vmul.f32 %v1938, 1.442695
      %v1996 = vpow.pop %v1995
      %v1997 = vmul.f32 %v1939, 1.442695
      %v1998 = vpow.pop %v1997
      %v1999 = vmul.f32 %v1940, 1.442695
      %v2000 = vpow.pop %v1999
      %v2001 = vmul.f32 %v1941, 1.442695
      %v2002 = vpow.pop %v2001
      %v2003 = vmul.f32 %v1942, 1.442695
      %v2004 = vpow.pop %v2003
      %v2005 = vmul.f32 %v1943, 1.442695
      %v2006 = vpow.pop %v2005
      %v2007 = vmul.f32 %v1944, 1.442695
      %v2008 = vpow.pop %v2007
      %v2009 = vmul.f32 %v1945, 1.442695
      %v2010 = vpow.pop %v2009
      %v2011 = vmul.f32 %v1946, 1.442695
      %v2012 = vpow.pop %v2011
      %v2013 = vmul.f32 %v1947, 1.442695
      %v2014 = vpow.pop %v2013
      %v2015 = vmul.f32 %v1948, 1.442695
      %v2016 = vpow.pop %v2015
      %v2017 = vmul.f32 %v1949, 1.442695
      %v2018 = vpow.pop %v2017
      %v2019 = vmul.f32 %v1950, 1.442695
      %v2020 = vpow.pop %v2019
      %v2021 = vmul.f32 %v1951, 1.442695
      %v2022 = vpow.pop %v2021
      %v2023 = vmul.f32 %v1952, 1.442695
      %v2024 = vpow.pop %v2023
      %v2025 = vmul.f32 %v1953, 1.442695
      %v2026 = vpow.pop %v2025
      %v2027 = vmul.f32 %v1954, 1.442695
      %v2028 = vpow.pop %v2027
      %v2029 = vmul.f32 %v1955, 1.442695
      %v2030 = vpow.pop %v2029
      %v2031 = vmul.f32 %v1956, 1.442695
      %v2032 = vpow.pop %v2031
      %v2033 = vmul.f32 %v1957, 1.442695
      %v2034 = vpow.pop %v2033
      %v2035 = vmul.f32 %v1958, 1.442695
      %v2036 = vpow.pop %v2035
      %v2037 = vmul.f32 %v1959, 1.442695
      %v2038 = vpow.pop %v2037
      %v2039 = vmul.f32 %v1960, 1.442695
      %v2040 = vpow.pop %v2039
      %v2041 = vsel %vm1154, %v1964, 0.0
      %v2042 = vadd.f32 %v1962, %v2041
      %2043 = vadd.xlane.f32.xlu0 %v2042
      %v2044 = vpop.xlane.xlu0 %2043
      %v2045 = vsel %vm1154, %v1968, 0.0
      %v2046 = vadd.f32 %v1966, %v2045
      %2047 = vadd.xlane.f32.xlu0 %v2046
      %v2048 = vpop.xlane.xlu0 %2047
      %v2049 = vsel %vm1154, %v1972, 0.0
      %v2050 = vadd.f32 %v1970, %v2049
      %2051 = vadd.xlane.f32.xlu0 %v2050
      %v2052 = vpop.xlane.xlu0 %2051
      %v2053 = vsel %vm1154, %v1976, 0.0
      %v2054 = vadd.f32 %v1974, %v2053
      %2055 = vadd.xlane.f32.xlu0 %v2054
      %v2056 = vpop.xlane.xlu0 %2055
      %v2057 = vsel %vm1154, %v1980, 0.0
      %v2058 = vadd.f32 %v1978, %v2057
      %2059 = vadd.xlane.f32.xlu0 %v2058
      %v2060 = vpop.xlane.xlu0 %2059
      %v2061 = vsel %vm1154, %v1984, 0.0
      %v2062 = vadd.f32 %v1982, %v2061
      %2063 = vadd.xlane.f32.xlu0 %v2062
      %v2064 = vpop.xlane.xlu0 %2063
      %v2065 = vsel %vm1154, %v1988, 0.0
      %v2066 = vadd.f32 %v1986, %v2065
      %2067 = vadd.xlane.f32.xlu0 %v2066
      %v2068 = vpop.xlane.xlu0 %2067
      %v2069 = vsel %vm1154, %v1992, 0.0
      %v2070 = vadd.f32 %v1990, %v2069
      %2071 = vadd.xlane.f32.xlu0 %v2070
      %v2072 = vpop.xlane.xlu0 %2071
      %v2073 = vsel %vm1154, %v1996, 0.0
      %v2074 = vadd.f32 %v1994, %v2073
      %2075 = vadd.xlane.f32.xlu0 %v2074
      %v2076 = vpop.xlane.xlu0 %2075
      %v2077 = vsel %vm1154, %v2000, 0.0
      %v2078 = vadd.f32 %v1998, %v2077
      %2079 = vadd.xlane.f32.xlu0 %v2078
      %v2080 = vpop.xlane.xlu0 %2079
      %v2081 = vsel %vm1154, %v2004, 0.0
      %v2082 = vadd.f32 %v2002, %v2081
      %2083 = vadd.xlane.f32.xlu0 %v2082
      %v2084 = vpop.xlane.xlu0 %2083
      %v2085 = vsel %vm1154, %v2008, 0.0
      %v2086 = vadd.f32 %v2006, %v2085
      %2087 = vadd.xlane.f32.xlu0 %v2086
      %v2088 = vpop.xlane.xlu0 %2087
      %v2089 = vsel %vm1154, %v2012, 0.0
      %v2090 = vadd.f32 %v2010, %v2089
      %2091 = vadd.xlane.f32.xlu0 %v2090
      %v2092 = vpop.xlane.xlu0 %2091
      %v2093 = vsel %vm1154, %v2016, 0.0
      %v2094 = vadd.f32 %v2014, %v2093
      %2095 = vadd.xlane.f32.xlu0 %v2094
      %v2096 = vpop.xlane.xlu0 %2095
      %v2097 = vsel %vm1154, %v2020, 0.0
      %v2098 = vadd.f32 %v2018, %v2097
      %2099 = vadd.xlane.f32.xlu0 %v2098
      %v2100 = vpop.xlane.xlu0 %2099
      %v2101 = vsel %vm1154, %v2024, 0.0
      %v2102 = vadd.f32 %v2022, %v2101
      %2103 = vadd.xlane.f32.xlu0 %v2102
      %v2104 = vpop.xlane.xlu0 %2103
      %v2105 = vsel %vm1154, %v2028, 0.0
      %v2106 = vadd.f32 %v2026, %v2105
      %2107 = vadd.xlane.f32.xlu0 %v2106
      %v2108 = vpop.xlane.xlu0 %2107
      %v2109 = vsel %vm1154, %v2032, 0.0
      %v2110 = vadd.f32 %v2030, %v2109
      %2111 = vadd.xlane.f32.xlu0 %v2110
      %v2112 = vpop.xlane.xlu0 %2111
      %v2113 = vsel %vm1154, %v2036, 0.0
      %v2114 = vadd.f32 %v2034, %v2113
      %2115 = vadd.xlane.f32.xlu0 %v2114
      %v2116 = vpop.xlane.xlu0 %2115
      %v2117 = vsel %vm1154, %v2040, 0.0
      %v2118 = vadd.f32 %v2038, %v2117
      %2119 = vadd.xlane.f32.xlu0 %v2118
      %v2120 = vpop.xlane.xlu0 %2119
      %v2121 = vrcp.pop %v2044
      %v2122 = vrcp.pop %v2048
      %v2123 = vrcp.pop %v2052
      %v2124 = vrcp.pop %v2056
      %v2125 = vrcp.pop %v2060
      %v2126 = vrcp.pop %v2064
      %v2127 = vrcp.pop %v2068
      %v2128 = vrcp.pop %v2072
      %v2129 = vrcp.pop %v2076
      %v2130 = vrcp.pop %v2080
      %v2131 = vrcp.pop %v2084
      %v2132 = vrcp.pop %v2088
      %v2133 = vrcp.pop %v2092
      %v2134 = vrcp.pop %v2096
      %v2135 = vrcp.pop %v2100
      %v2136 = vrcp.pop %v2104
      %v2137 = vrcp.pop %v2108
      %v2138 = vrcp.pop %v2112
      %v2139 = vrcp.pop %v2116
      %v2140 = vrcp.pop %v2120
      %v2141 = vpack.c.bf16 %v1966, %v1962
      %v2142 = vpack.c.bf16 %v1968, %v1964
      %v2143 = vpack.c.bf16 %v1974, %v1970
      %v2144 = vpack.c.bf16 %v1976, %v1972
      %v2145 = vpack.c.bf16 %v1982, %v1978
      %v2146 = vpack.c.bf16 %v1984, %v1980
      %v2147 = vpack.c.bf16 %v1990, %v1986
      %v2148 = vpack.c.bf16 %v1992, %v1988
      %v2149 = vpack.c.bf16 %v1998, %v1994
      %v2150 = vpack.c.bf16 %v2000, %v1996
      %v2151 = vpack.c.bf16 %v2006, %v2002
      %v2152 = vpack.c.bf16 %v2008, %v2004
      %v2153 = vpack.c.bf16 %v2014, %v2010
      %v2154 = vpack.c.bf16 %v2016, %v2012
      %v2155 = vpack.c.bf16 %v2022, %v2018
      %v2156 = vpack.c.bf16 %v2024, %v2020
      %v2157 = vpack.c.bf16 %v2030, %v2026
      %v2158 = vpack.c.bf16 %v2032, %v2028
      %v2159 = vpack.c.bf16 %v2038, %v2034
      %v2160 = vpack.c.bf16 %v2040, %v2036
      %v2161 = vpack.c.bf16 %v1508, %v1505
      %v2162 = vpack.c.bf16 %v1516, %v1513
      %v2163 = vpack.c.bf16 %v1524, %v1521
      %v2164 = vpack.c.bf16 %v1532, %v1529
      %v2165 = vpack.c.bf16 %v1540, %v1537
      %v2166 = vpack.c.bf16 %v1548, %v1545
      %v2167 = vpack.c.bf16 %v1556, %v1553
      %v2168 = vpack.c.bf16 %v1564, %v1561
      %v2169 = vpack.c.bf16 %v1572, %v1569
      %v2170 = vpack.c.bf16 %v1580, %v1577
      %v2172 = vsel %vm1154, %v2142, 0
      %v2175 = vsel %vm1154, %v2144, 0
      %v2178 = vsel %vm1154, %v2146, 0
      %v2181 = vsel %vm1154, %v2148, 0
      %v2184 = vsel %vm1154, %v2150, 0
      %v2187 = vsel %vm1154, %v2152, 0
      %v2190 = vsel %vm1154, %v2154, 0
      %v2193 = vsel %vm1154, %v2156, 0
      %v2196 = vsel %vm1154, %v2158, 0
      %v2199 = vsel %vm1154, %v2160, 0
      %2201 = vmatprep.subr.bf16.mxu0 0
      %2202 = vmatpush1.bf16.msra.mxu0 %v2168
      %2203 = vmatprep.subr.bf16.mxu0 0
      %2204 = vmatpush1.bf16.msra.mxu0 %v2167
      %2205 = vmatprep.subr.bf16.mxu0 0
      %2206 = vmatpush1.bf16.msra.mxu0 %v2166
      %2207 = vmatprep.subr.bf16.mxu0 0
      %2208 = vmatpush1.bf16.msra.mxu0 %v2165
      %2209 = vmatprep.subr.bf16.mxu0 0
      %2210 = vmatpush1.bf16.msra.mxu0 %v2164
      %2211 = vmatprep.subr.bf16.mxu0 0
      %2212 = vmatpush1.bf16.msra.mxu0 %v2163
      %2213 = vmatprep.subr.bf16.mxu0 0
      %2214 = vmatpush1.bf16.msra.mxu0 %v2162
      %2215 = vmatprep.subr.bf16.mxu0 0
      %2216 = vmatpush1.bf16.msra.mxu0 %v2161
      %2217 = vmatprep.subr.bf16.mxu0 0
      %2218 = vmatpush2.bf16.msra.mxu0 0
      %2219 = vmatprep.subr.bf16.mxu0 0
      %2220 = vmatpush2.bf16.msra.mxu0 0
      %2221 = vmatprep.subr.bf16.mxu0 0
      %2222 = vmatpush2.bf16.msra.mxu0 0
      %2223 = vmatprep.subr.bf16.mxu0 0
      %2224 = vmatpush2.bf16.msra.mxu0 0
      %2225 = vmatprep.subr.bf16.mxu0 0
      %2226 = vmatpush2.bf16.msra.mxu0 0
      %2227 = vmatprep.subr.bf16.mxu0 0
      %2228 = vmatpush2.bf16.msra.mxu0 0
      %2229 = vmatprep.subr.bf16.mxu0 0
      %2230 = vmatpush2.bf16.msra.mxu0 %v2170
      %2231 = vmatprep.subr.bf16.mxu0 0
      %2232 = vmatpush2.bf16.msra.mxu0 %v2169
      %2233 = vmatprep.mubr.bf16.mxu0 %v2172
      %2234 = vmatmul.mubr.bf16.gmra.mxu0 %v2141
      %v2235 = vpop.f32.mrf.mxu0
      %v2236 = vadd.f32 0.0, %v2235
      %v2237 = vpop.f32.mrf.mxu0
      %v2238 = vpop.f32.mrf.mxu0
      %v2239 = vadd.f32 0.0, %v2238
      %v2240 = vpop.f32.mrf.mxu0
      %2241 = vmatprep.mubr.bf16.mxu0 %v2175
      %2242 = vmatmul.mubr.bf16.gmra.mxu0 %v2143
      %v2243 = vpop.f32.mrf.mxu0
      %v2244 = vadd.f32 0.0, %v2243
      %v2245 = vpop.f32.mrf.mxu0
      %v2246 = vpop.f32.mrf.mxu0
      %v2247 = vadd.f32 0.0, %v2246
      %v2248 = vpop.f32.mrf.mxu0
      %2249 = vmatprep.mubr.bf16.mxu0 %v2178
      %2250 = vmatmul.mubr.bf16.gmra.mxu0 %v2145
      %v2251 = vpop.f32.mrf.mxu0
      %v2252 = vadd.f32 0.0, %v2251
      %v2253 = vpop.f32.mrf.mxu0
      %v2254 = vpop.f32.mrf.mxu0
      %v2255 = vadd.f32 0.0, %v2254
      %v2256 = vpop.f32.mrf.mxu0
      %2257 = vmatprep.mubr.bf16.mxu0 %v2181
      %2258 = vmatmul.mubr.bf16.gmra.mxu0 %v2147
      %v2259 = vpop.f32.mrf.mxu0
      %v2260 = vadd.f32 0.0, %v2259
      %v2261 = vpop.f32.mrf.mxu0
      %v2262 = vpop.f32.mrf.mxu0
      %v2263 = vadd.f32 0.0, %v2262
      %v2264 = vpop.f32.mrf.mxu0
      %2265 = vmatprep.mubr.bf16.mxu0 %v2184
      %2266 = vmatmul.mubr.bf16.gmra.mxu0 %v2149
      %v2267 = vpop.f32.mrf.mxu0
      %v2268 = vadd.f32 0.0, %v2267
      %v2269 = vpop.f32.mrf.mxu0
      %v2270 = vpop.f32.mrf.mxu0
      %v2271 = vadd.f32 0.0, %v2270
      %v2272 = vpop.f32.mrf.mxu0
      %2273 = vmatprep.mubr.bf16.mxu0 %v2187
      %2274 = vmatmul.mubr.bf16.gmra.mxu0 %v2151
      %v2275 = vpop.f32.mrf.mxu0
      %v2276 = vadd.f32 0.0, %v2275
      %v2277 = vpop.f32.mrf.mxu0
      %v2278 = vpop.f32.mrf.mxu0
      %v2279 = vadd.f32 0.0, %v2278
      %v2280 = vpop.f32.mrf.mxu0
      %2281 = vmatprep.mubr.bf16.mxu0 %v2190
      %2282 = vmatmul.mubr.bf16.gmra.mxu0 %v2153
      %v2283 = vpop.f32.mrf.mxu0
      %v2284 = vadd.f32 0.0, %v2283
      %v2285 = vpop.f32.mrf.mxu0
      %v2286 = vpop.f32.mrf.mxu0
      %v2287 = vadd.f32 0.0, %v2286
      %v2288 = vpop.f32.mrf.mxu0
      %2289 = vmatprep.mubr.bf16.mxu0 %v2193
      %2290 = vmatmul.mubr.bf16.gmra.mxu0 %v2155
      %v2291 = vpop.f32.mrf.mxu0
      %v2292 = vadd.f32 0.0, %v2291
      %v2293 = vpop.f32.mrf.mxu0
      %v2294 = vpop.f32.mrf.mxu0
      %v2295 = vadd.f32 0.0, %v2294
      %v2296 = vpop.f32.mrf.mxu0
      %2297 = vmatprep.mubr.bf16.mxu0 %v2196
      %2298 = vmatmul.mubr.bf16.gmra.mxu0 %v2157
      %v2299 = vpop.f32.mrf.mxu0
      %v2300 = vadd.f32 0.0, %v2299
      %v2301 = vpop.f32.mrf.mxu0
      %v2302 = vpop.f32.mrf.mxu0
      %v2303 = vadd.f32 0.0, %v2302
      %v2304 = vpop.f32.mrf.mxu0
      %2305 = vmatprep.mubr.bf16.mxu0 %v2199
      %2306 = vmatmul.mubr.bf16.gmra.mxu0 %v2159
      %v2307 = vpop.f32.mrf.mxu0
      %v2308 = vadd.f32 0.0, %v2307
      %v2309 = vpop.f32.mrf.mxu0
      %v2310 = vpop.f32.mrf.mxu0
      %v2311 = vadd.f32 0.0, %v2310
      %v2312 = vpop.f32.mrf.mxu0
      %2313 = vdwg.mxu0
      %v2314 = vmul.f32 %v2236, %v2121
      %v2315 = vmul.f32 %v2239, %v2122
      %v2316 = vmul.f32 %v2244, %v2123
      %v2317 = vmul.f32 %v2247, %v2124
      %v2318 = vmul.f32 %v2252, %v2125
      %v2319 = vmul.f32 %v2255, %v2126
      %v2320 = vmul.f32 %v2260, %v2127
      %v2321 = vmul.f32 %v2263, %v2128
      %v2322 = vmul.f32 %v2268, %v2129
      %v2323 = vmul.f32 %v2271, %v2130
      %v2324 = vmul.f32 %v2276, %v2131
      %v2325 = vmul.f32 %v2279, %v2132
      %v2326 = vmul.f32 %v2284, %v2133
      %v2327 = vmul.f32 %v2287, %v2134
      %v2328 = vmul.f32 %v2292, %v2135
      %v2329 = vmul.f32 %v2295, %v2136
      %v2330 = vmul.f32 %v2300, %v2137
      %v2331 = vmul.f32 %v2303, %v2138
      %v2332 = vmul.f32 %v2308, %v2139
      %v2333 = vmul.f32 %v2311, %v2140
      %v2334 = vpack.c.bf16 %v2315, %v2314
      %v2335 = vpack.c.bf16 %v2317, %v2316
      %v2336 = vpack.c.bf16 %v2319, %v2318
      %v2337 = vpack.c.bf16 %v2321, %v2320
      %v2338 = vpack.c.bf16 %v2323, %v2322
      %v2339 = vpack.c.bf16 %v2325, %v2324
      %v2340 = vpack.c.bf16 %v2327, %v2326
      %v2341 = vpack.c.bf16 %v2329, %v2328
      %v2342 = vpack.c.bf16 %v2331, %v2330
      %v2343 = vpack.c.bf16 %v2333, %v2332
      %v2345 = vlaneseq
      %v2346 = vshrl.u32 %v2345, 7
      %v2347 = vsub.s32 0, %v2346
      %v2348 = vrot.slane %v1627, %v2347
      %v2354 = vunpack.c.l.b16 %v1623
      %v2355 = vunpack.c.l.b16 %v1624
      %v2356 = vunpack.c.l.b16 %v1625
      %v2357 = vunpack.c.l.b16 %v1626
      %v2358 = vpack.c.b16 %v2355, %v2354
      %v2359 = vpack.c.b16 %v2357, %v2356
      %v2363 = vsel %vm1154, %v2334, 0
      %v2366 = vsel %vm1154, %v2335, 0
      %v2369 = vsel %vm1154, %v2336, 0
      %v2372 = vsel %vm1154, %v2337, 0
      %v2375 = vsel %vm1154, %v2338, 0
      %v2378 = vsel %vm1154, %v2339, 0
      %v2381 = vsel %vm1154, %v2340, 0
      %v2384 = vsel %vm1154, %v2341, 0
      %v2387 = vsel %vm1154, %v2342, 0
      %v2390 = vsel %vm1154, %v2343, 0
      %2392 = vmatprep.subr.bf16.mxu0 0
      %2393 = vmatpush1.bf16.msra.mxu0 0
      %2394 = vmatprep.subr.bf16.mxu0 0
      %2395 = vmatpush1.bf16.msra.mxu0 0
      %2396 = vmatprep.subr.bf16.mxu0 0
      %2397 = vmatpush1.bf16.msra.mxu0 0
      %2398 = vmatprep.subr.bf16.mxu0 0
      %2399 = vmatpush1.bf16.msra.mxu0 0
      %2400 = vmatprep.subr.bf16.mxu0 0
      %2401 = vmatpush1.bf16.msra.mxu0 0
      %2402 = vmatprep.subr.bf16.mxu0 0
      %2403 = vmatpush1.bf16.msra.mxu0 0
      %2404 = vmatprep.subr.bf16.mxu0 0
      %2405 = vmatpush1.bf16.msra.mxu0 %v2359
      %2406 = vmatprep.subr.bf16.mxu0 0
      %2407 = vmatpush1.bf16.msra.mxu0 %v2358
      %2408 = vmatprep.subr.bf16.mxu0 0
      %2409 = vmatpush2.bf16.msra.mxu0 0
      %2410 = vmatprep.subr.bf16.mxu0 0
      %2411 = vmatpush2.bf16.msra.mxu0 0
      %2412 = vmatprep.subr.bf16.mxu0 0
      %2413 = vmatpush2.bf16.msra.mxu0 0
      %2414 = vmatprep.subr.bf16.mxu0 0
      %2415 = vmatpush2.bf16.msra.mxu0 0
      %2416 = vmatprep.subr.bf16.mxu0 0
      %2417 = vmatpush2.bf16.msra.mxu0 0
      %2418 = vmatprep.subr.bf16.mxu0 0
      %2419 = vmatpush2.bf16.msra.mxu0 0
      %2420 = vmatprep.subr.bf16.mxu0 0
      %2421 = vmatpush2.bf16.msra.mxu0 0
      %2422 = vmatprep.subr.bf16.mxu0 0
      %2423 = vmatpush2.bf16.msra.mxu0 0
      %2424 = vmatprep.mubr.bf16.mxu0 0
      %2425 = vmatmul.mubr.bf16.gmra.mxu0 %v2363
      %v2426 = vpop.f32.mrf.mxu0
      %v2427 = vadd.f32 %v2348, %v2426
      %v2428 = vpop.f32.mrf.mxu0
      %v2429 = vpop.f32.mrf.mxu0
      %v2430 = vadd.f32 %v2348, %v2429
      %v2431 = vpop.f32.mrf.mxu0
      %2432 = vmatprep.mubr.bf16.mxu0 0
      %2433 = vmatmul.mubr.bf16.gmra.mxu0 %v2366
      %v2434 = vpop.f32.mrf.mxu0
      %v2435 = vadd.f32 %v2348, %v2434
      %v2436 = vpop.f32.mrf.mxu0
      %v2437 = vpop.f32.mrf.mxu0
      %v2438 = vadd.f32 %v2348, %v2437
      %v2439 = vpop.f32.mrf.mxu0
      %2440 = vmatprep.mubr.bf16.mxu0 0
      %2441 = vmatmul.mubr.bf16.gmra.mxu0 %v2369
      %v2442 = vpop.f32.mrf.mxu0
      %v2443 = vadd.f32 %v2348, %v2442
      %v2444 = vpop.f32.mrf.mxu0
      %v2445 = vpop.f32.mrf.mxu0
      %v2446 = vadd.f32 %v2348, %v2445
      %v2447 = vpop.f32.mrf.mxu0
      %2448 = vmatprep.mubr.bf16.mxu0 0
      %2449 = vmatmul.mubr.bf16.gmra.mxu0 %v2372
      %v2450 = vpop.f32.mrf.mxu0
      %v2451 = vadd.f32 %v2348, %v2450
      %v2452 = vpop.f32.mrf.mxu0
      %v2453 = vpop.f32.mrf.mxu0
      %v2454 = vadd.f32 %v2348, %v2453
      %v2455 = vpop.f32.mrf.mxu0
      %2456 = vmatprep.mubr.bf16.mxu0 0
      %2457 = vmatmul.mubr.bf16.gmra.mxu0 %v2375
      %v2458 = vpop.f32.mrf.mxu0
      %v2459 = vadd.f32 %v2348, %v2458
      %v2460 = vpop.f32.mrf.mxu0
      %v2461 = vpop.f32.mrf.mxu0
      %v2462 = vadd.f32 %v2348, %v2461
      %v2463 = vpop.f32.mrf.mxu0
      %2464 = vmatprep.mubr.bf16.mxu0 0
      %2465 = vmatmul.mubr.bf16.gmra.mxu0 %v2378
      %v2466 = vpop.f32.mrf.mxu0
      %v2467 = vadd.f32 %v2348, %v2466
      %v2468 = vpop.f32.mrf.mxu0
      %v2469 = vpop.f32.mrf.mxu0
      %v2470 = vadd.f32 %v2348, %v2469
      %v2471 = vpop.f32.mrf.mxu0
      %2472 = vmatprep.mubr.bf16.mxu0 0
      %2473 = vmatmul.mubr.bf16.gmra.mxu0 %v2381
      %v2474 = vpop.f32.mrf.mxu0
      %v2475 = vadd.f32 %v2348, %v2474
      %v2476 = vpop.f32.mrf.mxu0
      %v2477 = vpop.f32.mrf.mxu0
      %v2478 = vadd.f32 %v2348, %v2477
      %v2479 = vpop.f32.mrf.mxu0
      %2480 = vmatprep.mubr.bf16.mxu0 0
      %2481 = vmatmul.mubr.bf16.gmra.mxu0 %v2384
      %v2482 = vpop.f32.mrf.mxu0
      %v2483 = vadd.f32 %v2348, %v2482
      %v2484 = vpop.f32.mrf.mxu0
      %v2485 = vpop.f32.mrf.mxu0
      %v2486 = vadd.f32 %v2348, %v2485
      %v2487 = vpop.f32.mrf.mxu0
      %2488 = vmatprep.mubr.bf16.mxu0 0
      %2489 = vmatmul.mubr.bf16.gmra.mxu0 %v2387
      %v2490 = vpop.f32.mrf.mxu0
      %v2491 = vadd.f32 %v2348, %v2490
      %v2492 = vpop.f32.mrf.mxu0
      %v2493 = vpop.f32.mrf.mxu0
      %v2494 = vadd.f32 %v2348, %v2493
      %v2495 = vpop.f32.mrf.mxu0
      %2496 = vmatprep.mubr.bf16.mxu0 0
      %2497 = vmatmul.mubr.bf16.gmra.mxu0 %v2390
      %v2498 = vpop.f32.mrf.mxu0
      %v2499 = vadd.f32 %v2348, %v2498
      %v2500 = vpop.f32.mrf.mxu0
      %v2501 = vpop.f32.mrf.mxu0
      %v2502 = vadd.f32 %v2348, %v2501
      %v2503 = vpop.f32.mrf.mxu0
      %2504 = vdwg.mxu0
      %v2505 = vadd.f32 %v1088, %v2427
      %v2506 = vadd.f32 %v1089, %v2430
      %v2507 = vadd.f32 %v1090, %v2435
      %v2508 = vadd.f32 %v1091, %v2438
      %v2509 = vadd.f32 %v1092, %v2443
      %v2510 = vadd.f32 %v1093, %v2446
      %v2511 = vadd.f32 %v1094, %v2451
      %v2512 = vadd.f32 %v1095, %v2454
      %v2513 = vadd.f32 %v1096, %v2459
      %v2514 = vadd.f32 %v1097, %v2462
      %v2515 = vadd.f32 %v1098, %v2467
      %v2516 = vadd.f32 %v1099, %v2470
      %v2517 = vadd.f32 %v1100, %v2475
      %v2518 = vadd.f32 %v1101, %v2478
      %v2519 = vadd.f32 %v1102, %v2483
      %v2520 = vadd.f32 %v1103, %v2486
      %v2521 = vadd.f32 %v1104, %v2491
      %v2522 = vadd.f32 %v1105, %v2494
      %v2523 = vadd.f32 %v1106, %v2499
      %v2524 = vadd.f32 %v1107, %v2502
      %2525 = vst.msk [vmem:[#allocation2] sm:$0xff] %vm1154, %v2505
      %2526 = vst.msk [vmem:[#allocation2 + $0x8] sm:$0xff] %vm1154, %v2506
      %2527 = vst.msk [vmem:[#allocation2 + $0x10] sm:$0xff] %vm1154, %v2507
      %2528 = vst.msk [vmem:[#allocation2 + $0x18] sm:$0xff] %vm1154, %v2508
      %2529 = vst.msk [vmem:[#allocation2 + $0x20] sm:$0xff] %vm1154, %v2509
      %2530 = vst.msk [vmem:[#allocation2 + $0x28] sm:$0xff] %vm1154, %v2510
      %2531 = vst.msk [vmem:[#allocation2 + $0x30] sm:$0xff] %vm1154, %v2511
      %2532 = vst.msk [vmem:[#allocation2 + $0x38] sm:$0xff] %vm1154, %v2512
      %2533 = vst.msk [vmem:[#allocation2 + $0x40] sm:$0xff] %vm1154, %v2513
      %2534 = vst.msk [vmem:[#allocation2 + $0x48] sm:$0xff] %vm1154, %v2514
      %2535 = vst.msk [vmem:[#allocation2 + $0x50] sm:$0xff] %vm1154, %v2515
      %2536 = vst.msk [vmem:[#allocation2 + $0x58] sm:$0xff] %vm1154, %v2516
      %2537 = vst.msk [vmem:[#allocation2 + $0x60] sm:$0xff] %vm1154, %v2517
      %2538 = vst.msk [vmem:[#allocation2 + $0x68] sm:$0xff] %vm1154, %v2518
      %2539 = vst.msk [vmem:[#allocation2 + $0x70] sm:$0xff] %vm1154, %v2519
      %2540 = vst.msk [vmem:[#allocation2 + $0x78] sm:$0xff] %vm1154, %v2520
      %2541 = vst.msk [vmem:[#allocation2 + $0x80] sm:$0xff] %vm1154, %v2521
      %2542 = vst.msk [vmem:[#allocation2 + $0x88] sm:$0xff] %vm1154, %v2522
      %2543 = vst.msk [vmem:[#allocation2 + $0x90] sm:$0xff] %vm1154, %v2523
      %2544 = vst.msk [vmem:[#allocation2 + $0x98] sm:$0xff] %vm1154, %v2524
      %2545 = vst.msk [vmem:[%s604] sm:$0xff] %vm1154, %v2505
      %2546 = vst.msk [vmem:[%s604 + $0x8] sm:$0xff] %vm1154, %v2506
      %2547 = vst.msk [vmem:[%s604 + $0x10] sm:$0xff] %vm1154, %v2507
      %2548 = vst.msk [vmem:[%s604 + $0x18] sm:$0xff] %vm1154, %v2508
      %2549 = vst.msk [vmem:[%s604 + $0x20] sm:$0xff] %vm1154, %v2509
      %2550 = vst.msk [vmem:[%s604 + $0x28] sm:$0xff] %vm1154, %v2510
      %2551 = vst.msk [vmem:[%s604 + $0x30] sm:$0xff] %vm1154, %v2511
      %2552 = vst.msk [vmem:[%s604 + $0x38] sm:$0xff] %vm1154, %v2512
      %2553 = vst.msk [vmem:[%s604 + $0x40] sm:$0xff] %vm1154, %v2513
      %2554 = vst.msk [vmem:[%s604 + $0x48] sm:$0xff] %vm1154, %v2514
      %2555 = vst.msk [vmem:[%s604 + $0x50] sm:$0xff] %vm1154, %v2515
      %2556 = vst.msk [vmem:[%s604 + $0x58] sm:$0xff] %vm1154, %v2516
      %2557 = vst.msk [vmem:[%s604 + $0x60] sm:$0xff] %vm1154, %v2517
      %2558 = vst.msk [vmem:[%s604 + $0x68] sm:$0xff] %vm1154, %v2518
      %2559 = vst.msk [vmem:[%s604 + $0x70] sm:$0xff] %vm1154, %v2519
      %2560 = vst.msk [vmem:[%s604 + $0x78] sm:$0xff] %vm1154, %v2520
      %2561 = vst.msk [vmem:[%s604 + $0x80] sm:$0xff] %vm1154, %v2521
      %2562 = vst.msk [vmem:[%s604 + $0x88] sm:$0xff] %vm1154, %v2522
      %2563 = vst.msk [vmem:[%s604 + $0x90] sm:$0xff] %vm1154, %v2523
      %2564 = vst.msk [vmem:[%s604 + $0x98] sm:$0xff] %vm1154, %v2524
      %p2565 = scmp.lt.s32.totalorder %s24, 1
      %s2566 = scalar_select %p2565, %s24, 1
      %s2567 = smul.addr %s2566, 20
      %s2568 = smul.addr %s2567, 8
      %s2569 = scalar_lea.vmem %s9, %s2568
      // Predicated region
      $region61: #{forward.2} parent=55 // pred_check
        %p2570 = pneg %p300
      $region62: #{forward.2} parent=55 // pred_check_branch
        %2572 = sbr.rel (%p2570) target = $region64
      $region63: #{forward.2} parent=55 // pred_region
        _
      $region64: #{forward.2} parent=55 // pred_fallthru
        _
    $region56: #{forward.2} parent=5 // pred_fallthru
      _
    %p2573 = scmp.le.s32.totalorder 2, %s15
    // Predicated region
    $region65: #{forward.2} parent=5 // pred_check
      %p2574 = pneg %p2573
    $region66: #{forward.2} parent=5 // pred_check_branch
      %2576 = sbr.rel (%p2574) target = $region68
    $region67: #{forward.2} parent=5 // pred_region
      %s2577 = ssub.s32 %s15, 2
      // Predicated region
      $region69: #{forward.2} parent=67 // pred_check
        %p2578 = pneg %p306
      $region70: #{forward.2} parent=67 // pred_check_branch
        %2580 = sbr.rel (%p2578) target = $region72
      $region71: #{forward.2} parent=67 // pred_region
        %p2581 = scmp.lt.s32.totalorder %s26, 1
        %s2582 = scalar_select %p2581, %s26, 1
        %s2583 = smul.addr %s2582, 20
        %s2584 = smul.addr %s2583, 8
        %s2585 = scalar_lea.vmem %s9, %s2584
      $region72: #{forward.2} parent=67 // pred_fallthru
        _
    $region68: #{forward.2} parent=5 // pred_fallthru
      _
  $region6: #{forward.2} parent=0 // loop_footer
    %s19 = sadd.s32 1, %s15
  $region7: #{forward.2} parent=0 // loop_footer_branch
    %14 = sbr.rel target = $region3
  $region8: #{forward.2} parent=0 // loop_exit
    _

</llo_original>
